<compile_context>
chip_gen: v7x
topology: tpu7x:2x2x1
jax: 0.10.0
libtpu: 0.0.40
codegen_flags: <defaults>
</compile_context>

<pallas_src>
from functools import partial

import jax
import jax.numpy as jnp
from jax import lax
from jax.experimental import pallas as pl
from jax.experimental.pallas import tpu as pltpu

H = 128            # lstm_size == embedding_dim in the module
N_VOCAB = 16       # synthetic small vocabulary
VPAD = 128         # lane-dense padded vocab width (>= N_VOCAB)
NEG_INF = -1e30    # logits pad value for non-existent vocab entries
SEQ = 8            # words per sentence (demo)
B = 8              # sentences per call (fills the 8 sublanes)


# ---------------------------------------------------------------------------
# Fused Generator kernel
# ---------------------------------------------------------------------------
def generator_kernel(seq, nb,
                     x_oh_ref, mask_ref, gum_ref,                 # data (VMEM)
                     t_enc_ref, whh_enc_ref, b_enc_ref,           # encoder
                     t_dec_ref, whh_dec_ref, b_dec_ref,           # decoder
                     wfc_ref, bfc_ref,                            # FC
                     tok_ref, h_ref, c_ref):                      # outputs
    h_dim = whh_enc_ref.shape[0]
    vpad = x_oh_ref.shape[-1]

    # ---- loop-invariant constants (hoisted; JAX does not CSE broadcasts) ---
    lane = lax.broadcasted_iota(jnp.int32, (1, vpad), 1)
    col4 = lax.broadcasted_iota(jnp.int32, (1, 4 * h_dim), 1)
    # pre-scale the g-quarter by 2 so one sigmoid pass covers i,f,g,o
    g_scale = jnp.where((col4 >= 2 * h_dim) & (col4 < 3 * h_dim), 2.0, 1.0)

    b_enc = b_enc_ref[...]
    b_dec = b_dec_ref[...]
    b_fc = bfc_ref[...]

    def cell(gx, h, c, whh_ref, b):
        gh = jnp.dot(h.astype(jnp.bfloat16), whh_ref[...],
                     preferred_element_type=jnp.float32)
        gates = gx + gh + b                                    # (B, 4H) f32
        s = jax.nn.sigmoid(gates * g_scale)                    # one EUP stream
        i = s[:, 0 * h_dim:1 * h_dim]
        f = s[:, 1 * h_dim:2 * h_dim]
        g = 2.0 * s[:, 2 * h_dim:3 * h_dim] - 1.0              # tanh(g_pre)
        o = s[:, 3 * h_dim:4 * h_dim]
        c_new = f * c + i * g
        h_new = o * jnp.tanh(c_new)
        return h_new, c_new

    # ------------------------------ Encoder --------------------------------
    # One batched matmul for every timestep's input-side gate contribution.
    x_all = x_oh_ref[...].astype(jnp.bfloat16)                  # (SEQ*B, VPAD)
    gx_enc_all = jnp.dot(x_all, t_enc_ref[...],
                         preferred_element_type=jnp.float32)    # (SEQ*B, 4H)

    h = jnp.zeros((nb, h_dim), jnp.float32)
    c = jnp.zeros((nb, h_dim), jnp.float32)
    for t in range(seq):                                        # static unroll
        gx = gx_enc_all[t * nb:(t + 1) * nb, :]
        h, c = cell(gx, h, c, whh_enc_ref, b_enc)

    # ------------------------------ Decoder --------------------------------
    toks = jnp.zeros((nb, vpad), jnp.int32)
    prev_onehot = x_oh_ref[0:nb, :]     # fallback for mask[0]==True (see note)
    for t in range(seq):                                        # static unroll
        m_t = mask_ref[t * nb:(t + 1) * nb, :]                  # (B, 1) f32
        in_oh = x_oh_ref[t * nb:(t + 1) * nb, :]                # (B, VPAD) f32
        x_oh = jnp.where(m_t > 0.5, prev_onehot, in_oh)

        gx = jnp.dot(x_oh.astype(jnp.bfloat16), t_dec_ref[...],
                     preferred_element_type=jnp.float32)        # (B, 4H)
        h, c = cell(gx, h, c, whh_dec_ref, b_dec)

        logits = jnp.dot(h.astype(jnp.bfloat16), wfc_ref[...],
                         preferred_element_type=jnp.float32) + b_fc
        scores = logits + gum_ref[t * nb:(t + 1) * nb, :]       # Gumbel-max
        mx = jnp.max(scores, axis=-1, keepdims=True)            # (B, 1)
        is_max = scores >= mx
        # carried one-hot feeds the next step's onehot @ T matmul directly
        # (ties are measure-zero with continuous Gumbel noise)
        prev_onehot = is_max.astype(jnp.float32)
        # scalar index only feeds the token output (off the recurrence path)
        idx = jnp.min(jnp.where(is_max, lane, vpad),
                      axis=-1, keepdims=True)                   # (B, 1) int32
        toks = jnp.where(lane == t, idx, toks)

    tok_ref[...] = toks
    h_ref[...] = h
    c_ref[...] = c


_VMEM = pl.BlockSpec(memory_space=pltpu.MemorySpace.VMEM)


@jax.jit
def generator_device(ids, mask, key,
                     t_enc, whh_enc, b_enc,
                     t_dec, whh_dec, b_dec, wfc, bfc):
    # ids: (SEQ, B) int32 ; mask: (SEQ, B) f32 (1.0 == masked)
    seq, nb = ids.shape
    x_onehot = jax.nn.one_hot(ids, VPAD, dtype=jnp.float32).reshape(seq * nb, VPAD)
    gumbel = jax.random.gumbel(key, (seq * nb, VPAD), jnp.float32)
    mask2 = mask.reshape(seq * nb, 1)

    kernel = partial(generator_kernel, seq, nb)
    return pl.pallas_call(
        kernel,
        out_shape=(jax.ShapeDtypeStruct((nb, VPAD), jnp.int32),   # sampled ids
                   jax.ShapeDtypeStruct((nb, H), jnp.float32),    # final h
                   jax.ShapeDtypeStruct((nb, H), jnp.float32)),   # final c
        in_specs=[_VMEM] * 11,
        out_specs=(_VMEM, _VMEM, _VMEM),
    )(x_onehot, mask2, gumbel,
      t_enc, whh_enc, b_enc, t_dec, whh_dec, b_dec, wfc, bfc)


# ---------------------------------------------------------------------------
# Parameter construction (deterministic; shapes match the nn.Module __init__)
# ---------------------------------------------------------------------------
def make_params(key):
    ks = jax.random.split(key, 12)
    bound = 1.0 / jnp.sqrt(jnp.float32(H))

    def unif(k, shape):
        return jax.random.uniform(k, shape, jnp.float32, -bound, bound)

    def lstm_branch(k_emb, k_wih, k_whh, k_bih, k_bhh):
        emb = jax.random.normal(k_emb, (N_VOCAB, H), jnp.float32)
        w_ih = unif(k_wih, (H, 4 * H))          # (in, out); PyTorch order i,f,g,o
        w_hh = unif(k_whh, (H, 4 * H))
        b = unif(k_bih, (1, 4 * H)) + unif(k_bhh, (1, 4 * H))   # b_ih + b_hh
        # Fold embedding into the input-side gate matmul: T = emb @ W_ih,
        # row-padded to VPAD so a (B, VPAD) one-hot can hit it directly.
        t_tab = jnp.zeros((VPAD, 4 * H), jnp.float32).at[:N_VOCAB].set(emb @ w_ih)
        return (t_tab.astype(jnp.bfloat16), w_hh.astype(jnp.bfloat16), b)

    t_enc, whh_enc, b_enc = lstm_branch(ks[0], ks[1], ks[2], ks[3], ks[4])
    t_dec, whh_dec, b_dec = lstm_branch(ks[5], ks[6], ks[7], ks[8], ks[9])

    w_fc = unif(ks[10], (H, N_VOCAB))
    b_fc = unif(ks[11], (1, N_VOCAB))
    wfc_pad = (jnp.zeros((H, VPAD), jnp.float32)
               .at[:, :N_VOCAB].set(w_fc).astype(jnp.bfloat16))
    bfc_pad = jnp.full((1, VPAD), NEG_INF, jnp.float32).at[:, :N_VOCAB].set(b_fc)

    return dict(t_enc=t_enc, whh_enc=whh_enc, b_enc=b_enc,
                t_dec=t_dec, whh_dec=whh_dec, b_dec=b_dec,
                wfc=wfc_pad, bfc=bfc_pad)


# ---------------------------------------------------------------------------
# Generator.forward (batched over B sentences per device call)
# ---------------------------------------------------------------------------
def generator_forward(sentences, mask_arrays, params, vocab, word_to_index, key):
    nb = len(sentences)
    ids = jnp.array([[word_to_index[w] for w in s.split()] for s in sentences],
                    jnp.int32).T                                   # (SEQ, B)
    mask = jnp.array([[1.0 if m else 0.0 for m in ma] for ma in mask_arrays],
                     jnp.float32).T                                # (SEQ, B)
    seq = ids.shape[0]

    toks, h, c = generator_device(
        ids, mask, key,
        params["t_enc"], params["whh_enc"], params["b_enc"],
        params["t_dec"], params["whh_dec"], params["b_dec"],
        params["wfc"], params["bfc"])

    jax.block_until_ready(toks)
    toks_host = jax.device_get(toks)[:, :seq]                      # (B, SEQ)
    new_sentences = [" ".join(vocab[int(toks_host[b_, t])] for t in range(seq))
                     for b_ in range(nb)]
    return new_sentences, toks_host, (h, c)

# TODO(synk): the reference's host-side print()s / string tokenizer class and
# the exact numpy RNG stream of np.random.choice have no in-kernel equivalent.


# ---------------------------------------------------------------------------
if __name__ == "__main__":
    vocab = ["<pad>", "the", "cat", "sat", "on", "mat", "dog", "ran",
             "to", "park", "a", "bird", "flew", "over", "tree", "<eos>"]
    assert len(vocab) == N_VOCAB
    word_to_index = {w: i for i, w in enumerate(vocab)}

    sentences = [
        "the cat sat on the mat the dog",
        "a bird flew over the tree to park",
        "the dog ran to the park the cat",
        "a cat sat on a mat the bird",
        "the bird flew to the tree the dog",
        "a dog ran over the mat to park",
        "the cat ran to a tree the bird",
        "a bird sat on the mat the dog",
    ]
    assert len(sentences) == B and all(len(s.split()) == SEQ for s in sentences)
    # mask[0] must be False (the reference crashes otherwise)
    mask_arrays = [[False] + [((b_ + t) % 3 == 0) for t in range(1, SEQ)]
                   for b_ in range(B)]

    root = jax.random.PRNGKey(0)
    pkey, skey = jax.random.split(root)
    params = make_params(pkey)

    new_sentences, tok_ids, (h, c) = generator_forward(
        sentences, mask_arrays, params, vocab, word_to_index, skey)

    jax.block_until_ready(h)
    jax.block_until_ready(c)
    assert len(new_sentences) == B
    assert all(len(s.split()) == SEQ for s in new_sentences)
    assert all(0 <= int(t) < N_VOCAB for row in tok_ids for t in row)
    assert h.shape == (B, H) and c.shape == (B, H)
    print("KERNEL_OK")
</pallas_src>

<mosaic_0001>
module attributes {stable_mosaic.version = 11 : i64} {
  func.func @generator_kernel(%arg0: memref<64x128xf32, #tpu.memory_space<vmem>>, %arg1: memref<64x1xf32, #tpu.memory_space<vmem>>, %arg2: memref<64x128xf32, #tpu.memory_space<vmem>>, %arg3: memref<128x512xbf16, #tpu.memory_space<vmem>>, %arg4: memref<128x512xbf16, #tpu.memory_space<vmem>>, %arg5: memref<1x512xf32, #tpu.memory_space<vmem>>, %arg6: memref<128x512xbf16, #tpu.memory_space<vmem>>, %arg7: memref<128x512xbf16, #tpu.memory_space<vmem>>, %arg8: memref<1x512xf32, #tpu.memory_space<vmem>>, %arg9: memref<128x128xbf16, #tpu.memory_space<vmem>>, %arg10: memref<1x128xf32, #tpu.memory_space<vmem>>, %arg11: memref<8x128xi32, #tpu.memory_space<vmem>>, %arg12: memref<8x128xf32, #tpu.memory_space<vmem>>, %arg13: memref<8x128xf32, #tpu.memory_space<vmem>>) attributes {dimension_semantics = [], scalar_prefetch = 0 : i64, scratch_operands = 0 : i64, tpu.core_type = #tpu.core_type<tc>} {
    %0 = tpu.iota {dimensions = array<i32: 1>} : vector<1x128xi32>
    %1 = tpu.iota {dimensions = array<i32: 1>} : vector<1x512xi32>
    %c256_i32 = arith.constant 256 : i32
    %2 = vector.broadcast %c256_i32 : i32 to vector<1x512xi32>
    %3 = arith.cmpi sge, %1, %2 : vector<1x512xi32>
    %c384_i32 = arith.constant 384 : i32
    %4 = vector.broadcast %c384_i32 : i32 to vector<1x512xi32>
    %5 = arith.cmpi slt, %1, %4 : vector<1x512xi32>
    %6 = arith.andi %3, %5 : vector<1x512xi1>
    %cst = arith.constant 2.000000e+00 : f32
    %cst_0 = arith.constant 1.000000e+00 : f32
    %7 = vector.broadcast %cst : f32 to vector<1x512xf32>
    %8 = vector.broadcast %cst_0 : f32 to vector<1x512xf32>
    %9 = arith.select %6, %7, %8 : vector<1x512xi1>, vector<1x512xf32>
    %c0 = arith.constant 0 : index
    %c0_1 = arith.constant 0 : index
    %10 = vector.load %arg5[%c0, %c0_1] : memref<1x512xf32, #tpu.memory_space<vmem>>, vector<1x512xf32>
    %c0_2 = arith.constant 0 : index
    %c0_3 = arith.constant 0 : index
    %11 = vector.load %arg8[%c0_2, %c0_3] : memref<1x512xf32, #tpu.memory_space<vmem>>, vector<1x512xf32>
    %c0_4 = arith.constant 0 : index
    %c0_5 = arith.constant 0 : index
    %12 = vector.load %arg10[%c0_4, %c0_5] : memref<1x128xf32, #tpu.memory_space<vmem>>, vector<1x128xf32>
    %c0_6 = arith.constant 0 : index
    %c0_7 = arith.constant 0 : index
    %13 = vector.load %arg0[%c0_6, %c0_7] : memref<64x128xf32, #tpu.memory_space<vmem>>, vector<64x128xf32>
    %14 = arith.truncf %13 : vector<64x128xf32> to vector<64x128xbf16>
    %c0_8 = arith.constant 0 : index
    %c0_9 = arith.constant 0 : index
    %15 = vector.load %arg3[%c0_8, %c0_9] : memref<128x512xbf16, #tpu.memory_space<vmem>>, vector<128x512xbf16>
    %cst_10 = arith.constant dense<0.000000e+00> : vector<64x512xf32>
    %16 = tpu.matmul %14, %15, %cst_10 {dimension_numbers = #tpu.dot_dimension_numbers<[1], [0], [0], [1], [0, 0, 1, 1], [], []>} : vector<64x128xbf16>, vector<128x512xbf16>, vector<64x512xf32> -> vector<64x512xf32>
    %cst_11 = arith.constant 0.000000e+00 : f32
    %17 = vector.broadcast %cst_11 : f32 to vector<8x128xf32>
    %cst_12 = arith.constant 0.000000e+00 : f32
    %18 = vector.broadcast %cst_12 : f32 to vector<8x128xf32>
    %19 = vector.extract_strided_slice %16 {offsets = [0, 0], sizes = [8, 512], strides = [1, 1]} : vector<64x512xf32> to vector<8x512xf32>
    %20 = arith.truncf %17 : vector<8x128xf32> to vector<8x128xbf16>
    %c0_13 = arith.constant 0 : index
    %c0_14 = arith.constant 0 : index
    %21 = vector.load %arg4[%c0_13, %c0_14] : memref<128x512xbf16, #tpu.memory_space<vmem>>, vector<128x512xbf16>
    %cst_15 = arith.constant dense<0.000000e+00> : vector<8x512xf32>
    %22 = tpu.matmul %20, %21, %cst_15 {dimension_numbers = #tpu.dot_dimension_numbers<[1], [0], [0], [1], [0, 0, 1, 1], [], []>} : vector<8x128xbf16>, vector<128x512xbf16>, vector<8x512xf32> -> vector<8x512xf32>
    %23 = arith.addf %19, %22 : vector<8x512xf32>
    %24 = vector.broadcast %10 : vector<1x512xf32> to vector<8x512xf32>
    %25 = arith.addf %23, %24 : vector<8x512xf32>
    %26 = vector.broadcast %9 : vector<1x512xf32> to vector<8x512xf32>
    %27 = arith.mulf %25, %26 : vector<8x512xf32>
    %28 = arith.negf %27 : vector<8x512xf32>
    %29 = math.exp %28 : vector<8x512xf32>
    %cst_16 = arith.constant 1.000000e+00 : f32
    %30 = vector.broadcast %cst_16 : f32 to vector<8x512xf32>
    %31 = arith.addf %30, %29 : vector<8x512xf32>
    %32 = arith.divf %30, %31 : vector<8x512xf32>
    %33 = vector.extract_strided_slice %32 {offsets = [0, 0], sizes = [8, 128], strides = [1, 1]} : vector<8x512xf32> to vector<8x128xf32>
    %34 = vector.extract_strided_slice %32 {offsets = [0, 128], sizes = [8, 128], strides = [1, 1]} : vector<8x512xf32> to vector<8x128xf32>
    %35 = vector.extract_strided_slice %32 {offsets = [0, 256], sizes = [8, 128], strides = [1, 1]} : vector<8x512xf32> to vector<8x128xf32>
    %cst_17 = arith.constant 2.000000e+00 : f32
    %36 = vector.broadcast %cst_17 : f32 to vector<8x128xf32>
    %37 = arith.mulf %36, %35 : vector<8x128xf32>
    %cst_18 = arith.constant 1.000000e+00 : f32
    %38 = vector.broadcast %cst_18 : f32 to vector<8x128xf32>
    %39 = arith.subf %37, %38 : vector<8x128xf32>
    %40 = vector.extract_strided_slice %32 {offsets = [0, 384], sizes = [8, 128], strides = [1, 1]} : vector<8x512xf32> to vector<8x128xf32>
    %41 = arith.mulf %34, %18 : vector<8x128xf32>
    %42 = arith.mulf %33, %39 : vector<8x128xf32>
    %43 = arith.addf %41, %42 : vector<8x128xf32>
    %44 = math.tanh %43 : vector<8x128xf32>
    %45 = arith.mulf %40, %44 : vector<8x128xf32>
    %46 = vector.extract_strided_slice %16 {offsets = [8, 0], sizes = [8, 512], strides = [1, 1]} : vector<64x512xf32> to vector<8x512xf32>
    %47 = arith.truncf %45 : vector<8x128xf32> to vector<8x128xbf16>
    %c0_19 = arith.constant 0 : index
    %c0_20 = arith.constant 0 : index
    %48 = vector.load %arg4[%c0_19, %c0_20] : memref<128x512xbf16, #tpu.memory_space<vmem>>, vector<128x512xbf16>
    %cst_21 = arith.constant dense<0.000000e+00> : vector<8x512xf32>
    %49 = tpu.matmul %47, %48, %cst_21 {dimension_numbers = #tpu.dot_dimension_numbers<[1], [0], [0], [1], [0, 0, 1, 1], [], []>} : vector<8x128xbf16>, vector<128x512xbf16>, vector<8x512xf32> -> vector<8x512xf32>
    %50 = arith.addf %46, %49 : vector<8x512xf32>
    %51 = vector.broadcast %10 : vector<1x512xf32> to vector<8x512xf32>
    %52 = arith.addf %50, %51 : vector<8x512xf32>
    %53 = vector.broadcast %9 : vector<1x512xf32> to vector<8x512xf32>
    %54 = arith.mulf %52, %53 : vector<8x512xf32>
    %55 = arith.negf %54 : vector<8x512xf32>
    %56 = math.exp %55 : vector<8x512xf32>
    %cst_22 = arith.constant 1.000000e+00 : f32
    %57 = vector.broadcast %cst_22 : f32 to vector<8x512xf32>
    %58 = arith.addf %57, %56 : vector<8x512xf32>
    %59 = arith.divf %57, %58 : vector<8x512xf32>
    %60 = vector.extract_strided_slice %59 {offsets = [0, 0], sizes = [8, 128], strides = [1, 1]} : vector<8x512xf32> to vector<8x128xf32>
    %61 = vector.extract_strided_slice %59 {offsets = [0, 128], sizes = [8, 128], strides = [1, 1]} : vector<8x512xf32> to vector<8x128xf32>
    %62 = vector.extract_strided_slice %59 {offsets = [0, 256], sizes = [8, 128], strides = [1, 1]} : vector<8x512xf32> to vector<8x128xf32>
    %cst_23 = arith.constant 2.000000e+00 : f32
    %63 = vector.broadcast %cst_23 : f32 to vector<8x128xf32>
    %64 = arith.mulf %63, %62 : vector<8x128xf32>
    %cst_24 = arith.constant 1.000000e+00 : f32
    %65 = vector.broadcast %cst_24 : f32 to vector<8x128xf32>
    %66 = arith.subf %64, %65 : vector<8x128xf32>
    %67 = vector.extract_strided_slice %59 {offsets = [0, 384], sizes = [8, 128], strides = [1, 1]} : vector<8x512xf32> to vector<8x128xf32>
    %68 = arith.mulf %61, %43 : vector<8x128xf32>
    %69 = arith.mulf %60, %66 : vector<8x128xf32>
    %70 = arith.addf %68, %69 : vector<8x128xf32>
    %71 = math.tanh %70 : vector<8x128xf32>
    %72 = arith.mulf %67, %71 : vector<8x128xf32>
    %73 = vector.extract_strided_slice %16 {offsets = [16, 0], sizes = [8, 512], strides = [1, 1]} : vector<64x512xf32> to vector<8x512xf32>
    %74 = arith.truncf %72 : vector<8x128xf32> to vector<8x128xbf16>
    %c0_25 = arith.constant 0 : index
    %c0_26 = arith.constant 0 : index
    %75 = vector.load %arg4[%c0_25, %c0_26] : memref<128x512xbf16, #tpu.memory_space<vmem>>, vector<128x512xbf16>
    %cst_27 = arith.constant dense<0.000000e+00> : vector<8x512xf32>
    %76 = tpu.matmul %74, %75, %cst_27 {dimension_numbers = #tpu.dot_dimension_numbers<[1], [0], [0], [1], [0, 0, 1, 1], [], []>} : vector<8x128xbf16>, vector<128x512xbf16>, vector<8x512xf32> -> vector<8x512xf32>
    %77 = arith.addf %73, %76 : vector<8x512xf32>
    %78 = vector.broadcast %10 : vector<1x512xf32> to vector<8x512xf32>
    %79 = arith.addf %77, %78 : vector<8x512xf32>
    %80 = vector.broadcast %9 : vector<1x512xf32> to vector<8x512xf32>
    %81 = arith.mulf %79, %80 : vector<8x512xf32>
    %82 = arith.negf %81 : vector<8x512xf32>
    %83 = math.exp %82 : vector<8x512xf32>
    %cst_28 = arith.constant 1.000000e+00 : f32
    %84 = vector.broadcast %cst_28 : f32 to vector<8x512xf32>
    %85 = arith.addf %84, %83 : vector<8x512xf32>
    %86 = arith.divf %84, %85 : vector<8x512xf32>
    %87 = vector.extract_strided_slice %86 {offsets = [0, 0], sizes = [8, 128], strides = [1, 1]} : vector<8x512xf32> to vector<8x128xf32>
    %88 = vector.extract_strided_slice %86 {offsets = [0, 128], sizes = [8, 128], strides = [1, 1]} : vector<8x512xf32> to vector<8x128xf32>
    %89 = vector.extract_strided_slice %86 {offsets = [0, 256], sizes = [8, 128], strides = [1, 1]} : vector<8x512xf32> to vector<8x128xf32>
    %cst_29 = arith.constant 2.000000e+00 : f32
    %90 = vector.broadcast %cst_29 : f32 to vector<8x128xf32>
    %91 = arith.mulf %90, %89 : vector<8x128xf32>
    %cst_30 = arith.constant 1.000000e+00 : f32
    %92 = vector.broadcast %cst_30 : f32 to vector<8x128xf32>
    %93 = arith.subf %91, %92 : vector<8x128xf32>
    %94 = vector.extract_strided_slice %86 {offsets = [0, 384], sizes = [8, 128], strides = [1, 1]} : vector<8x512xf32> to vector<8x128xf32>
    %95 = arith.mulf %88, %70 : vector<8x128xf32>
    %96 = arith.mulf %87, %93 : vector<8x128xf32>
    %97 = arith.addf %95, %96 : vector<8x128xf32>
    %98 = math.tanh %97 : vector<8x128xf32>
    %99 = arith.mulf %94, %98 : vector<8x128xf32>
    %100 = vector.extract_strided_slice %16 {offsets = [24, 0], sizes = [8, 512], strides = [1, 1]} : vector<64x512xf32> to vector<8x512xf32>
    %101 = arith.truncf %99 : vector<8x128xf32> to vector<8x128xbf16>
    %c0_31 = arith.constant 0 : index
    %c0_32 = arith.constant 0 : index
    %102 = vector.load %arg4[%c0_31, %c0_32] : memref<128x512xbf16, #tpu.memory_space<vmem>>, vector<128x512xbf16>
    %cst_33 = arith.constant dense<0.000000e+00> : vector<8x512xf32>
    %103 = tpu.matmul %101, %102, %cst_33 {dimension_numbers = #tpu.dot_dimension_numbers<[1], [0], [0], [1], [0, 0, 1, 1], [], []>} : vector<8x128xbf16>, vector<128x512xbf16>, vector<8x512xf32> -> vector<8x512xf32>
    %104 = arith.addf %100, %103 : vector<8x512xf32>
    %105 = vector.broadcast %10 : vector<1x512xf32> to vector<8x512xf32>
    %106 = arith.addf %104, %105 : vector<8x512xf32>
    %107 = vector.broadcast %9 : vector<1x512xf32> to vector<8x512xf32>
    %108 = arith.mulf %106, %107 : vector<8x512xf32>
    %109 = arith.negf %108 : vector<8x512xf32>
    %110 = math.exp %109 : vector<8x512xf32>
    %cst_34 = arith.constant 1.000000e+00 : f32
    %111 = vector.broadcast %cst_34 : f32 to vector<8x512xf32>
    %112 = arith.addf %111, %110 : vector<8x512xf32>
    %113 = arith.divf %111, %112 : vector<8x512xf32>
    %114 = vector.extract_strided_slice %113 {offsets = [0, 0], sizes = [8, 128], strides = [1, 1]} : vector<8x512xf32> to vector<8x128xf32>
    %115 = vector.extract_strided_slice %113 {offsets = [0, 128], sizes = [8, 128], strides = [1, 1]} : vector<8x512xf32> to vector<8x128xf32>
    %116 = vector.extract_strided_slice %113 {offsets = [0, 256], sizes = [8, 128], strides = [1, 1]} : vector<8x512xf32> to vector<8x128xf32>
    %cst_35 = arith.constant 2.000000e+00 : f32
    %117 = vector.broadcast %cst_35 : f32 to vector<8x128xf32>
    %118 = arith.mulf %117, %116 : vector<8x128xf32>
    %cst_36 = arith.constant 1.000000e+00 : f32
    %119 = vector.broadcast %cst_36 : f32 to vector<8x128xf32>
    %120 = arith.subf %118, %119 : vector<8x128xf32>
    %121 = vector.extract_strided_slice %113 {offsets = [0, 384], sizes = [8, 128], strides = [1, 1]} : vector<8x512xf32> to vector<8x128xf32>
    %122 = arith.mulf %115, %97 : vector<8x128xf32>
    %123 = arith.mulf %114, %120 : vector<8x128xf32>
    %124 = arith.addf %122, %123 : vector<8x128xf32>
    %125 = math.tanh %124 : vector<8x128xf32>
    %126 = arith.mulf %121, %125 : vector<8x128xf32>
    %127 = vector.extract_strided_slice %16 {offsets = [32, 0], sizes = [8, 512], strides = [1, 1]} : vector<64x512xf32> to vector<8x512xf32>
    %128 = arith.truncf %126 : vector<8x128xf32> to vector<8x128xbf16>
    %c0_37 = arith.constant 0 : index
    %c0_38 = arith.constant 0 : index
    %129 = vector.load %arg4[%c0_37, %c0_38] : memref<128x512xbf16, #tpu.memory_space<vmem>>, vector<128x512xbf16>
    %cst_39 = arith.constant dense<0.000000e+00> : vector<8x512xf32>
    %130 = tpu.matmul %128, %129, %cst_39 {dimension_numbers = #tpu.dot_dimension_numbers<[1], [0], [0], [1], [0, 0, 1, 1], [], []>} : vector<8x128xbf16>, vector<128x512xbf16>, vector<8x512xf32> -> vector<8x512xf32>
    %131 = arith.addf %127, %130 : vector<8x512xf32>
    %132 = vector.broadcast %10 : vector<1x512xf32> to vector<8x512xf32>
    %133 = arith.addf %131, %132 : vector<8x512xf32>
    %134 = vector.broadcast %9 : vector<1x512xf32> to vector<8x512xf32>
    %135 = arith.mulf %133, %134 : vector<8x512xf32>
    %136 = arith.negf %135 : vector<8x512xf32>
    %137 = math.exp %136 : vector<8x512xf32>
    %cst_40 = arith.constant 1.000000e+00 : f32
    %138 = vector.broadcast %cst_40 : f32 to vector<8x512xf32>
    %139 = arith.addf %138, %137 : vector<8x512xf32>
    %140 = arith.divf %138, %139 : vector<8x512xf32>
    %141 = vector.extract_strided_slice %140 {offsets = [0, 0], sizes = [8, 128], strides = [1, 1]} : vector<8x512xf32> to vector<8x128xf32>
    %142 = vector.extract_strided_slice %140 {offsets = [0, 128], sizes = [8, 128], strides = [1, 1]} : vector<8x512xf32> to vector<8x128xf32>
    %143 = vector.extract_strided_slice %140 {offsets = [0, 256], sizes = [8, 128], strides = [1, 1]} : vector<8x512xf32> to vector<8x128xf32>
    %cst_41 = arith.constant 2.000000e+00 : f32
    %144 = vector.broadcast %cst_41 : f32 to vector<8x128xf32>
    %145 = arith.mulf %144, %143 : vector<8x128xf32>
    %cst_42 = arith.constant 1.000000e+00 : f32
    %146 = vector.broadcast %cst_42 : f32 to vector<8x128xf32>
    %147 = arith.subf %145, %146 : vector<8x128xf32>
    %148 = vector.extract_strided_slice %140 {offsets = [0, 384], sizes = [8, 128], strides = [1, 1]} : vector<8x512xf32> to vector<8x128xf32>
    %149 = arith.mulf %142, %124 : vector<8x128xf32>
    %150 = arith.mulf %141, %147 : vector<8x128xf32>
    %151 = arith.addf %149, %150 : vector<8x128xf32>
    %152 = math.tanh %151 : vector<8x128xf32>
    %153 = arith.mulf %148, %152 : vector<8x128xf32>
    %154 = vector.extract_strided_slice %16 {offsets = [40, 0], sizes = [8, 512], strides = [1, 1]} : vector<64x512xf32> to vector<8x512xf32>
    %155 = arith.truncf %153 : vector<8x128xf32> to vector<8x128xbf16>
    %c0_43 = arith.constant 0 : index
    %c0_44 = arith.constant 0 : index
    %156 = vector.load %arg4[%c0_43, %c0_44] : memref<128x512xbf16, #tpu.memory_space<vmem>>, vector<128x512xbf16>
    %cst_45 = arith.constant dense<0.000000e+00> : vector<8x512xf32>
    %157 = tpu.matmul %155, %156, %cst_45 {dimension_numbers = #tpu.dot_dimension_numbers<[1], [0], [0], [1], [0, 0, 1, 1], [], []>} : vector<8x128xbf16>, vector<128x512xbf16>, vector<8x512xf32> -> vector<8x512xf32>
    %158 = arith.addf %154, %157 : vector<8x512xf32>
    %159 = vector.broadcast %10 : vector<1x512xf32> to vector<8x512xf32>
    %160 = arith.addf %158, %159 : vector<8x512xf32>
    %161 = vector.broadcast %9 : vector<1x512xf32> to vector<8x512xf32>
    %162 = arith.mulf %160, %161 : vector<8x512xf32>
    %163 = arith.negf %162 : vector<8x512xf32>
    %164 = math.exp %163 : vector<8x512xf32>
    %cst_46 = arith.constant 1.000000e+00 : f32
    %165 = vector.broadcast %cst_46 : f32 to vector<8x512xf32>
    %166 = arith.addf %165, %164 : vector<8x512xf32>
    %167 = arith.divf %165, %166 : vector<8x512xf32>
    %168 = vector.extract_strided_slice %167 {offsets = [0, 0], sizes = [8, 128], strides = [1, 1]} : vector<8x512xf32> to vector<8x128xf32>
    %169 = vector.extract_strided_slice %167 {offsets = [0, 128], sizes = [8, 128], strides = [1, 1]} : vector<8x512xf32> to vector<8x128xf32>
    %170 = vector.extract_strided_slice %167 {offsets = [0, 256], sizes = [8, 128], strides = [1, 1]} : vector<8x512xf32> to vector<8x128xf32>
    %cst_47 = arith.constant 2.000000e+00 : f32
    %171 = vector.broadcast %cst_47 : f32 to vector<8x128xf32>
    %172 = arith.mulf %171, %170 : vector<8x128xf32>
    %cst_48 = arith.constant 1.000000e+00 : f32
    %173 = vector.broadcast %cst_48 : f32 to vector<8x128xf32>
    %174 = arith.subf %172, %173 : vector<8x128xf32>
    %175 = vector.extract_strided_slice %167 {offsets = [0, 384], sizes = [8, 128], strides = [1, 1]} : vector<8x512xf32> to vector<8x128xf32>
    %176 = arith.mulf %169, %151 : vector<8x128xf32>
    %177 = arith.mulf %168, %174 : vector<8x128xf32>
    %178 = arith.addf %176, %177 : vector<8x128xf32>
    %179 = math.tanh %178 : vector<8x128xf32>
    %180 = arith.mulf %175, %179 : vector<8x128xf32>
    %181 = vector.extract_strided_slice %16 {offsets = [48, 0], sizes = [8, 512], strides = [1, 1]} : vector<64x512xf32> to vector<8x512xf32>
    %182 = arith.truncf %180 : vector<8x128xf32> to vector<8x128xbf16>
    %c0_49 = arith.constant 0 : index
    %c0_50 = arith.constant 0 : index
    %183 = vector.load %arg4[%c0_49, %c0_50] : memref<128x512xbf16, #tpu.memory_space<vmem>>, vector<128x512xbf16>
    %cst_51 = arith.constant dense<0.000000e+00> : vector<8x512xf32>
    %184 = tpu.matmul %182, %183, %cst_51 {dimension_numbers = #tpu.dot_dimension_numbers<[1], [0], [0], [1], [0, 0, 1, 1], [], []>} : vector<8x128xbf16>, vector<128x512xbf16>, vector<8x512xf32> -> vector<8x512xf32>
    %185 = arith.addf %181, %184 : vector<8x512xf32>
    %186 = vector.broadcast %10 : vector<1x512xf32> to vector<8x512xf32>
    %187 = arith.addf %185, %186 : vector<8x512xf32>
    %188 = vector.broadcast %9 : vector<1x512xf32> to vector<8x512xf32>
    %189 = arith.mulf %187, %188 : vector<8x512xf32>
    %190 = arith.negf %189 : vector<8x512xf32>
    %191 = math.exp %190 : vector<8x512xf32>
    %cst_52 = arith.constant 1.000000e+00 : f32
    %192 = vector.broadcast %cst_52 : f32 to vector<8x512xf32>
    %193 = arith.addf %192, %191 : vector<8x512xf32>
    %194 = arith.divf %192, %193 : vector<8x512xf32>
    %195 = vector.extract_strided_slice %194 {offsets = [0, 0], sizes = [8, 128], strides = [1, 1]} : vector<8x512xf32> to vector<8x128xf32>
    %196 = vector.extract_strided_slice %194 {offsets = [0, 128], sizes = [8, 128], strides = [1, 1]} : vector<8x512xf32> to vector<8x128xf32>
    %197 = vector.extract_strided_slice %194 {offsets = [0, 256], sizes = [8, 128], strides = [1, 1]} : vector<8x512xf32> to vector<8x128xf32>
    %cst_53 = arith.constant 2.000000e+00 : f32
    %198 = vector.broadcast %cst_53 : f32 to vector<8x128xf32>
    %199 = arith.mulf %198, %197 : vector<8x128xf32>
    %cst_54 = arith.constant 1.000000e+00 : f32
    %200 = vector.broadcast %cst_54 : f32 to vector<8x128xf32>
    %201 = arith.subf %199, %200 : vector<8x128xf32>
    %202 = vector.extract_strided_slice %194 {offsets = [0, 384], sizes = [8, 128], strides = [1, 1]} : vector<8x512xf32> to vector<8x128xf32>
    %203 = arith.mulf %196, %178 : vector<8x128xf32>
    %204 = arith.mulf %195, %201 : vector<8x128xf32>
    %205 = arith.addf %203, %204 : vector<8x128xf32>
    %206 = math.tanh %205 : vector<8x128xf32>
    %207 = arith.mulf %202, %206 : vector<8x128xf32>
    %208 = vector.extract_strided_slice %16 {offsets = [56, 0], sizes = [8, 512], strides = [1, 1]} : vector<64x512xf32> to vector<8x512xf32>
    %209 = arith.truncf %207 : vector<8x128xf32> to vector<8x128xbf16>
    %c0_55 = arith.constant 0 : index
    %c0_56 = arith.constant 0 : index
    %210 = vector.load %arg4[%c0_55, %c0_56] : memref<128x512xbf16, #tpu.memory_space<vmem>>, vector<128x512xbf16>
    %cst_57 = arith.constant dense<0.000000e+00> : vector<8x512xf32>
    %211 = tpu.matmul %209, %210, %cst_57 {dimension_numbers = #tpu.dot_dimension_numbers<[1], [0], [0], [1], [0, 0, 1, 1], [], []>} : vector<8x128xbf16>, vector<128x512xbf16>, vector<8x512xf32> -> vector<8x512xf32>
    %212 = arith.addf %208, %211 : vector<8x512xf32>
    %213 = vector.broadcast %10 : vector<1x512xf32> to vector<8x512xf32>
    %214 = arith.addf %212, %213 : vector<8x512xf32>
    %215 = vector.broadcast %9 : vector<1x512xf32> to vector<8x512xf32>
    %216 = arith.mulf %214, %215 : vector<8x512xf32>
    %217 = arith.negf %216 : vector<8x512xf32>
    %218 = math.exp %217 : vector<8x512xf32>
    %cst_58 = arith.constant 1.000000e+00 : f32
    %219 = vector.broadcast %cst_58 : f32 to vector<8x512xf32>
    %220 = arith.addf %219, %218 : vector<8x512xf32>
    %221 = arith.divf %219, %220 : vector<8x512xf32>
    %222 = vector.extract_strided_slice %221 {offsets = [0, 0], sizes = [8, 128], strides = [1, 1]} : vector<8x512xf32> to vector<8x128xf32>
    %223 = vector.extract_strided_slice %221 {offsets = [0, 128], sizes = [8, 128], strides = [1, 1]} : vector<8x512xf32> to vector<8x128xf32>
    %224 = vector.extract_strided_slice %221 {offsets = [0, 256], sizes = [8, 128], strides = [1, 1]} : vector<8x512xf32> to vector<8x128xf32>
    %cst_59 = arith.constant 2.000000e+00 : f32
    %225 = vector.broadcast %cst_59 : f32 to vector<8x128xf32>
    %226 = arith.mulf %225, %224 : vector<8x128xf32>
    %cst_60 = arith.constant 1.000000e+00 : f32
    %227 = vector.broadcast %cst_60 : f32 to vector<8x128xf32>
    %228 = arith.subf %226, %227 : vector<8x128xf32>
    %229 = vector.extract_strided_slice %221 {offsets = [0, 384], sizes = [8, 128], strides = [1, 1]} : vector<8x512xf32> to vector<8x128xf32>
    %230 = arith.mulf %223, %205 : vector<8x128xf32>
    %231 = arith.mulf %222, %228 : vector<8x128xf32>
    %232 = arith.addf %230, %231 : vector<8x128xf32>
    %233 = math.tanh %232 : vector<8x128xf32>
    %234 = arith.mulf %229, %233 : vector<8x128xf32>
    %c0_i32 = arith.constant 0 : i32
    %235 = vector.broadcast %c0_i32 : i32 to vector<8x128xi32>
    %c0_61 = arith.constant 0 : index
    %c0_62 = arith.constant 0 : index
    %236 = vector.load %arg0[%c0_61, %c0_62] : memref<64x128xf32, #tpu.memory_space<vmem>>, vector<8x128xf32>
    %c0_63 = arith.constant 0 : index
    %c0_64 = arith.constant 0 : index
    %237 = vector.load %arg1[%c0_63, %c0_64] : memref<64x1xf32, #tpu.memory_space<vmem>>, vector<8x1xf32>
    %c0_65 = arith.constant 0 : index
    %c0_66 = arith.constant 0 : index
    %238 = vector.load %arg0[%c0_65, %c0_66] : memref<64x128xf32, #tpu.memory_space<vmem>>, vector<8x128xf32>
    %cst_67 = arith.constant 5.000000e-01 : f32
    %239 = vector.broadcast %cst_67 : f32 to vector<8x1xf32>
    %240 = arith.cmpf ogt, %237, %239 : vector<8x1xf32>
    %241 = vector.shape_cast %240 : vector<8x1xi1> to vector<8x1xi1>
    %242 = vector.broadcast %241 : vector<8x1xi1> to vector<8x128xi1>
    %243 = arith.select %242, %236, %238 : vector<8x128xi1>, vector<8x128xf32>
    %244 = arith.truncf %243 : vector<8x128xf32> to vector<8x128xbf16>
    %c0_68 = arith.constant 0 : index
    %c0_69 = arith.constant 0 : index
    %245 = vector.load %arg6[%c0_68, %c0_69] : memref<128x512xbf16, #tpu.memory_space<vmem>>, vector<128x512xbf16>
    %cst_70 = arith.constant dense<0.000000e+00> : vector<8x512xf32>
    %246 = tpu.matmul %244, %245, %cst_70 {dimension_numbers = #tpu.dot_dimension_numbers<[1], [0], [0], [1], [0, 0, 1, 1], [], []>} : vector<8x128xbf16>, vector<128x512xbf16>, vector<8x512xf32> -> vector<8x512xf32>
    %247 = arith.truncf %234 : vector<8x128xf32> to vector<8x128xbf16>
    %c0_71 = arith.constant 0 : index
    %c0_72 = arith.constant 0 : index
    %248 = vector.load %arg7[%c0_71, %c0_72] : memref<128x512xbf16, #tpu.memory_space<vmem>>, vector<128x512xbf16>
    %cst_73 = arith.constant dense<0.000000e+00> : vector<8x512xf32>
    %249 = tpu.matmul %247, %248, %cst_73 {dimension_numbers = #tpu.dot_dimension_numbers<[1], [0], [0], [1], [0, 0, 1, 1], [], []>} : vector<8x128xbf16>, vector<128x512xbf16>, vector<8x512xf32> -> vector<8x512xf32>
    %250 = arith.addf %246, %249 : vector<8x512xf32>
    %251 = vector.broadcast %11 : vector<1x512xf32> to vector<8x512xf32>
    %252 = arith.addf %250, %251 : vector<8x512xf32>
    %253 = vector.broadcast %9 : vector<1x512xf32> to vector<8x512xf32>
    %254 = arith.mulf %252, %253 : vector<8x512xf32>
    %255 = arith.negf %254 : vector<8x512xf32>
    %256 = math.exp %255 : vector<8x512xf32>
    %cst_74 = arith.constant 1.000000e+00 : f32
    %257 = vector.broadcast %cst_74 : f32 to vector<8x512xf32>
    %258 = arith.addf %257, %256 : vector<8x512xf32>
    %259 = arith.divf %257, %258 : vector<8x512xf32>
    %260 = vector.extract_strided_slice %259 {offsets = [0, 0], sizes = [8, 128], strides = [1, 1]} : vector<8x512xf32> to vector<8x128xf32>
    %261 = vector.extract_strided_slice %259 {offsets = [0, 128], sizes = [8, 128], strides = [1, 1]} : vector<8x512xf32> to vector<8x128xf32>
    %262 = vector.extract_strided_slice %259 {offsets = [0, 256], sizes = [8, 128], strides = [1, 1]} : vector<8x512xf32> to vector<8x128xf32>
    %cst_75 = arith.constant 2.000000e+00 : f32
    %263 = vector.broadcast %cst_75 : f32 to vector<8x128xf32>
    %264 = arith.mulf %263, %262 : vector<8x128xf32>
    %cst_76 = arith.constant 1.000000e+00 : f32
    %265 = vector.broadcast %cst_76 : f32 to vector<8x128xf32>
    %266 = arith.subf %264, %265 : vector<8x128xf32>
    %267 = vector.extract_strided_slice %259 {offsets = [0, 384], sizes = [8, 128], strides = [1, 1]} : vector<8x512xf32> to vector<8x128xf32>
    %268 = arith.mulf %261, %232 : vector<8x128xf32>
    %269 = arith.mulf %260, %266 : vector<8x128xf32>
    %270 = arith.addf %268, %269 : vector<8x128xf32>
    %271 = math.tanh %270 : vector<8x128xf32>
    %272 = arith.mulf %267, %271 : vector<8x128xf32>
    %273 = arith.truncf %272 : vector<8x128xf32> to vector<8x128xbf16>
    %c0_77 = arith.constant 0 : index
    %c0_78 = arith.constant 0 : index
    %274 = vector.load %arg9[%c0_77, %c0_78] : memref<128x128xbf16, #tpu.memory_space<vmem>>, vector<128x128xbf16>
    %cst_79 = arith.constant dense<0.000000e+00> : vector<8x128xf32>
    %275 = tpu.matmul %273, %274, %cst_79 {dimension_numbers = #tpu.dot_dimension_numbers<[1], [0], [0], [1], [0, 0, 1, 1], [], []>} : vector<8x128xbf16>, vector<128x128xbf16>, vector<8x128xf32> -> vector<8x128xf32>
    %276 = vector.broadcast %12 : vector<1x128xf32> to vector<8x128xf32>
    %277 = arith.addf %275, %276 : vector<8x128xf32>
    %c0_80 = arith.constant 0 : index
    %c0_81 = arith.constant 0 : index
    %278 = vector.load %arg2[%c0_80, %c0_81] : memref<64x128xf32, #tpu.memory_space<vmem>>, vector<8x128xf32>
    %279 = arith.addf %277, %278 : vector<8x128xf32>
    %cst_82 = arith.constant dense<0xFF800000> : vector<8xf32>
    %280 = vector.multi_reduction <maximumf>, %279, %cst_82 [1] : vector<8x128xf32> to vector<8xf32>
    %281 = vector.shape_cast %280 : vector<8xf32> to vector<8x1xf32>
    %282 = vector.broadcast %281 : vector<8x1xf32> to vector<8x128xf32>
    %283 = arith.cmpf oge, %279, %282 : vector<8x128xf32>
    %284 = arith.extui %283 : vector<8x128xi1> to vector<8x128xi32>
    %285 = arith.sitofp %284 : vector<8x128xi32> to vector<8x128xf32>
    %c128_i32 = arith.constant 128 : i32
    %286 = vector.shape_cast %0 : vector<1x128xi32> to vector<1x128xi32>
    %287 = vector.broadcast %286 : vector<1x128xi32> to vector<8x128xi32>
    %288 = vector.broadcast %c128_i32 : i32 to vector<8x128xi32>
    %289 = arith.select %283, %287, %288 : vector<8x128xi1>, vector<8x128xi32>
    %cst_83 = arith.constant dense<2147483647> : vector<8xi32>
    %290 = vector.multi_reduction <minsi>, %289, %cst_83 [1] : vector<8x128xi32> to vector<8xi32>
    %291 = vector.shape_cast %290 : vector<8xi32> to vector<8x1xi32>
    %c0_i32_84 = arith.constant 0 : i32
    %292 = vector.broadcast %c0_i32_84 : i32 to vector<1x128xi32>
    %293 = arith.cmpi eq, %0, %292 : vector<1x128xi32>
    %294 = vector.shape_cast %293 : vector<1x128xi1> to vector<1x128xi1>
    %295 = vector.broadcast %294 : vector<1x128xi1> to vector<8x128xi1>
    %296 = vector.shape_cast %291 : vector<8x1xi32> to vector<8x1xi32>
    %297 = vector.broadcast %296 : vector<8x1xi32> to vector<8x128xi32>
    %298 = arith.select %295, %297, %235 : vector<8x128xi1>, vector<8x128xi32>
    %c8 = arith.constant 8 : index
    %c0_85 = arith.constant 0 : index
    %299 = vector.load %arg1[%c8, %c0_85] : memref<64x1xf32, #tpu.memory_space<vmem>>, vector<8x1xf32>
    %c8_86 = arith.constant 8 : index
    %c0_87 = arith.constant 0 : index
    %300 = vector.load %arg0[%c8_86, %c0_87] : memref<64x128xf32, #tpu.memory_space<vmem>>, vector<8x128xf32>
    %cst_88 = arith.constant 5.000000e-01 : f32
    %301 = vector.broadcast %cst_88 : f32 to vector<8x1xf32>
    %302 = arith.cmpf ogt, %299, %301 : vector<8x1xf32>
    %303 = vector.shape_cast %302 : vector<8x1xi1> to vector<8x1xi1>
    %304 = vector.broadcast %303 : vector<8x1xi1> to vector<8x128xi1>
    %305 = arith.select %304, %285, %300 : vector<8x128xi1>, vector<8x128xf32>
    %306 = arith.truncf %305 : vector<8x128xf32> to vector<8x128xbf16>
    %c0_89 = arith.constant 0 : index
    %c0_90 = arith.constant 0 : index
    %307 = vector.load %arg6[%c0_89, %c0_90] : memref<128x512xbf16, #tpu.memory_space<vmem>>, vector<128x512xbf16>
    %cst_91 = arith.constant dense<0.000000e+00> : vector<8x512xf32>
    %308 = tpu.matmul %306, %307, %cst_91 {dimension_numbers = #tpu.dot_dimension_numbers<[1], [0], [0], [1], [0, 0, 1, 1], [], []>} : vector<8x128xbf16>, vector<128x512xbf16>, vector<8x512xf32> -> vector<8x512xf32>
    %309 = arith.truncf %272 : vector<8x128xf32> to vector<8x128xbf16>
    %c0_92 = arith.constant 0 : index
    %c0_93 = arith.constant 0 : index
    %310 = vector.load %arg7[%c0_92, %c0_93] : memref<128x512xbf16, #tpu.memory_space<vmem>>, vector<128x512xbf16>
    %cst_94 = arith.constant dense<0.000000e+00> : vector<8x512xf32>
    %311 = tpu.matmul %309, %310, %cst_94 {dimension_numbers = #tpu.dot_dimension_numbers<[1], [0], [0], [1], [0, 0, 1, 1], [], []>} : vector<8x128xbf16>, vector<128x512xbf16>, vector<8x512xf32> -> vector<8x512xf32>
    %312 = arith.addf %308, %311 : vector<8x512xf32>
    %313 = vector.broadcast %11 : vector<1x512xf32> to vector<8x512xf32>
    %314 = arith.addf %312, %313 : vector<8x512xf32>
    %315 = vector.broadcast %9 : vector<1x512xf32> to vector<8x512xf32>
    %316 = arith.mulf %314, %315 : vector<8x512xf32>
    %317 = arith.negf %316 : vector<8x512xf32>
    %318 = math.exp %317 : vector<8x512xf32>
    %cst_95 = arith.constant 1.000000e+00 : f32
    %319 = vector.broadcast %cst_95 : f32 to vector<8x512xf32>
    %320 = arith.addf %319, %318 : vector<8x512xf32>
    %321 = arith.divf %319, %320 : vector<8x512xf32>
    %322 = vector.extract_strided_slice %321 {offsets = [0, 0], sizes = [8, 128], strides = [1, 1]} : vector<8x512xf32> to vector<8x128xf32>
    %323 = vector.extract_strided_slice %321 {offsets = [0, 128], sizes = [8, 128], strides = [1, 1]} : vector<8x512xf32> to vector<8x128xf32>
    %324 = vector.extract_strided_slice %321 {offsets = [0, 256], sizes = [8, 128], strides = [1, 1]} : vector<8x512xf32> to vector<8x128xf32>
    %cst_96 = arith.constant 2.000000e+00 : f32
    %325 = vector.broadcast %cst_96 : f32 to vector<8x128xf32>
    %326 = arith.mulf %325, %324 : vector<8x128xf32>
    %cst_97 = arith.constant 1.000000e+00 : f32
    %327 = vector.broadcast %cst_97 : f32 to vector<8x128xf32>
    %328 = arith.subf %326, %327 : vector<8x128xf32>
    %329 = vector.extract_strided_slice %321 {offsets = [0, 384], sizes = [8, 128], strides = [1, 1]} : vector<8x512xf32> to vector<8x128xf32>
    %330 = arith.mulf %323, %270 : vector<8x128xf32>
    %331 = arith.mulf %322, %328 : vector<8x128xf32>
    %332 = arith.addf %330, %331 : vector<8x128xf32>
    %333 = math.tanh %332 : vector<8x128xf32>
    %334 = arith.mulf %329, %333 : vector<8x128xf32>
    %335 = arith.truncf %334 : vector<8x128xf32> to vector<8x128xbf16>
    %c0_98 = arith.constant 0 : index
    %c0_99 = arith.constant 0 : index
    %336 = vector.load %arg9[%c0_98, %c0_99] : memref<128x128xbf16, #tpu.memory_space<vmem>>, vector<128x128xbf16>
    %cst_100 = arith.constant dense<0.000000e+00> : vector<8x128xf32>
    %337 = tpu.matmul %335, %336, %cst_100 {dimension_numbers = #tpu.dot_dimension_numbers<[1], [0], [0], [1], [0, 0, 1, 1], [], []>} : vector<8x128xbf16>, vector<128x128xbf16>, vector<8x128xf32> -> vector<8x128xf32>
    %338 = vector.broadcast %12 : vector<1x128xf32> to vector<8x128xf32>
    %339 = arith.addf %337, %338 : vector<8x128xf32>
    %c8_101 = arith.constant 8 : index
    %c0_102 = arith.constant 0 : index
    %340 = vector.load %arg2[%c8_101, %c0_102] : memref<64x128xf32, #tpu.memory_space<vmem>>, vector<8x128xf32>
    %341 = arith.addf %339, %340 : vector<8x128xf32>
    %cst_103 = arith.constant dense<0xFF800000> : vector<8xf32>
    %342 = vector.multi_reduction <maximumf>, %341, %cst_103 [1] : vector<8x128xf32> to vector<8xf32>
    %343 = vector.shape_cast %342 : vector<8xf32> to vector<8x1xf32>
    %344 = vector.broadcast %343 : vector<8x1xf32> to vector<8x128xf32>
    %345 = arith.cmpf oge, %341, %344 : vector<8x128xf32>
    %346 = arith.extui %345 : vector<8x128xi1> to vector<8x128xi32>
    %347 = arith.sitofp %346 : vector<8x128xi32> to vector<8x128xf32>
    %c128_i32_104 = arith.constant 128 : i32
    %348 = vector.shape_cast %0 : vector<1x128xi32> to vector<1x128xi32>
    %349 = vector.broadcast %348 : vector<1x128xi32> to vector<8x128xi32>
    %350 = vector.broadcast %c128_i32_104 : i32 to vector<8x128xi32>
    %351 = arith.select %345, %349, %350 : vector<8x128xi1>, vector<8x128xi32>
    %cst_105 = arith.constant dense<2147483647> : vector<8xi32>
    %352 = vector.multi_reduction <minsi>, %351, %cst_105 [1] : vector<8x128xi32> to vector<8xi32>
    %353 = vector.shape_cast %352 : vector<8xi32> to vector<8x1xi32>
    %c1_i32 = arith.constant 1 : i32
    %354 = vector.broadcast %c1_i32 : i32 to vector<1x128xi32>
    %355 = arith.cmpi eq, %0, %354 : vector<1x128xi32>
    %356 = vector.shape_cast %355 : vector<1x128xi1> to vector<1x128xi1>
    %357 = vector.broadcast %356 : vector<1x128xi1> to vector<8x128xi1>
    %358 = vector.shape_cast %353 : vector<8x1xi32> to vector<8x1xi32>
    %359 = vector.broadcast %358 : vector<8x1xi32> to vector<8x128xi32>
    %360 = arith.select %357, %359, %298 : vector<8x128xi1>, vector<8x128xi32>
    %c16 = arith.constant 16 : index
    %c0_106 = arith.constant 0 : index
    %361 = vector.load %arg1[%c16, %c0_106] : memref<64x1xf32, #tpu.memory_space<vmem>>, vector<8x1xf32>
    %c16_107 = arith.constant 16 : index
    %c0_108 = arith.constant 0 : index
    %362 = vector.load %arg0[%c16_107, %c0_108] : memref<64x128xf32, #tpu.memory_space<vmem>>, vector<8x128xf32>
    %cst_109 = arith.constant 5.000000e-01 : f32
    %363 = vector.broadcast %cst_109 : f32 to vector<8x1xf32>
    %364 = arith.cmpf ogt, %361, %363 : vector<8x1xf32>
    %365 = vector.shape_cast %364 : vector<8x1xi1> to vector<8x1xi1>
    %366 = vector.broadcast %365 : vector<8x1xi1> to vector<8x128xi1>
    %367 = arith.select %366, %347, %362 : vector<8x128xi1>, vector<8x128xf32>
    %368 = arith.truncf %367 : vector<8x128xf32> to vector<8x128xbf16>
    %c0_110 = arith.constant 0 : index
    %c0_111 = arith.constant 0 : index
    %369 = vector.load %arg6[%c0_110, %c0_111] : memref<128x512xbf16, #tpu.memory_space<vmem>>, vector<128x512xbf16>
    %cst_112 = arith.constant dense<0.000000e+00> : vector<8x512xf32>
    %370 = tpu.matmul %368, %369, %cst_112 {dimension_numbers = #tpu.dot_dimension_numbers<[1], [0], [0], [1], [0, 0, 1, 1], [], []>} : vector<8x128xbf16>, vector<128x512xbf16>, vector<8x512xf32> -> vector<8x512xf32>
    %371 = arith.truncf %334 : vector<8x128xf32> to vector<8x128xbf16>
    %c0_113 = arith.constant 0 : index
    %c0_114 = arith.constant 0 : index
    %372 = vector.load %arg7[%c0_113, %c0_114] : memref<128x512xbf16, #tpu.memory_space<vmem>>, vector<128x512xbf16>
    %cst_115 = arith.constant dense<0.000000e+00> : vector<8x512xf32>
    %373 = tpu.matmul %371, %372, %cst_115 {dimension_numbers = #tpu.dot_dimension_numbers<[1], [0], [0], [1], [0, 0, 1, 1], [], []>} : vector<8x128xbf16>, vector<128x512xbf16>, vector<8x512xf32> -> vector<8x512xf32>
    %374 = arith.addf %370, %373 : vector<8x512xf32>
    %375 = vector.broadcast %11 : vector<1x512xf32> to vector<8x512xf32>
    %376 = arith.addf %374, %375 : vector<8x512xf32>
    %377 = vector.broadcast %9 : vector<1x512xf32> to vector<8x512xf32>
    %378 = arith.mulf %376, %377 : vector<8x512xf32>
    %379 = arith.negf %378 : vector<8x512xf32>
    %380 = math.exp %379 : vector<8x512xf32>
    %cst_116 = arith.constant 1.000000e+00 : f32
    %381 = vector.broadcast %cst_116 : f32 to vector<8x512xf32>
    %382 = arith.addf %381, %380 : vector<8x512xf32>
    %383 = arith.divf %381, %382 : vector<8x512xf32>
    %384 = vector.extract_strided_slice %383 {offsets = [0, 0], sizes = [8, 128], strides = [1, 1]} : vector<8x512xf32> to vector<8x128xf32>
    %385 = vector.extract_strided_slice %383 {offsets = [0, 128], sizes = [8, 128], strides = [1, 1]} : vector<8x512xf32> to vector<8x128xf32>
    %386 = vector.extract_strided_slice %383 {offsets = [0, 256], sizes = [8, 128], strides = [1, 1]} : vector<8x512xf32> to vector<8x128xf32>
    %cst_117 = arith.constant 2.000000e+00 : f32
    %387 = vector.broadcast %cst_117 : f32 to vector<8x128xf32>
    %388 = arith.mulf %387, %386 : vector<8x128xf32>
    %cst_118 = arith.constant 1.000000e+00 : f32
    %389 = vector.broadcast %cst_118 : f32 to vector<8x128xf32>
    %390 = arith.subf %388, %389 : vector<8x128xf32>
    %391 = vector.extract_strided_slice %383 {offsets = [0, 384], sizes = [8, 128], strides = [1, 1]} : vector<8x512xf32> to vector<8x128xf32>
    %392 = arith.mulf %385, %332 : vector<8x128xf32>
    %393 = arith.mulf %384, %390 : vector<8x128xf32>
    %394 = arith.addf %392, %393 : vector<8x128xf32>
    %395 = math.tanh %394 : vector<8x128xf32>
    %396 = arith.mulf %391, %395 : vector<8x128xf32>
    %397 = arith.truncf %396 : vector<8x128xf32> to vector<8x128xbf16>
    %c0_119 = arith.constant 0 : index
    %c0_120 = arith.constant 0 : index
    %398 = vector.load %arg9[%c0_119, %c0_120] : memref<128x128xbf16, #tpu.memory_space<vmem>>, vector<128x128xbf16>
    %cst_121 = arith.constant dense<0.000000e+00> : vector<8x128xf32>
    %399 = tpu.matmul %397, %398, %cst_121 {dimension_numbers = #tpu.dot_dimension_numbers<[1], [0], [0], [1], [0, 0, 1, 1], [], []>} : vector<8x128xbf16>, vector<128x128xbf16>, vector<8x128xf32> -> vector<8x128xf32>
    %400 = vector.broadcast %12 : vector<1x128xf32> to vector<8x128xf32>
    %401 = arith.addf %399, %400 : vector<8x128xf32>
    %c16_122 = arith.constant 16 : index
    %c0_123 = arith.constant 0 : index
    %402 = vector.load %arg2[%c16_122, %c0_123] : memref<64x128xf32, #tpu.memory_space<vmem>>, vector<8x128xf32>
    %403 = arith.addf %401, %402 : vector<8x128xf32>
    %cst_124 = arith.constant dense<0xFF800000> : vector<8xf32>
    %404 = vector.multi_reduction <maximumf>, %403, %cst_124 [1] : vector<8x128xf32> to vector<8xf32>
    %405 = vector.shape_cast %404 : vector<8xf32> to vector<8x1xf32>
    %406 = vector.broadcast %405 : vector<8x1xf32> to vector<8x128xf32>
    %407 = arith.cmpf oge, %403, %406 : vector<8x128xf32>
    %408 = arith.extui %407 : vector<8x128xi1> to vector<8x128xi32>
    %409 = arith.sitofp %408 : vector<8x128xi32> to vector<8x128xf32>
    %c128_i32_125 = arith.constant 128 : i32
    %410 = vector.shape_cast %0 : vector<1x128xi32> to vector<1x128xi32>
    %411 = vector.broadcast %410 : vector<1x128xi32> to vector<8x128xi32>
    %412 = vector.broadcast %c128_i32_125 : i32 to vector<8x128xi32>
    %413 = arith.select %407, %411, %412 : vector<8x128xi1>, vector<8x128xi32>
    %cst_126 = arith.constant dense<2147483647> : vector<8xi32>
    %414 = vector.multi_reduction <minsi>, %413, %cst_126 [1] : vector<8x128xi32> to vector<8xi32>
    %415 = vector.shape_cast %414 : vector<8xi32> to vector<8x1xi32>
    %c2_i32 = arith.constant 2 : i32
    %416 = vector.broadcast %c2_i32 : i32 to vector<1x128xi32>
    %417 = arith.cmpi eq, %0, %416 : vector<1x128xi32>
    %418 = vector.shape_cast %417 : vector<1x128xi1> to vector<1x128xi1>
    %419 = vector.broadcast %418 : vector<1x128xi1> to vector<8x128xi1>
    %420 = vector.shape_cast %415 : vector<8x1xi32> to vector<8x1xi32>
    %421 = vector.broadcast %420 : vector<8x1xi32> to vector<8x128xi32>
    %422 = arith.select %419, %421, %360 : vector<8x128xi1>, vector<8x128xi32>
    %c24 = arith.constant 24 : index
    %c0_127 = arith.constant 0 : index
    %423 = vector.load %arg1[%c24, %c0_127] : memref<64x1xf32, #tpu.memory_space<vmem>>, vector<8x1xf32>
    %c24_128 = arith.constant 24 : index
    %c0_129 = arith.constant 0 : index
    %424 = vector.load %arg0[%c24_128, %c0_129] : memref<64x128xf32, #tpu.memory_space<vmem>>, vector<8x128xf32>
    %cst_130 = arith.constant 5.000000e-01 : f32
    %425 = vector.broadcast %cst_130 : f32 to vector<8x1xf32>
    %426 = arith.cmpf ogt, %423, %425 : vector<8x1xf32>
    %427 = vector.shape_cast %426 : vector<8x1xi1> to vector<8x1xi1>
    %428 = vector.broadcast %427 : vector<8x1xi1> to vector<8x128xi1>
    %429 = arith.select %428, %409, %424 : vector<8x128xi1>, vector<8x128xf32>
    %430 = arith.truncf %429 : vector<8x128xf32> to vector<8x128xbf16>
    %c0_131 = arith.constant 0 : index
    %c0_132 = arith.constant 0 : index
    %431 = vector.load %arg6[%c0_131, %c0_132] : memref<128x512xbf16, #tpu.memory_space<vmem>>, vector<128x512xbf16>
    %cst_133 = arith.constant dense<0.000000e+00> : vector<8x512xf32>
    %432 = tpu.matmul %430, %431, %cst_133 {dimension_numbers = #tpu.dot_dimension_numbers<[1], [0], [0], [1], [0, 0, 1, 1], [], []>} : vector<8x128xbf16>, vector<128x512xbf16>, vector<8x512xf32> -> vector<8x512xf32>
    %433 = arith.truncf %396 : vector<8x128xf32> to vector<8x128xbf16>
    %c0_134 = arith.constant 0 : index
    %c0_135 = arith.constant 0 : index
    %434 = vector.load %arg7[%c0_134, %c0_135] : memref<128x512xbf16, #tpu.memory_space<vmem>>, vector<128x512xbf16>
    %cst_136 = arith.constant dense<0.000000e+00> : vector<8x512xf32>
    %435 = tpu.matmul %433, %434, %cst_136 {dimension_numbers = #tpu.dot_dimension_numbers<[1], [0], [0], [1], [0, 0, 1, 1], [], []>} : vector<8x128xbf16>, vector<128x512xbf16>, vector<8x512xf32> -> vector<8x512xf32>
    %436 = arith.addf %432, %435 : vector<8x512xf32>
    %437 = vector.broadcast %11 : vector<1x512xf32> to vector<8x512xf32>
    %438 = arith.addf %436, %437 : vector<8x512xf32>
    %439 = vector.broadcast %9 : vector<1x512xf32> to vector<8x512xf32>
    %440 = arith.mulf %438, %439 : vector<8x512xf32>
    %441 = arith.negf %440 : vector<8x512xf32>
    %442 = math.exp %441 : vector<8x512xf32>
    %cst_137 = arith.constant 1.000000e+00 : f32
    %443 = vector.broadcast %cst_137 : f32 to vector<8x512xf32>
    %444 = arith.addf %443, %442 : vector<8x512xf32>
    %445 = arith.divf %443, %444 : vector<8x512xf32>
    %446 = vector.extract_strided_slice %445 {offsets = [0, 0], sizes = [8, 128], strides = [1, 1]} : vector<8x512xf32> to vector<8x128xf32>
    %447 = vector.extract_strided_slice %445 {offsets = [0, 128], sizes = [8, 128], strides = [1, 1]} : vector<8x512xf32> to vector<8x128xf32>
    %448 = vector.extract_strided_slice %445 {offsets = [0, 256], sizes = [8, 128], strides = [1, 1]} : vector<8x512xf32> to vector<8x128xf32>
    %cst_138 = arith.constant 2.000000e+00 : f32
    %449 = vector.broadcast %cst_138 : f32 to vector<8x128xf32>
    %450 = arith.mulf %449, %448 : vector<8x128xf32>
    %cst_139 = arith.constant 1.000000e+00 : f32
    %451 = vector.broadcast %cst_139 : f32 to vector<8x128xf32>
    %452 = arith.subf %450, %451 : vector<8x128xf32>
    %453 = vector.extract_strided_slice %445 {offsets = [0, 384], sizes = [8, 128], strides = [1, 1]} : vector<8x512xf32> to vector<8x128xf32>
    %454 = arith.mulf %447, %394 : vector<8x128xf32>
    %455 = arith.mulf %446, %452 : vector<8x128xf32>
    %456 = arith.addf %454, %455 : vector<8x128xf32>
    %457 = math.tanh %456 : vector<8x128xf32>
    %458 = arith.mulf %453, %457 : vector<8x128xf32>
    %459 = arith.truncf %458 : vector<8x128xf32> to vector<8x128xbf16>
    %c0_140 = arith.constant 0 : index
    %c0_141 = arith.constant 0 : index
    %460 = vector.load %arg9[%c0_140, %c0_141] : memref<128x128xbf16, #tpu.memory_space<vmem>>, vector<128x128xbf16>
    %cst_142 = arith.constant dense<0.000000e+00> : vector<8x128xf32>
    %461 = tpu.matmul %459, %460, %cst_142 {dimension_numbers = #tpu.dot_dimension_numbers<[1], [0], [0], [1], [0, 0, 1, 1], [], []>} : vector<8x128xbf16>, vector<128x128xbf16>, vector<8x128xf32> -> vector<8x128xf32>
    %462 = vector.broadcast %12 : vector<1x128xf32> to vector<8x128xf32>
    %463 = arith.addf %461, %462 : vector<8x128xf32>
    %c24_143 = arith.constant 24 : index
    %c0_144 = arith.constant 0 : index
    %464 = vector.load %arg2[%c24_143, %c0_144] : memref<64x128xf32, #tpu.memory_space<vmem>>, vector<8x128xf32>
    %465 = arith.addf %463, %464 : vector<8x128xf32>
    %cst_145 = arith.constant dense<0xFF800000> : vector<8xf32>
    %466 = vector.multi_reduction <maximumf>, %465, %cst_145 [1] : vector<8x128xf32> to vector<8xf32>
    %467 = vector.shape_cast %466 : vector<8xf32> to vector<8x1xf32>
    %468 = vector.broadcast %467 : vector<8x1xf32> to vector<8x128xf32>
    %469 = arith.cmpf oge, %465, %468 : vector<8x128xf32>
    %470 = arith.extui %469 : vector<8x128xi1> to vector<8x128xi32>
    %471 = arith.sitofp %470 : vector<8x128xi32> to vector<8x128xf32>
    %c128_i32_146 = arith.constant 128 : i32
    %472 = vector.shape_cast %0 : vector<1x128xi32> to vector<1x128xi32>
    %473 = vector.broadcast %472 : vector<1x128xi32> to vector<8x128xi32>
    %474 = vector.broadcast %c128_i32_146 : i32 to vector<8x128xi32>
    %475 = arith.select %469, %473, %474 : vector<8x128xi1>, vector<8x128xi32>
    %cst_147 = arith.constant dense<2147483647> : vector<8xi32>
    %476 = vector.multi_reduction <minsi>, %475, %cst_147 [1] : vector<8x128xi32> to vector<8xi32>
    %477 = vector.shape_cast %476 : vector<8xi32> to vector<8x1xi32>
    %c3_i32 = arith.constant 3 : i32
    %478 = vector.broadcast %c3_i32 : i32 to vector<1x128xi32>
    %479 = arith.cmpi eq, %0, %478 : vector<1x128xi32>
    %480 = vector.shape_cast %479 : vector<1x128xi1> to vector<1x128xi1>
    %481 = vector.broadcast %480 : vector<1x128xi1> to vector<8x128xi1>
    %482 = vector.shape_cast %477 : vector<8x1xi32> to vector<8x1xi32>
    %483 = vector.broadcast %482 : vector<8x1xi32> to vector<8x128xi32>
    %484 = arith.select %481, %483, %422 : vector<8x128xi1>, vector<8x128xi32>
    %c32 = arith.constant 32 : index
    %c0_148 = arith.constant 0 : index
    %485 = vector.load %arg1[%c32, %c0_148] : memref<64x1xf32, #tpu.memory_space<vmem>>, vector<8x1xf32>
    %c32_149 = arith.constant 32 : index
    %c0_150 = arith.constant 0 : index
    %486 = vector.load %arg0[%c32_149, %c0_150] : memref<64x128xf32, #tpu.memory_space<vmem>>, vector<8x128xf32>
    %cst_151 = arith.constant 5.000000e-01 : f32
    %487 = vector.broadcast %cst_151 : f32 to vector<8x1xf32>
    %488 = arith.cmpf ogt, %485, %487 : vector<8x1xf32>
    %489 = vector.shape_cast %488 : vector<8x1xi1> to vector<8x1xi1>
    %490 = vector.broadcast %489 : vector<8x1xi1> to vector<8x128xi1>
    %491 = arith.select %490, %471, %486 : vector<8x128xi1>, vector<8x128xf32>
    %492 = arith.truncf %491 : vector<8x128xf32> to vector<8x128xbf16>
    %c0_152 = arith.constant 0 : index
    %c0_153 = arith.constant 0 : index
    %493 = vector.load %arg6[%c0_152, %c0_153] : memref<128x512xbf16, #tpu.memory_space<vmem>>, vector<128x512xbf16>
    %cst_154 = arith.constant dense<0.000000e+00> : vector<8x512xf32>
    %494 = tpu.matmul %492, %493, %cst_154 {dimension_numbers = #tpu.dot_dimension_numbers<[1], [0], [0], [1], [0, 0, 1, 1], [], []>} : vector<8x128xbf16>, vector<128x512xbf16>, vector<8x512xf32> -> vector<8x512xf32>
    %495 = arith.truncf %458 : vector<8x128xf32> to vector<8x128xbf16>
    %c0_155 = arith.constant 0 : index
    %c0_156 = arith.constant 0 : index
    %496 = vector.load %arg7[%c0_155, %c0_156] : memref<128x512xbf16, #tpu.memory_space<vmem>>, vector<128x512xbf16>
    %cst_157 = arith.constant dense<0.000000e+00> : vector<8x512xf32>
    %497 = tpu.matmul %495, %496, %cst_157 {dimension_numbers = #tpu.dot_dimension_numbers<[1], [0], [0], [1], [0, 0, 1, 1], [], []>} : vector<8x128xbf16>, vector<128x512xbf16>, vector<8x512xf32> -> vector<8x512xf32>
    %498 = arith.addf %494, %497 : vector<8x512xf32>
    %499 = vector.broadcast %11 : vector<1x512xf32> to vector<8x512xf32>
    %500 = arith.addf %498, %499 : vector<8x512xf32>
    %501 = vector.broadcast %9 : vector<1x512xf32> to vector<8x512xf32>
    %502 = arith.mulf %500, %501 : vector<8x512xf32>
    %503 = arith.negf %502 : vector<8x512xf32>
    %504 = math.exp %503 : vector<8x512xf32>
    %cst_158 = arith.constant 1.000000e+00 : f32
    %505 = vector.broadcast %cst_158 : f32 to vector<8x512xf32>
    %506 = arith.addf %505, %504 : vector<8x512xf32>
    %507 = arith.divf %505, %506 : vector<8x512xf32>
    %508 = vector.extract_strided_slice %507 {offsets = [0, 0], sizes = [8, 128], strides = [1, 1]} : vector<8x512xf32> to vector<8x128xf32>
    %509 = vector.extract_strided_slice %507 {offsets = [0, 128], sizes = [8, 128], strides = [1, 1]} : vector<8x512xf32> to vector<8x128xf32>
    %510 = vector.extract_strided_slice %507 {offsets = [0, 256], sizes = [8, 128], strides = [1, 1]} : vector<8x512xf32> to vector<8x128xf32>
    %cst_159 = arith.constant 2.000000e+00 : f32
    %511 = vector.broadcast %cst_159 : f32 to vector<8x128xf32>
    %512 = arith.mulf %511, %510 : vector<8x128xf32>
    %cst_160 = arith.constant 1.000000e+00 : f32
    %513 = vector.broadcast %cst_160 : f32 to vector<8x128xf32>
    %514 = arith.subf %512, %513 : vector<8x128xf32>
    %515 = vector.extract_strided_slice %507 {offsets = [0, 384], sizes = [8, 128], strides = [1, 1]} : vector<8x512xf32> to vector<8x128xf32>
    %516 = arith.mulf %509, %456 : vector<8x128xf32>
    %517 = arith.mulf %508, %514 : vector<8x128xf32>
    %518 = arith.addf %516, %517 : vector<8x128xf32>
    %519 = math.tanh %518 : vector<8x128xf32>
    %520 = arith.mulf %515, %519 : vector<8x128xf32>
    %521 = arith.truncf %520 : vector<8x128xf32> to vector<8x128xbf16>
    %c0_161 = arith.constant 0 : index
    %c0_162 = arith.constant 0 : index
    %522 = vector.load %arg9[%c0_161, %c0_162] : memref<128x128xbf16, #tpu.memory_space<vmem>>, vector<128x128xbf16>
    %cst_163 = arith.constant dense<0.000000e+00> : vector<8x128xf32>
    %523 = tpu.matmul %521, %522, %cst_163 {dimension_numbers = #tpu.dot_dimension_numbers<[1], [0], [0], [1], [0, 0, 1, 1], [], []>} : vector<8x128xbf16>, vector<128x128xbf16>, vector<8x128xf32> -> vector<8x128xf32>
    %524 = vector.broadcast %12 : vector<1x128xf32> to vector<8x128xf32>
    %525 = arith.addf %523, %524 : vector<8x128xf32>
    %c32_164 = arith.constant 32 : index
    %c0_165 = arith.constant 0 : index
    %526 = vector.load %arg2[%c32_164, %c0_165] : memref<64x128xf32, #tpu.memory_space<vmem>>, vector<8x128xf32>
    %527 = arith.addf %525, %526 : vector<8x128xf32>
    %cst_166 = arith.constant dense<0xFF800000> : vector<8xf32>
    %528 = vector.multi_reduction <maximumf>, %527, %cst_166 [1] : vector<8x128xf32> to vector<8xf32>
    %529 = vector.shape_cast %528 : vector<8xf32> to vector<8x1xf32>
    %530 = vector.broadcast %529 : vector<8x1xf32> to vector<8x128xf32>
    %531 = arith.cmpf oge, %527, %530 : vector<8x128xf32>
    %532 = arith.extui %531 : vector<8x128xi1> to vector<8x128xi32>
    %533 = arith.sitofp %532 : vector<8x128xi32> to vector<8x128xf32>
    %c128_i32_167 = arith.constant 128 : i32
    %534 = vector.shape_cast %0 : vector<1x128xi32> to vector<1x128xi32>
    %535 = vector.broadcast %534 : vector<1x128xi32> to vector<8x128xi32>
    %536 = vector.broadcast %c128_i32_167 : i32 to vector<8x128xi32>
    %537 = arith.select %531, %535, %536 : vector<8x128xi1>, vector<8x128xi32>
    %cst_168 = arith.constant dense<2147483647> : vector<8xi32>
    %538 = vector.multi_reduction <minsi>, %537, %cst_168 [1] : vector<8x128xi32> to vector<8xi32>
    %539 = vector.shape_cast %538 : vector<8xi32> to vector<8x1xi32>
    %c4_i32 = arith.constant 4 : i32
    %540 = vector.broadcast %c4_i32 : i32 to vector<1x128xi32>
    %541 = arith.cmpi eq, %0, %540 : vector<1x128xi32>
    %542 = vector.shape_cast %541 : vector<1x128xi1> to vector<1x128xi1>
    %543 = vector.broadcast %542 : vector<1x128xi1> to vector<8x128xi1>
    %544 = vector.shape_cast %539 : vector<8x1xi32> to vector<8x1xi32>
    %545 = vector.broadcast %544 : vector<8x1xi32> to vector<8x128xi32>
    %546 = arith.select %543, %545, %484 : vector<8x128xi1>, vector<8x128xi32>
    %c40 = arith.constant 40 : index
    %c0_169 = arith.constant 0 : index
    %547 = vector.load %arg1[%c40, %c0_169] : memref<64x1xf32, #tpu.memory_space<vmem>>, vector<8x1xf32>
    %c40_170 = arith.constant 40 : index
    %c0_171 = arith.constant 0 : index
    %548 = vector.load %arg0[%c40_170, %c0_171] : memref<64x128xf32, #tpu.memory_space<vmem>>, vector<8x128xf32>
    %cst_172 = arith.constant 5.000000e-01 : f32
    %549 = vector.broadcast %cst_172 : f32 to vector<8x1xf32>
    %550 = arith.cmpf ogt, %547, %549 : vector<8x1xf32>
    %551 = vector.shape_cast %550 : vector<8x1xi1> to vector<8x1xi1>
    %552 = vector.broadcast %551 : vector<8x1xi1> to vector<8x128xi1>
    %553 = arith.select %552, %533, %548 : vector<8x128xi1>, vector<8x128xf32>
    %554 = arith.truncf %553 : vector<8x128xf32> to vector<8x128xbf16>
    %c0_173 = arith.constant 0 : index
    %c0_174 = arith.constant 0 : index
    %555 = vector.load %arg6[%c0_173, %c0_174] : memref<128x512xbf16, #tpu.memory_space<vmem>>, vector<128x512xbf16>
    %cst_175 = arith.constant dense<0.000000e+00> : vector<8x512xf32>
    %556 = tpu.matmul %554, %555, %cst_175 {dimension_numbers = #tpu.dot_dimension_numbers<[1], [0], [0], [1], [0, 0, 1, 1], [], []>} : vector<8x128xbf16>, vector<128x512xbf16>, vector<8x512xf32> -> vector<8x512xf32>
    %557 = arith.truncf %520 : vector<8x128xf32> to vector<8x128xbf16>
    %c0_176 = arith.constant 0 : index
    %c0_177 = arith.constant 0 : index
    %558 = vector.load %arg7[%c0_176, %c0_177] : memref<128x512xbf16, #tpu.memory_space<vmem>>, vector<128x512xbf16>
    %cst_178 = arith.constant dense<0.000000e+00> : vector<8x512xf32>
    %559 = tpu.matmul %557, %558, %cst_178 {dimension_numbers = #tpu.dot_dimension_numbers<[1], [0], [0], [1], [0, 0, 1, 1], [], []>} : vector<8x128xbf16>, vector<128x512xbf16>, vector<8x512xf32> -> vector<8x512xf32>
    %560 = arith.addf %556, %559 : vector<8x512xf32>
    %561 = vector.broadcast %11 : vector<1x512xf32> to vector<8x512xf32>
    %562 = arith.addf %560, %561 : vector<8x512xf32>
    %563 = vector.broadcast %9 : vector<1x512xf32> to vector<8x512xf32>
    %564 = arith.mulf %562, %563 : vector<8x512xf32>
    %565 = arith.negf %564 : vector<8x512xf32>
    %566 = math.exp %565 : vector<8x512xf32>
    %cst_179 = arith.constant 1.000000e+00 : f32
    %567 = vector.broadcast %cst_179 : f32 to vector<8x512xf32>
    %568 = arith.addf %567, %566 : vector<8x512xf32>
    %569 = arith.divf %567, %568 : vector<8x512xf32>
    %570 = vector.extract_strided_slice %569 {offsets = [0, 0], sizes = [8, 128], strides = [1, 1]} : vector<8x512xf32> to vector<8x128xf32>
    %571 = vector.extract_strided_slice %569 {offsets = [0, 128], sizes = [8, 128], strides = [1, 1]} : vector<8x512xf32> to vector<8x128xf32>
    %572 = vector.extract_strided_slice %569 {offsets = [0, 256], sizes = [8, 128], strides = [1, 1]} : vector<8x512xf32> to vector<8x128xf32>
    %cst_180 = arith.constant 2.000000e+00 : f32
    %573 = vector.broadcast %cst_180 : f32 to vector<8x128xf32>
    %574 = arith.mulf %573, %572 : vector<8x128xf32>
    %cst_181 = arith.constant 1.000000e+00 : f32
    %575 = vector.broadcast %cst_181 : f32 to vector<8x128xf32>
    %576 = arith.subf %574, %575 : vector<8x128xf32>
    %577 = vector.extract_strided_slice %569 {offsets = [0, 384], sizes = [8, 128], strides = [1, 1]} : vector<8x512xf32> to vector<8x128xf32>
    %578 = arith.mulf %571, %518 : vector<8x128xf32>
    %579 = arith.mulf %570, %576 : vector<8x128xf32>
    %580 = arith.addf %578, %579 : vector<8x128xf32>
    %581 = math.tanh %580 : vector<8x128xf32>
    %582 = arith.mulf %577, %581 : vector<8x128xf32>
    %583 = arith.truncf %582 : vector<8x128xf32> to vector<8x128xbf16>
    %c0_182 = arith.constant 0 : index
    %c0_183 = arith.constant 0 : index
    %584 = vector.load %arg9[%c0_182, %c0_183] : memref<128x128xbf16, #tpu.memory_space<vmem>>, vector<128x128xbf16>
    %cst_184 = arith.constant dense<0.000000e+00> : vector<8x128xf32>
    %585 = tpu.matmul %583, %584, %cst_184 {dimension_numbers = #tpu.dot_dimension_numbers<[1], [0], [0], [1], [0, 0, 1, 1], [], []>} : vector<8x128xbf16>, vector<128x128xbf16>, vector<8x128xf32> -> vector<8x128xf32>
    %586 = vector.broadcast %12 : vector<1x128xf32> to vector<8x128xf32>
    %587 = arith.addf %585, %586 : vector<8x128xf32>
    %c40_185 = arith.constant 40 : index
    %c0_186 = arith.constant 0 : index
    %588 = vector.load %arg2[%c40_185, %c0_186] : memref<64x128xf32, #tpu.memory_space<vmem>>, vector<8x128xf32>
    %589 = arith.addf %587, %588 : vector<8x128xf32>
    %cst_187 = arith.constant dense<0xFF800000> : vector<8xf32>
    %590 = vector.multi_reduction <maximumf>, %589, %cst_187 [1] : vector<8x128xf32> to vector<8xf32>
    %591 = vector.shape_cast %590 : vector<8xf32> to vector<8x1xf32>
    %592 = vector.broadcast %591 : vector<8x1xf32> to vector<8x128xf32>
    %593 = arith.cmpf oge, %589, %592 : vector<8x128xf32>
    %594 = arith.extui %593 : vector<8x128xi1> to vector<8x128xi32>
    %595 = arith.sitofp %594 : vector<8x128xi32> to vector<8x128xf32>
    %c128_i32_188 = arith.constant 128 : i32
    %596 = vector.shape_cast %0 : vector<1x128xi32> to vector<1x128xi32>
    %597 = vector.broadcast %596 : vector<1x128xi32> to vector<8x128xi32>
    %598 = vector.broadcast %c128_i32_188 : i32 to vector<8x128xi32>
    %599 = arith.select %593, %597, %598 : vector<8x128xi1>, vector<8x128xi32>
    %cst_189 = arith.constant dense<2147483647> : vector<8xi32>
    %600 = vector.multi_reduction <minsi>, %599, %cst_189 [1] : vector<8x128xi32> to vector<8xi32>
    %601 = vector.shape_cast %600 : vector<8xi32> to vector<8x1xi32>
    %c5_i32 = arith.constant 5 : i32
    %602 = vector.broadcast %c5_i32 : i32 to vector<1x128xi32>
    %603 = arith.cmpi eq, %0, %602 : vector<1x128xi32>
    %604 = vector.shape_cast %603 : vector<1x128xi1> to vector<1x128xi1>
    %605 = vector.broadcast %604 : vector<1x128xi1> to vector<8x128xi1>
    %606 = vector.shape_cast %601 : vector<8x1xi32> to vector<8x1xi32>
    %607 = vector.broadcast %606 : vector<8x1xi32> to vector<8x128xi32>
    %608 = arith.select %605, %607, %546 : vector<8x128xi1>, vector<8x128xi32>
    %c48 = arith.constant 48 : index
    %c0_190 = arith.constant 0 : index
    %609 = vector.load %arg1[%c48, %c0_190] : memref<64x1xf32, #tpu.memory_space<vmem>>, vector<8x1xf32>
    %c48_191 = arith.constant 48 : index
    %c0_192 = arith.constant 0 : index
    %610 = vector.load %arg0[%c48_191, %c0_192] : memref<64x128xf32, #tpu.memory_space<vmem>>, vector<8x128xf32>
    %cst_193 = arith.constant 5.000000e-01 : f32
    %611 = vector.broadcast %cst_193 : f32 to vector<8x1xf32>
    %612 = arith.cmpf ogt, %609, %611 : vector<8x1xf32>
    %613 = vector.shape_cast %612 : vector<8x1xi1> to vector<8x1xi1>
    %614 = vector.broadcast %613 : vector<8x1xi1> to vector<8x128xi1>
    %615 = arith.select %614, %595, %610 : vector<8x128xi1>, vector<8x128xf32>
    %616 = arith.truncf %615 : vector<8x128xf32> to vector<8x128xbf16>
    %c0_194 = arith.constant 0 : index
    %c0_195 = arith.constant 0 : index
    %617 = vector.load %arg6[%c0_194, %c0_195] : memref<128x512xbf16, #tpu.memory_space<vmem>>, vector<128x512xbf16>
    %cst_196 = arith.constant dense<0.000000e+00> : vector<8x512xf32>
    %618 = tpu.matmul %616, %617, %cst_196 {dimension_numbers = #tpu.dot_dimension_numbers<[1], [0], [0], [1], [0, 0, 1, 1], [], []>} : vector<8x128xbf16>, vector<128x512xbf16>, vector<8x512xf32> -> vector<8x512xf32>
    %619 = arith.truncf %582 : vector<8x128xf32> to vector<8x128xbf16>
    %c0_197 = arith.constant 0 : index
    %c0_198 = arith.constant 0 : index
    %620 = vector.load %arg7[%c0_197, %c0_198] : memref<128x512xbf16, #tpu.memory_space<vmem>>, vector<128x512xbf16>
    %cst_199 = arith.constant dense<0.000000e+00> : vector<8x512xf32>
    %621 = tpu.matmul %619, %620, %cst_199 {dimension_numbers = #tpu.dot_dimension_numbers<[1], [0], [0], [1], [0, 0, 1, 1], [], []>} : vector<8x128xbf16>, vector<128x512xbf16>, vector<8x512xf32> -> vector<8x512xf32>
    %622 = arith.addf %618, %621 : vector<8x512xf32>
    %623 = vector.broadcast %11 : vector<1x512xf32> to vector<8x512xf32>
    %624 = arith.addf %622, %623 : vector<8x512xf32>
    %625 = vector.broadcast %9 : vector<1x512xf32> to vector<8x512xf32>
    %626 = arith.mulf %624, %625 : vector<8x512xf32>
    %627 = arith.negf %626 : vector<8x512xf32>
    %628 = math.exp %627 : vector<8x512xf32>
    %cst_200 = arith.constant 1.000000e+00 : f32
    %629 = vector.broadcast %cst_200 : f32 to vector<8x512xf32>
    %630 = arith.addf %629, %628 : vector<8x512xf32>
    %631 = arith.divf %629, %630 : vector<8x512xf32>
    %632 = vector.extract_strided_slice %631 {offsets = [0, 0], sizes = [8, 128], strides = [1, 1]} : vector<8x512xf32> to vector<8x128xf32>
    %633 = vector.extract_strided_slice %631 {offsets = [0, 128], sizes = [8, 128], strides = [1, 1]} : vector<8x512xf32> to vector<8x128xf32>
    %634 = vector.extract_strided_slice %631 {offsets = [0, 256], sizes = [8, 128], strides = [1, 1]} : vector<8x512xf32> to vector<8x128xf32>
    %cst_201 = arith.constant 2.000000e+00 : f32
    %635 = vector.broadcast %cst_201 : f32 to vector<8x128xf32>
    %636 = arith.mulf %635, %634 : vector<8x128xf32>
    %cst_202 = arith.constant 1.000000e+00 : f32
    %637 = vector.broadcast %cst_202 : f32 to vector<8x128xf32>
    %638 = arith.subf %636, %637 : vector<8x128xf32>
    %639 = vector.extract_strided_slice %631 {offsets = [0, 384], sizes = [8, 128], strides = [1, 1]} : vector<8x512xf32> to vector<8x128xf32>
    %640 = arith.mulf %633, %580 : vector<8x128xf32>
    %641 = arith.mulf %632, %638 : vector<8x128xf32>
    %642 = arith.addf %640, %641 : vector<8x128xf32>
    %643 = math.tanh %642 : vector<8x128xf32>
    %644 = arith.mulf %639, %643 : vector<8x128xf32>
    %645 = arith.truncf %644 : vector<8x128xf32> to vector<8x128xbf16>
    %c0_203 = arith.constant 0 : index
    %c0_204 = arith.constant 0 : index
    %646 = vector.load %arg9[%c0_203, %c0_204] : memref<128x128xbf16, #tpu.memory_space<vmem>>, vector<128x128xbf16>
    %cst_205 = arith.constant dense<0.000000e+00> : vector<8x128xf32>
    %647 = tpu.matmul %645, %646, %cst_205 {dimension_numbers = #tpu.dot_dimension_numbers<[1], [0], [0], [1], [0, 0, 1, 1], [], []>} : vector<8x128xbf16>, vector<128x128xbf16>, vector<8x128xf32> -> vector<8x128xf32>
    %648 = vector.broadcast %12 : vector<1x128xf32> to vector<8x128xf32>
    %649 = arith.addf %647, %648 : vector<8x128xf32>
    %c48_206 = arith.constant 48 : index
    %c0_207 = arith.constant 0 : index
    %650 = vector.load %arg2[%c48_206, %c0_207] : memref<64x128xf32, #tpu.memory_space<vmem>>, vector<8x128xf32>
    %651 = arith.addf %649, %650 : vector<8x128xf32>
    %cst_208 = arith.constant dense<0xFF800000> : vector<8xf32>
    %652 = vector.multi_reduction <maximumf>, %651, %cst_208 [1] : vector<8x128xf32> to vector<8xf32>
    %653 = vector.shape_cast %652 : vector<8xf32> to vector<8x1xf32>
    %654 = vector.broadcast %653 : vector<8x1xf32> to vector<8x128xf32>
    %655 = arith.cmpf oge, %651, %654 : vector<8x128xf32>
    %656 = arith.extui %655 : vector<8x128xi1> to vector<8x128xi32>
    %657 = arith.sitofp %656 : vector<8x128xi32> to vector<8x128xf32>
    %c128_i32_209 = arith.constant 128 : i32
    %658 = vector.shape_cast %0 : vector<1x128xi32> to vector<1x128xi32>
    %659 = vector.broadcast %658 : vector<1x128xi32> to vector<8x128xi32>
    %660 = vector.broadcast %c128_i32_209 : i32 to vector<8x128xi32>
    %661 = arith.select %655, %659, %660 : vector<8x128xi1>, vector<8x128xi32>
    %cst_210 = arith.constant dense<2147483647> : vector<8xi32>
    %662 = vector.multi_reduction <minsi>, %661, %cst_210 [1] : vector<8x128xi32> to vector<8xi32>
    %663 = vector.shape_cast %662 : vector<8xi32> to vector<8x1xi32>
    %c6_i32 = arith.constant 6 : i32
    %664 = vector.broadcast %c6_i32 : i32 to vector<1x128xi32>
    %665 = arith.cmpi eq, %0, %664 : vector<1x128xi32>
    %666 = vector.shape_cast %665 : vector<1x128xi1> to vector<1x128xi1>
    %667 = vector.broadcast %666 : vector<1x128xi1> to vector<8x128xi1>
    %668 = vector.shape_cast %663 : vector<8x1xi32> to vector<8x1xi32>
    %669 = vector.broadcast %668 : vector<8x1xi32> to vector<8x128xi32>
    %670 = arith.select %667, %669, %608 : vector<8x128xi1>, vector<8x128xi32>
    %c56 = arith.constant 56 : index
    %c0_211 = arith.constant 0 : index
    %671 = vector.load %arg1[%c56, %c0_211] : memref<64x1xf32, #tpu.memory_space<vmem>>, vector<8x1xf32>
    %c56_212 = arith.constant 56 : index
    %c0_213 = arith.constant 0 : index
    %672 = vector.load %arg0[%c56_212, %c0_213] : memref<64x128xf32, #tpu.memory_space<vmem>>, vector<8x128xf32>
    %cst_214 = arith.constant 5.000000e-01 : f32
    %673 = vector.broadcast %cst_214 : f32 to vector<8x1xf32>
    %674 = arith.cmpf ogt, %671, %673 : vector<8x1xf32>
    %675 = vector.shape_cast %674 : vector<8x1xi1> to vector<8x1xi1>
    %676 = vector.broadcast %675 : vector<8x1xi1> to vector<8x128xi1>
    %677 = arith.select %676, %657, %672 : vector<8x128xi1>, vector<8x128xf32>
    %678 = arith.truncf %677 : vector<8x128xf32> to vector<8x128xbf16>
    %c0_215 = arith.constant 0 : index
    %c0_216 = arith.constant 0 : index
    %679 = vector.load %arg6[%c0_215, %c0_216] : memref<128x512xbf16, #tpu.memory_space<vmem>>, vector<128x512xbf16>
    %cst_217 = arith.constant dense<0.000000e+00> : vector<8x512xf32>
    %680 = tpu.matmul %678, %679, %cst_217 {dimension_numbers = #tpu.dot_dimension_numbers<[1], [0], [0], [1], [0, 0, 1, 1], [], []>} : vector<8x128xbf16>, vector<128x512xbf16>, vector<8x512xf32> -> vector<8x512xf32>
    %681 = arith.truncf %644 : vector<8x128xf32> to vector<8x128xbf16>
    %c0_218 = arith.constant 0 : index
    %c0_219 = arith.constant 0 : index
    %682 = vector.load %arg7[%c0_218, %c0_219] : memref<128x512xbf16, #tpu.memory_space<vmem>>, vector<128x512xbf16>
    %cst_220 = arith.constant dense<0.000000e+00> : vector<8x512xf32>
    %683 = tpu.matmul %681, %682, %cst_220 {dimension_numbers = #tpu.dot_dimension_numbers<[1], [0], [0], [1], [0, 0, 1, 1], [], []>} : vector<8x128xbf16>, vector<128x512xbf16>, vector<8x512xf32> -> vector<8x512xf32>
    %684 = arith.addf %680, %683 : vector<8x512xf32>
    %685 = vector.broadcast %11 : vector<1x512xf32> to vector<8x512xf32>
    %686 = arith.addf %684, %685 : vector<8x512xf32>
    %687 = vector.broadcast %9 : vector<1x512xf32> to vector<8x512xf32>
    %688 = arith.mulf %686, %687 : vector<8x512xf32>
    %689 = arith.negf %688 : vector<8x512xf32>
    %690 = math.exp %689 : vector<8x512xf32>
    %cst_221 = arith.constant 1.000000e+00 : f32
    %691 = vector.broadcast %cst_221 : f32 to vector<8x512xf32>
    %692 = arith.addf %691, %690 : vector<8x512xf32>
    %693 = arith.divf %691, %692 : vector<8x512xf32>
    %694 = vector.extract_strided_slice %693 {offsets = [0, 0], sizes = [8, 128], strides = [1, 1]} : vector<8x512xf32> to vector<8x128xf32>
    %695 = vector.extract_strided_slice %693 {offsets = [0, 128], sizes = [8, 128], strides = [1, 1]} : vector<8x512xf32> to vector<8x128xf32>
    %696 = vector.extract_strided_slice %693 {offsets = [0, 256], sizes = [8, 128], strides = [1, 1]} : vector<8x512xf32> to vector<8x128xf32>
    %cst_222 = arith.constant 2.000000e+00 : f32
    %697 = vector.broadcast %cst_222 : f32 to vector<8x128xf32>
    %698 = arith.mulf %697, %696 : vector<8x128xf32>
    %cst_223 = arith.constant 1.000000e+00 : f32
    %699 = vector.broadcast %cst_223 : f32 to vector<8x128xf32>
    %700 = arith.subf %698, %699 : vector<8x128xf32>
    %701 = vector.extract_strided_slice %693 {offsets = [0, 384], sizes = [8, 128], strides = [1, 1]} : vector<8x512xf32> to vector<8x128xf32>
    %702 = arith.mulf %695, %642 : vector<8x128xf32>
    %703 = arith.mulf %694, %700 : vector<8x128xf32>
    %704 = arith.addf %702, %703 : vector<8x128xf32>
    %705 = math.tanh %704 : vector<8x128xf32>
    %706 = arith.mulf %701, %705 : vector<8x128xf32>
    %707 = arith.truncf %706 : vector<8x128xf32> to vector<8x128xbf16>
    %c0_224 = arith.constant 0 : index
    %c0_225 = arith.constant 0 : index
    %708 = vector.load %arg9[%c0_224, %c0_225] : memref<128x128xbf16, #tpu.memory_space<vmem>>, vector<128x128xbf16>
    %cst_226 = arith.constant dense<0.000000e+00> : vector<8x128xf32>
    %709 = tpu.matmul %707, %708, %cst_226 {dimension_numbers = #tpu.dot_dimension_numbers<[1], [0], [0], [1], [0, 0, 1, 1], [], []>} : vector<8x128xbf16>, vector<128x128xbf16>, vector<8x128xf32> -> vector<8x128xf32>
    %710 = vector.broadcast %12 : vector<1x128xf32> to vector<8x128xf32>
    %711 = arith.addf %709, %710 : vector<8x128xf32>
    %c56_227 = arith.constant 56 : index
    %c0_228 = arith.constant 0 : index
    %712 = vector.load %arg2[%c56_227, %c0_228] : memref<64x128xf32, #tpu.memory_space<vmem>>, vector<8x128xf32>
    %713 = arith.addf %711, %712 : vector<8x128xf32>
    %cst_229 = arith.constant dense<0xFF800000> : vector<8xf32>
    %714 = vector.multi_reduction <maximumf>, %713, %cst_229 [1] : vector<8x128xf32> to vector<8xf32>
    %715 = vector.shape_cast %714 : vector<8xf32> to vector<8x1xf32>
    %716 = vector.broadcast %715 : vector<8x1xf32> to vector<8x128xf32>
    %717 = arith.cmpf oge, %713, %716 : vector<8x128xf32>
    %c128_i32_230 = arith.constant 128 : i32
    %718 = vector.shape_cast %0 : vector<1x128xi32> to vector<1x128xi32>
    %719 = vector.broadcast %718 : vector<1x128xi32> to vector<8x128xi32>
    %720 = vector.broadcast %c128_i32_230 : i32 to vector<8x128xi32>
    %721 = arith.select %717, %719, %720 : vector<8x128xi1>, vector<8x128xi32>
    %cst_231 = arith.constant dense<2147483647> : vector<8xi32>
    %722 = vector.multi_reduction <minsi>, %721, %cst_231 [1] : vector<8x128xi32> to vector<8xi32>
    %723 = vector.shape_cast %722 : vector<8xi32> to vector<8x1xi32>
    %c7_i32 = arith.constant 7 : i32
    %724 = vector.broadcast %c7_i32 : i32 to vector<1x128xi32>
    %725 = arith.cmpi eq, %0, %724 : vector<1x128xi32>
    %726 = vector.shape_cast %725 : vector<1x128xi1> to vector<1x128xi1>
    %727 = vector.broadcast %726 : vector<1x128xi1> to vector<8x128xi1>
    %728 = vector.shape_cast %723 : vector<8x1xi32> to vector<8x1xi32>
    %729 = vector.broadcast %728 : vector<8x1xi32> to vector<8x128xi32>
    %730 = arith.select %727, %729, %670 : vector<8x128xi1>, vector<8x128xi32>
    %c0_232 = arith.constant 0 : index
    %c0_233 = arith.constant 0 : index
    %731 = vector.load %arg11[%c0_232, %c0_233] : memref<8x128xi32, #tpu.memory_space<vmem>>, vector<8x128xi32>
    tpu.vector_store %arg11[%c0_232, %c0_233], %730 {strides = array<i32>} : memref<8x128xi32, #tpu.memory_space<vmem>>, vector<8x128xi32>,
    %c0_234 = arith.constant 0 : index
    %c0_235 = arith.constant 0 : index
    %732 = vector.load %arg12[%c0_234, %c0_235] : memref<8x128xf32, #tpu.memory_space<vmem>>, vector<8x128xf32>
    tpu.vector_store %arg12[%c0_234, %c0_235], %706 {strides = array<i32>} : memref<8x128xf32, #tpu.memory_space<vmem>>, vector<8x128xf32>,
    %c0_236 = arith.constant 0 : index
    %c0_237 = arith.constant 0 : index
    %733 = vector.load %arg13[%c0_236, %c0_237] : memref<8x128xf32, #tpu.memory_space<vmem>>, vector<8x128xf32>
    tpu.vector_store %arg13[%c0_236, %c0_237], %704 {strides = array<i32>} : memref<8x128xf32, #tpu.memory_space<vmem>>, vector<8x128xf32>,
    return
  }
}

</mosaic_0001>

<llo_original>
// kernel: generator_device.1
$region0: #{generator_device.1}
  #allocation0 [shape = 'u32[]', space=smem, size = 0x4, offset = 0x4, fixed_abs, tag = 'smem constant byte address 0x4 - core index']
  #allocation1 [shape = 'u32[144,128]{1,0:T(1,128)}', space=vmem, size = 0x12000, scoped, tag = 'internal scratch']
  %s0 = inlined_call_operand.vmem [shape: f32[64,128], index: 0, kind: input, shape index: {}]
  %s1 = inlined_call_operand.vmem [shape: f32[64,1], index: 1, kind: input, shape index: {}]
  %s2 = inlined_call_operand.vmem [shape: f32[64,128], index: 2, kind: input, shape index: {}]
  %s3 = inlined_call_operand.vmem [shape: bf16[128,512], index: 3, kind: input, shape index: {}]
  %s4 = inlined_call_operand.hbm [shape: bf16[128,512], index: 4, kind: input, shape index: {}]
  %s5 = inlined_call_operand.vmem [shape: f32[1,512], index: 5, kind: input, shape index: {}]
  %s6 = inlined_call_operand.hbm [shape: bf16[128,512], index: 6, kind: input, shape index: {}]
  %s7 = inlined_call_operand.hbm [shape: bf16[128,512], index: 7, kind: input, shape index: {}]
  %s8 = inlined_call_operand.vmem [shape: f32[1,512], index: 8, kind: input, shape index: {}]
  %s9 = inlined_call_operand.hbm [shape: bf16[128,128], index: 9, kind: input, shape index: {}]
  %s10 = inlined_call_operand.vmem [shape: f32[1,128], index: 10, kind: input, shape index: {}]
  %s11 = inlined_call_operand.hbm [shape: s32[8,128], index: 11, kind: output, shape index: {0}]
  %s12 = inlined_call_operand.hbm [shape: f32[8,128], index: 12, kind: output, shape index: {1}]
  %s13 = inlined_call_operand.hbm [shape: f32[8,128], index: 13, kind: output, shape index: {2}]
  %14 = xla_tuple %s11, %s12, %s13
  %s15 = sld [smem:[#allocation0]]
  $region86: #{generator_device.1} parent=0
    _
  %s17 = ssub.s32 1, %s15
  %s18 = scalar_select 0, %s17, %s15
  $region1: #{generator_device.1} parent=0
    #allocation2 [shape = 'u8[131072]{0}', space=vmem, size = 0x20000, scoped, tag = 'input window, operand 4, single buffered']
    #allocation3 [shape = 's32[1]{0}', space=sflag, size = 0x4, scoped, tag = 'scoped memory for generator_device.1']
    #allocation4 [shape = 's32[1]{0}', space=sflag, size = 0x4, scoped, tag = 'scoped memory for generator_device.1']
    #allocation5 [shape = 'u8[131072]{0}', space=vmem, size = 0x20000, scoped, tag = 'input window, operand 6, single buffered']
    #allocation6 [shape = 's32[1]{0}', space=sflag, size = 0x4, scoped, tag = 'scoped memory for generator_device.1']
    #allocation7 [shape = 'u8[131072]{0}', space=vmem, size = 0x20000, scoped, tag = 'input window, operand 7, single buffered']
    #allocation8 [shape = 'u8[32768]{0}', space=vmem, size = 0x8000, scoped, tag = 'input window, operand 9, single buffered']
    #allocation9 [shape = 's32[1]{0}', space=sflag, size = 0x4, scoped, tag = 'scoped memory for generator_device.1']
    #allocation10 [shape = 'u8[4096]{0}', space=vmem, size = 0x1000, scoped, tag = 'output window, operand 0, single buffered']
    #allocation11 [shape = 'u8[4096]{0}', space=vmem, size = 0x1000, scoped, tag = 'output window, operand 1, single buffered']
    #allocation12 [shape = 's32[1]{0}', space=sflag, size = 0x4, scoped, tag = 'scoped memory for generator_device.1']
    #allocation13 [shape = 'u8[4096]{0}', space=vmem, size = 0x1000, scoped, tag = 'output window, operand 2, single buffered']
    %19 = vsyncpa [#allocation3], 0
    %20 = vsyncpa [#allocation6], 0
    %21 = vsyncpa [#allocation9], 0
    %22 = vsyncpa [#allocation4], 0
    %23 = vsyncpa [#allocation12], 0
    // Predicated region
    $region2: #{generator_device.1} parent=1 // pred_check
      _
    $region3: #{generator_device.1} parent=1 // pred_check_branch
      %25 = sbr.rel (0) target = $region5
    $region4: #{generator_device.1} parent=1 // pred_region
      _
    $region5: #{generator_device.1} parent=1 // pred_fallthru
      _
    // Predicated region
    $region6: #{generator_device.1} parent=1 // pred_check
      _
    $region7: #{generator_device.1} parent=1 // pred_check_branch
      %27 = sbr.rel (0) target = $region9
    $region8: #{generator_device.1} parent=1 // pred_region
      _
    $region9: #{generator_device.1} parent=1 // pred_fallthru
      _
    // Predicated region
    $region10: #{generator_device.1} parent=1 // pred_check
      _
    $region11: #{generator_device.1} parent=1 // pred_check_branch
      %29 = sbr.rel (0) target = $region13
    $region12: #{generator_device.1} parent=1 // pred_region
      _
    $region13: #{generator_device.1} parent=1 // pred_fallthru
      _
    // Predicated region
    $region14: #{generator_device.1} parent=1 // pred_check
      _
    $region15: #{generator_device.1} parent=1 // pred_check_branch
      %31 = sbr.rel (0) target = $region17
    $region16: #{generator_device.1} parent=1 // pred_region
      _
    $region17: #{generator_device.1} parent=1 // pred_fallthru
      _
    // Predicated region
    $region18: #{generator_device.1} parent=1 // pred_check
      _
    $region19: #{generator_device.1} parent=1 // pred_check_branch
      %33 = sbr.rel (0) target = $region21
    $region20: #{generator_device.1} parent=1 // pred_region
      %s35 = ssub.s32 4096, 4096
      %36 = vsyncadd [#allocation3], %s35
      %s37 = sshll.u32 [#allocation2], 4
      %s38 = int_to_ptr.vmem [resolvable:$true] %s37
      %43 = dma.hbm_to_vmem [thread:$0]  %s4, 4096, %s38, [#allocation3], 256, 256, 16
    $region21: #{generator_device.1} parent=1 // pred_fallthru
      _
    // Predicated region
    $region22: #{generator_device.1} parent=1 // pred_check
      _
    $region23: #{generator_device.1} parent=1 // pred_check_branch
      %45 = sbr.rel (0) target = $region25
    $region24: #{generator_device.1} parent=1 // pred_region
      _
    $region25: #{generator_device.1} parent=1 // pred_fallthru
      _
    // Predicated region
    $region26: #{generator_device.1} parent=1 // pred_check
      _
    $region27: #{generator_device.1} parent=1 // pred_check_branch
      %47 = sbr.rel (0) target = $region29
    $region28: #{generator_device.1} parent=1 // pred_region
      %s49 = ssub.s32 4096, 4096
      %50 = vsyncadd [#allocation6], %s49
      %s51 = sshll.u32 [#allocation5], 4
      %s52 = int_to_ptr.vmem [resolvable:$true] %s51
      %57 = dma.hbm_to_vmem [thread:$0]  %s6, 4096, %s52, [#allocation6], 256, 256, 16
    $region29: #{generator_device.1} parent=1 // pred_fallthru
      _
    // Predicated region
    $region30: #{generator_device.1} parent=1 // pred_check
      _
    $region31: #{generator_device.1} parent=1 // pred_check_branch
      %59 = sbr.rel (0) target = $region33
    $region32: #{generator_device.1} parent=1 // pred_region
      %s61 = ssub.s32 4096, 4096
      %62 = vsyncadd [#allocation6], %s61
      %s63 = sshll.u32 [#allocation7], 4
      %s64 = int_to_ptr.vmem [resolvable:$true] %s63
      %69 = dma.hbm_to_vmem [thread:$0]  %s7, 4096, %s64, [#allocation6], 256, 256, 16
    $region33: #{generator_device.1} parent=1 // pred_fallthru
      _
    // Predicated region
    $region34: #{generator_device.1} parent=1 // pred_check
      _
    $region35: #{generator_device.1} parent=1 // pred_check_branch
      %71 = sbr.rel (0) target = $region37
    $region36: #{generator_device.1} parent=1 // pred_region
      _
    $region37: #{generator_device.1} parent=1 // pred_fallthru
      _
    // Predicated region
    $region38: #{generator_device.1} parent=1 // pred_check
      _
    $region39: #{generator_device.1} parent=1 // pred_check_branch
      %73 = sbr.rel (0) target = $region41
    $region40: #{generator_device.1} parent=1 // pred_region
      %s75 = ssub.s32 1024, 1024
      %76 = vsyncadd [#allocation9], %s75
      %s77 = sshll.u32 [#allocation8], 4
      %s78 = int_to_ptr.vmem [resolvable:$true] %s77
      %83 = dma.hbm_to_vmem [thread:$0]  %s9, 1024, %s78, [#allocation9], 64, 64, 4
    $region41: #{generator_device.1} parent=1 // pred_fallthru
      _
    // Predicated region
    $region42: #{generator_device.1} parent=1 // pred_check
      _
    $region43: #{generator_device.1} parent=1 // pred_check_branch
      %85 = sbr.rel (0) target = $region45
    $region44: #{generator_device.1} parent=1 // pred_region
      _
    $region45: #{generator_device.1} parent=1 // pred_fallthru
      _
    // Predicated region
    $region46: #{generator_device.1} parent=1 // pred_check
      _
    $region47: #{generator_device.1} parent=1 // pred_check_branch
      %87 = sbr.rel (0) target = $region49
    $region48: #{generator_device.1} parent=1 // pred_region
      %88 = dma.done [#allocation3], 4096
    $region49: #{generator_device.1} parent=1 // pred_fallthru
      _
    // Predicated region
    $region50: #{generator_device.1} parent=1 // pred_check
      _
    $region51: #{generator_device.1} parent=1 // pred_check_branch
      %90 = sbr.rel (0) target = $region53
    $region52: #{generator_device.1} parent=1 // pred_region
      %91 = dma.done [#allocation6], 4096
    $region53: #{generator_device.1} parent=1 // pred_fallthru
      _
    // Predicated region
    $region54: #{generator_device.1} parent=1 // pred_check
      _
    $region55: #{generator_device.1} parent=1 // pred_check_branch
      %93 = sbr.rel (0) target = $region57
    $region56: #{generator_device.1} parent=1 // pred_region
      %94 = dma.done [#allocation6], 4096
    $region57: #{generator_device.1} parent=1 // pred_fallthru
      _
    // Predicated region
    $region58: #{generator_device.1} parent=1 // pred_check
      _
    $region59: #{generator_device.1} parent=1 // pred_check_branch
      %96 = sbr.rel (0) target = $region61
    $region60: #{generator_device.1} parent=1 // pred_region
      %97 = dma.done [#allocation9], 1024
    $region61: #{generator_device.1} parent=1 // pred_fallthru
      _
    %v99 = vlaneseq
    %v100 = vand.u32 %v99, 127
    %v101 = vadd.s32 %v100, 128
    %v102 = vadd.s32 %v100, 256
    %v103 = vadd.s32 %v100, 384
    %vm104 = vcmp.ge.s32.totalorder %v100, 256
    %vm105 = vcmp.ge.s32.totalorder %v101, 256
    %vm106 = vcmp.ge.s32.totalorder %v102, 256
    %vm107 = vcmp.ge.s32.totalorder %v103, 256
    %vm108 = vcmp.lt.s32.totalorder %v100, 384
    %vm109 = vcmp.lt.s32.totalorder %v101, 384
    %vm110 = vcmp.lt.s32.totalorder %v102, 384
    %vm111 = vcmp.lt.s32.totalorder %v103, 384
    %vm112 = vmand %vm104, %vm108
    %vm113 = vmand %vm105, %vm109
    %vm114 = vmand %vm106, %vm110
    %vm115 = vmand %vm107, %vm111
    %v116 = vsel %vm112, 2.0, 1.0
    %v117 = vsel %vm113, 2.0, 1.0
    %v118 = vsel %vm114, 2.0, 1.0
    %v119 = vsel %vm115, 2.0, 1.0
    %v120 = vld [vmem:[%s5] sm:$0xf]
    %v121 = vld [vmem:[%s8] sm:$0xf]
    %v122 = vld [vmem:[%s10] sm:$0x1]
    %v123 = vld [vmem:[%s0] sm:$0xff]
    %v124 = vld [vmem:[%s0 + $0x8] sm:$0xff]
    %v125 = vld [vmem:[%s0 + $0x10] sm:$0xff]
    %v126 = vld [vmem:[%s0 + $0x18] sm:$0xff]
    %v127 = vld [vmem:[%s0 + $0x20] sm:$0xff]
    %v128 = vld [vmem:[%s0 + $0x28] sm:$0xff]
    %v129 = vld [vmem:[%s0 + $0x30] sm:$0xff]
    %v130 = vld [vmem:[%s0 + $0x38] sm:$0xff]
    %v131 = vpack.c.bf16 %v124, %v123
    %v132 = vpack.c.bf16 %v126, %v125
    %v133 = vpack.c.bf16 %v128, %v127
    %v134 = vpack.c.bf16 %v130, %v129
    %v135 = vld [vmem:[%s3] sm:$0xff]
    %v136 = vld [vmem:[%s3 + $0x8] sm:$0xff]
    %v137 = vld [vmem:[%s3 + $0x10] sm:$0xff]
    %v138 = vld [vmem:[%s3 + $0x18] sm:$0xff]
    %v139 = vld [vmem:[%s3 + $0x20] sm:$0xff]
    %v140 = vld [vmem:[%s3 + $0x28] sm:$0xff]
    %v141 = vld [vmem:[%s3 + $0x30] sm:$0xff]
    %v142 = vld [vmem:[%s3 + $0x38] sm:$0xff]
    %v143 = vld [vmem:[%s3 + $0x40] sm:$0xff]
    %v144 = vld [vmem:[%s3 + $0x48] sm:$0xff]
    %v145 = vld [vmem:[%s3 + $0x50] sm:$0xff]
    %v146 = vld [vmem:[%s3 + $0x58] sm:$0xff]
    %v147 = vld [vmem:[%s3 + $0x60] sm:$0xff]
    %v148 = vld [vmem:[%s3 + $0x68] sm:$0xff]
    %v149 = vld [vmem:[%s3 + $0x70] sm:$0xff]
    %v150 = vld [vmem:[%s3 + $0x78] sm:$0xff]
    %v151 = vld [vmem:[%s3 + $0x80] sm:$0xff]
    %v152 = vld [vmem:[%s3 + $0x88] sm:$0xff]
    %v153 = vld [vmem:[%s3 + $0x90] sm:$0xff]
    %v154 = vld [vmem:[%s3 + $0x98] sm:$0xff]
    %v155 = vld [vmem:[%s3 + $0xa0] sm:$0xff]
    %v156 = vld [vmem:[%s3 + $0xa8] sm:$0xff]
    %v157 = vld [vmem:[%s3 + $0xb0] sm:$0xff]
    %v158 = vld [vmem:[%s3 + $0xb8] sm:$0xff]
    %v159 = vld [vmem:[%s3 + $0xc0] sm:$0xff]
    %v160 = vld [vmem:[%s3 + $0xc8] sm:$0xff]
    %v161 = vld [vmem:[%s3 + $0xd0] sm:$0xff]
    %v162 = vld [vmem:[%s3 + $0xd8] sm:$0xff]
    %v163 = vld [vmem:[%s3 + $0xe0] sm:$0xff]
    %v164 = vld [vmem:[%s3 + $0xe8] sm:$0xff]
    %v165 = vld [vmem:[%s3 + $0xf0] sm:$0xff]
    %v166 = vld [vmem:[%s3 + $0xf8] sm:$0xff]
    %v199 = vunpack.c.l.b16 %v135
    %v200 = vunpack.c.h.b16 %v135
    %v201 = vunpack.c.l.b16 %v136
    %v202 = vunpack.c.h.b16 %v136
    %v203 = vunpack.c.l.b16 %v137
    %v204 = vunpack.c.h.b16 %v137
    %v205 = vunpack.c.l.b16 %v138
    %v206 = vunpack.c.h.b16 %v138
    %v207 = vunpack.c.l.b16 %v139
    %v208 = vunpack.c.h.b16 %v139
    %v209 = vunpack.c.l.b16 %v140
    %v210 = vunpack.c.h.b16 %v140
    %v211 = vunpack.c.l.b16 %v141
    %v212 = vunpack.c.h.b16 %v141
    %v213 = vunpack.c.l.b16 %v142
    %v214 = vunpack.c.h.b16 %v142
    %v215 = vunpack.c.l.b16 %v143
    %v216 = vunpack.c.h.b16 %v143
    %v217 = vunpack.c.l.b16 %v144
    %v218 = vunpack.c.h.b16 %v144
    %v219 = vunpack.c.l.b16 %v145
    %v220 = vunpack.c.h.b16 %v145
    %v221 = vunpack.c.l.b16 %v146
    %v222 = vunpack.c.h.b16 %v146
    %v223 = vunpack.c.l.b16 %v147
    %v224 = vunpack.c.h.b16 %v147
    %v225 = vunpack.c.l.b16 %v148
    %v226 = vunpack.c.h.b16 %v148
    %v227 = vunpack.c.l.b16 %v149
    %v228 = vunpack.c.h.b16 %v149
    %v229 = vunpack.c.l.b16 %v150
    %v230 = vunpack.c.h.b16 %v150
    %v231 = vunpack.c.l.b16 %v151
    %v232 = vunpack.c.h.b16 %v151
    %v233 = vunpack.c.l.b16 %v152
    %v234 = vunpack.c.h.b16 %v152
    %v235 = vunpack.c.l.b16 %v153
    %v236 = vunpack.c.h.b16 %v153
    %v237 = vunpack.c.l.b16 %v154
    %v238 = vunpack.c.h.b16 %v154
    %v239 = vunpack.c.l.b16 %v155
    %v240 = vunpack.c.h.b16 %v155
    %v241 = vunpack.c.l.b16 %v156
    %v242 = vunpack.c.h.b16 %v156
    %v243 = vunpack.c.l.b16 %v157
    %v244 = vunpack.c.h.b16 %v157
    %v245 = vunpack.c.l.b16 %v158
    %v246 = vunpack.c.h.b16 %v158
    %v247 = vunpack.c.l.b16 %v159
    %v248 = vunpack.c.h.b16 %v159
    %v249 = vunpack.c.l.b16 %v160
    %v250 = vunpack.c.h.b16 %v160
    %v251 = vunpack.c.l.b16 %v161
    %v252 = vunpack.c.h.b16 %v161
    %v253 = vunpack.c.l.b16 %v162
    %v254 = vunpack.c.h.b16 %v162
    %v255 = vunpack.c.l.b16 %v163
    %v256 = vunpack.c.h.b16 %v163
    %v257 = vunpack.c.l.b16 %v164
    %v258 = vunpack.c.h.b16 %v164
    %v259 = vunpack.c.l.b16 %v165
    %v260 = vunpack.c.h.b16 %v165
    %v261 = vunpack.c.l.b16 %v166
    %v262 = vunpack.c.h.b16 %v166
    %v263 = vpack.c.b16 %v203, %v199
    %v264 = vpack.c.b16 %v204, %v200
    %v265 = vpack.c.b16 %v205, %v201
    %v266 = vpack.c.b16 %v206, %v202
    %v267 = vpack.c.b16 %v211, %v207
    %v268 = vpack.c.b16 %v212, %v208
    %v269 = vpack.c.b16 %v213, %v209
    %v270 = vpack.c.b16 %v214, %v210
    %v271 = vpack.c.b16 %v219, %v215
    %v272 = vpack.c.b16 %v220, %v216
    %v273 = vpack.c.b16 %v221, %v217
    %v274 = vpack.c.b16 %v222, %v218
    %v275 = vpack.c.b16 %v227, %v223
    %v276 = vpack.c.b16 %v228, %v224
    %v277 = vpack.c.b16 %v229, %v225
    %v278 = vpack.c.b16 %v230, %v226
    %v279 = vpack.c.b16 %v235, %v231
    %v280 = vpack.c.b16 %v236, %v232
    %v281 = vpack.c.b16 %v237, %v233
    %v282 = vpack.c.b16 %v238, %v234
    %v283 = vpack.c.b16 %v243, %v239
    %v284 = vpack.c.b16 %v244, %v240
    %v285 = vpack.c.b16 %v245, %v241
    %v286 = vpack.c.b16 %v246, %v242
    %v287 = vpack.c.b16 %v251, %v247
    %v288 = vpack.c.b16 %v252, %v248
    %v289 = vpack.c.b16 %v253, %v249
    %v290 = vpack.c.b16 %v254, %v250
    %v291 = vpack.c.b16 %v259, %v255
    %v292 = vpack.c.b16 %v260, %v256
    %v293 = vpack.c.b16 %v261, %v257
    %v294 = vpack.c.b16 %v262, %v258
    %327 = vmatprep.subr.bf16.mxu0 %v264
    %328 = vmatpush1.bf16.msra.mxu0 %v263
    %329 = vmatprep.subr.bf16.mxu0 %v268
    %330 = vmatpush1.bf16.msra.mxu0 %v267
    %331 = vmatprep.subr.bf16.mxu0 %v272
    %332 = vmatpush1.bf16.msra.mxu0 %v271
    %333 = vmatprep.subr.bf16.mxu0 %v276
    %334 = vmatpush1.bf16.msra.mxu0 %v275
    %335 = vmatprep.subr.bf16.mxu0 %v280
    %336 = vmatpush1.bf16.msra.mxu0 %v279
    %337 = vmatprep.subr.bf16.mxu0 %v284
    %338 = vmatpush1.bf16.msra.mxu0 %v283
    %339 = vmatprep.subr.bf16.mxu0 %v288
    %340 = vmatpush1.bf16.msra.mxu0 %v287
    %341 = vmatprep.subr.bf16.mxu0 %v292
    %342 = vmatpush1.bf16.msra.mxu0 %v291
    %343 = vmatprep.subr.bf16.mxu0 0
    %344 = vmatpush1.bf16.msra.mxu0 0
    %345 = vmatprep.subr.bf16.mxu0 0
    %346 = vmatpush1.bf16.msra.mxu0 0
    %347 = vmatprep.subr.bf16.mxu0 0
    %348 = vmatpush1.bf16.msra.mxu0 0
    %349 = vmatprep.subr.bf16.mxu0 0
    %350 = vmatpush1.bf16.msra.mxu0 0
    %351 = vmatprep.subr.bf16.mxu0 0
    %352 = vmatpush1.bf16.msra.mxu0 0
    %353 = vmatprep.subr.bf16.mxu0 0
    %354 = vmatpush1.bf16.msra.mxu0 0
    %355 = vmatprep.subr.bf16.mxu0 0
    %356 = vmatpush1.bf16.msra.mxu0 0
    %357 = vmatprep.subr.bf16.mxu0 0
    %358 = vmatpush1.bf16.msra.mxu0 0
    %359 = vmatprep.mubr.bf16.mxu0 0
    %360 = vmatmul.mubr.bf16.gmra.mrb[0].mxu0 %v131
    %v361 = vpop.f32.mrb[0].mxu0
    %v362 = vadd.f32 0.0, %v361
    %v363 = vpop.f32.mrb[0].mxu0
    %v364 = vadd.f32 0.0, %v363
    %v365 = vpop.f32.mrb[0].mxu0
    %v366 = vadd.f32 0.0, %v365
    %v367 = vpop.f32.mrb[0].mxu0
    %v368 = vadd.f32 0.0, %v367
    %369 = vmatprep.mubr.bf16.mxu0 0
    %370 = vmatmul.mubr.bf16.gmra.mrb[0].mxu0 %v132
    %v371 = vpop.f32.mrb[0].mxu0
    %v372 = vadd.f32 0.0, %v371
    %v373 = vpop.f32.mrb[0].mxu0
    %v374 = vadd.f32 0.0, %v373
    %v375 = vpop.f32.mrb[0].mxu0
    %v376 = vadd.f32 0.0, %v375
    %v377 = vpop.f32.mrb[0].mxu0
    %v378 = vadd.f32 0.0, %v377
    %379 = vmatprep.mubr.bf16.mxu0 0
    %380 = vmatmul.mubr.bf16.gmra.mrb[0].mxu0 %v133
    %v381 = vpop.f32.mrb[0].mxu0
    %v382 = vadd.f32 0.0, %v381
    %v383 = vpop.f32.mrb[0].mxu0
    %v384 = vadd.f32 0.0, %v383
    %v385 = vpop.f32.mrb[0].mxu0
    %v386 = vadd.f32 0.0, %v385
    %v387 = vpop.f32.mrb[0].mxu0
    %v388 = vadd.f32 0.0, %v387
    %389 = vmatprep.mubr.bf16.mxu0 0
    %390 = vmatmul.mubr.bf16.gmra.mrb[0].mxu0 %v134
    %v391 = vpop.f32.mrb[0].mxu0
    %v392 = vadd.f32 0.0, %v391
    %v393 = vpop.f32.mrb[0].mxu0
    %v394 = vadd.f32 0.0, %v393
    %v395 = vpop.f32.mrb[0].mxu0
    %v396 = vadd.f32 0.0, %v395
    %v397 = vpop.f32.mrb[0].mxu0
    %v398 = vadd.f32 0.0, %v397
    %399 = vdwg.mxu0
    %400 = vmatprep.subr.bf16.mxu0 %v266
    %401 = vmatpush1.bf16.msra.mxu0 %v265
    %402 = vmatprep.subr.bf16.mxu0 %v270
    %403 = vmatpush1.bf16.msra.mxu0 %v269
    %404 = vmatprep.subr.bf16.mxu0 %v274
    %405 = vmatpush1.bf16.msra.mxu0 %v273
    %406 = vmatprep.subr.bf16.mxu0 %v278
    %407 = vmatpush1.bf16.msra.mxu0 %v277
    %408 = vmatprep.subr.bf16.mxu0 %v282
    %409 = vmatpush1.bf16.msra.mxu0 %v281
    %410 = vmatprep.subr.bf16.mxu0 %v286
    %411 = vmatpush1.bf16.msra.mxu0 %v285
    %412 = vmatprep.subr.bf16.mxu0 %v290
    %413 = vmatpush1.bf16.msra.mxu0 %v289
    %414 = vmatprep.subr.bf16.mxu0 %v294
    %415 = vmatpush1.bf16.msra.mxu0 %v293
    %416 = vmatprep.subr.bf16.mxu0 0
    %417 = vmatpush1.bf16.msra.mxu0 0
    %418 = vmatprep.subr.bf16.mxu0 0
    %419 = vmatpush1.bf16.msra.mxu0 0
    %420 = vmatprep.subr.bf16.mxu0 0
    %421 = vmatpush1.bf16.msra.mxu0 0
    %422 = vmatprep.subr.bf16.mxu0 0
    %423 = vmatpush1.bf16.msra.mxu0 0
    %424 = vmatprep.subr.bf16.mxu0 0
    %425 = vmatpush1.bf16.msra.mxu0 0
    %426 = vmatprep.subr.bf16.mxu0 0
    %427 = vmatpush1.bf16.msra.mxu0 0
    %428 = vmatprep.subr.bf16.mxu0 0
    %429 = vmatpush1.bf16.msra.mxu0 0
    %430 = vmatprep.subr.bf16.mxu0 0
    %431 = vmatpush1.bf16.msra.mxu0 0
    %432 = vmatprep.mubr.bf16.mxu0 0
    %433 = vmatmul.mubr.bf16.gmra.mrb[0].mxu0 %v131
    %v434 = vpop.f32.mrb[0].mxu0
    %v435 = vadd.f32 0.0, %v434
    %v436 = vpop.f32.mrb[0].mxu0
    %v437 = vadd.f32 0.0, %v436
    %v438 = vpop.f32.mrb[0].mxu0
    %v439 = vadd.f32 0.0, %v438
    %v440 = vpop.f32.mrb[0].mxu0
    %v441 = vadd.f32 0.0, %v440
    %442 = vmatprep.mubr.bf16.mxu0 0
    %443 = vmatmul.mubr.bf16.gmra.mrb[0].mxu0 %v132
    %v444 = vpop.f32.mrb[0].mxu0
    %v445 = vadd.f32 0.0, %v444
    %v446 = vpop.f32.mrb[0].mxu0
    %v447 = vadd.f32 0.0, %v446
    %v448 = vpop.f32.mrb[0].mxu0
    %v449 = vadd.f32 0.0, %v448
    %v450 = vpop.f32.mrb[0].mxu0
    %v451 = vadd.f32 0.0, %v450
    %452 = vmatprep.mubr.bf16.mxu0 0
    %453 = vmatmul.mubr.bf16.gmra.mrb[0].mxu0 %v133
    %v454 = vpop.f32.mrb[0].mxu0
    %v455 = vadd.f32 0.0, %v454
    %v456 = vpop.f32.mrb[0].mxu0
    %v457 = vadd.f32 0.0, %v456
    %v458 = vpop.f32.mrb[0].mxu0
    %v459 = vadd.f32 0.0, %v458
    %v460 = vpop.f32.mrb[0].mxu0
    %v461 = vadd.f32 0.0, %v460
    %462 = vmatprep.mubr.bf16.mxu0 0
    %463 = vmatmul.mubr.bf16.gmra.mrb[0].mxu0 %v134
    %v464 = vpop.f32.mrb[0].mxu0
    %v465 = vadd.f32 0.0, %v464
    %v466 = vpop.f32.mrb[0].mxu0
    %v467 = vadd.f32 0.0, %v466
    %v468 = vpop.f32.mrb[0].mxu0
    %v469 = vadd.f32 0.0, %v468
    %v470 = vpop.f32.mrb[0].mxu0
    %v471 = vadd.f32 0.0, %v470
    %472 = vdwg.mxu0
    %v473 = vld [vmem:[#allocation2] sm:$0xff]
    %v474 = vld [vmem:[#allocation2 + $0x8] sm:$0xff]
    %v475 = vld [vmem:[#allocation2 + $0x10] sm:$0xff]
    %v476 = vld [vmem:[#allocation2 + $0x18] sm:$0xff]
    %v477 = vld [vmem:[#allocation2 + $0x20] sm:$0xff]
    %v478 = vld [vmem:[#allocation2 + $0x28] sm:$0xff]
    %v479 = vld [vmem:[#allocation2 + $0x30] sm:$0xff]
    %v480 = vld [vmem:[#allocation2 + $0x38] sm:$0xff]
    %v481 = vld [vmem:[#allocation2 + $0x40] sm:$0xff]
    %v482 = vld [vmem:[#allocation2 + $0x48] sm:$0xff]
    %v483 = vld [vmem:[#allocation2 + $0x50] sm:$0xff]
    %v484 = vld [vmem:[#allocation2 + $0x58] sm:$0xff]
    %v485 = vld [vmem:[#allocation2 + $0x60] sm:$0xff]
    %v486 = vld [vmem:[#allocation2 + $0x68] sm:$0xff]
    %v487 = vld [vmem:[#allocation2 + $0x70] sm:$0xff]
    %v488 = vld [vmem:[#allocation2 + $0x78] sm:$0xff]
    %v489 = vld [vmem:[#allocation2 + $0x80] sm:$0xff]
    %v490 = vld [vmem:[#allocation2 + $0x88] sm:$0xff]
    %v491 = vld [vmem:[#allocation2 + $0x90] sm:$0xff]
    %v492 = vld [vmem:[#allocation2 + $0x98] sm:$0xff]
    %v493 = vld [vmem:[#allocation2 + $0xa0] sm:$0xff]
    %v494 = vld [vmem:[#allocation2 + $0xa8] sm:$0xff]
    %v495 = vld [vmem:[#allocation2 + $0xb0] sm:$0xff]
    %v496 = vld [vmem:[#allocation2 + $0xb8] sm:$0xff]
    %v497 = vld [vmem:[#allocation2 + $0xc0] sm:$0xff]
    %v498 = vld [vmem:[#allocation2 + $0xc8] sm:$0xff]
    %v499 = vld [vmem:[#allocation2 + $0xd0] sm:$0xff]
    %v500 = vld [vmem:[#allocation2 + $0xd8] sm:$0xff]
    %v501 = vld [vmem:[#allocation2 + $0xe0] sm:$0xff]
    %v502 = vld [vmem:[#allocation2 + $0xe8] sm:$0xff]
    %v503 = vld [vmem:[#allocation2 + $0xf0] sm:$0xff]
    %v504 = vld [vmem:[#allocation2 + $0xf8] sm:$0xff]
    %v537 = vunpack.c.l.b16 %v473
    %v538 = vunpack.c.h.b16 %v473
    %v539 = vunpack.c.l.b16 %v474
    %v540 = vunpack.c.h.b16 %v474
    %v541 = vunpack.c.l.b16 %v475
    %v542 = vunpack.c.h.b16 %v475
    %v543 = vunpack.c.l.b16 %v476
    %v544 = vunpack.c.h.b16 %v476
    %v545 = vunpack.c.l.b16 %v477
    %v546 = vunpack.c.h.b16 %v477
    %v547 = vunpack.c.l.b16 %v478
    %v548 = vunpack.c.h.b16 %v478
    %v549 = vunpack.c.l.b16 %v479
    %v550 = vunpack.c.h.b16 %v479
    %v551 = vunpack.c.l.b16 %v480
    %v552 = vunpack.c.h.b16 %v480
    %v553 = vunpack.c.l.b16 %v481
    %v554 = vunpack.c.h.b16 %v481
    %v555 = vunpack.c.l.b16 %v482
    %v556 = vunpack.c.h.b16 %v482
    %v557 = vunpack.c.l.b16 %v483
    %v558 = vunpack.c.h.b16 %v483
    %v559 = vunpack.c.l.b16 %v484
    %v560 = vunpack.c.h.b16 %v484
    %v561 = vunpack.c.l.b16 %v485
    %v562 = vunpack.c.h.b16 %v485
    %v563 = vunpack.c.l.b16 %v486
    %v564 = vunpack.c.h.b16 %v486
    %v565 = vunpack.c.l.b16 %v487
    %v566 = vunpack.c.h.b16 %v487
    %v567 = vunpack.c.l.b16 %v488
    %v568 = vunpack.c.h.b16 %v488
    %v569 = vunpack.c.l.b16 %v489
    %v570 = vunpack.c.h.b16 %v489
    %v571 = vunpack.c.l.b16 %v490
    %v572 = vunpack.c.h.b16 %v490
    %v573 = vunpack.c.l.b16 %v491
    %v574 = vunpack.c.h.b16 %v491
    %v575 = vunpack.c.l.b16 %v492
    %v576 = vunpack.c.h.b16 %v492
    %v577 = vunpack.c.l.b16 %v493
    %v578 = vunpack.c.h.b16 %v493
    %v579 = vunpack.c.l.b16 %v494
    %v580 = vunpack.c.h.b16 %v494
    %v581 = vunpack.c.l.b16 %v495
    %v582 = vunpack.c.h.b16 %v495
    %v583 = vunpack.c.l.b16 %v496
    %v584 = vunpack.c.h.b16 %v496
    %v585 = vunpack.c.l.b16 %v497
    %v586 = vunpack.c.h.b16 %v497
    %v587 = vunpack.c.l.b16 %v498
    %v588 = vunpack.c.h.b16 %v498
    %v589 = vunpack.c.l.b16 %v499
    %v590 = vunpack.c.h.b16 %v499
    %v591 = vunpack.c.l.b16 %v500
    %v592 = vunpack.c.h.b16 %v500
    %v593 = vunpack.c.l.b16 %v501
    %v594 = vunpack.c.h.b16 %v501
    %v595 = vunpack.c.l.b16 %v502
    %v596 = vunpack.c.h.b16 %v502
    %v597 = vunpack.c.l.b16 %v503
    %v598 = vunpack.c.h.b16 %v503
    %v599 = vunpack.c.l.b16 %v504
    %v600 = vunpack.c.h.b16 %v504
    %v601 = vpack.c.b16 %v541, %v537
    %v602 = vpack.c.b16 %v542, %v538
    %v603 = vpack.c.b16 %v543, %v539
    %v604 = vpack.c.b16 %v544, %v540
    %v605 = vpack.c.b16 %v549, %v545
    %v606 = vpack.c.b16 %v550, %v546
    %v607 = vpack.c.b16 %v551, %v547
    %v608 = vpack.c.b16 %v552, %v548
    %v609 = vpack.c.b16 %v557, %v553
    %v610 = vpack.c.b16 %v558, %v554
    %v611 = vpack.c.b16 %v559, %v555
    %v612 = vpack.c.b16 %v560, %v556
    %v613 = vpack.c.b16 %v565, %v561
    %v614 = vpack.c.b16 %v566, %v562
    %v615 = vpack.c.b16 %v567, %v563
    %v616 = vpack.c.b16 %v568, %v564
    %v617 = vpack.c.b16 %v573, %v569
    %v618 = vpack.c.b16 %v574, %v570
    %v619 = vpack.c.b16 %v575, %v571
    %v620 = vpack.c.b16 %v576, %v572
    %v621 = vpack.c.b16 %v581, %v577
    %v622 = vpack.c.b16 %v582, %v578
    %v623 = vpack.c.b16 %v583, %v579
    %v624 = vpack.c.b16 %v584, %v580
    %v625 = vpack.c.b16 %v589, %v585
    %v626 = vpack.c.b16 %v590, %v586
    %v627 = vpack.c.b16 %v591, %v587
    %v628 = vpack.c.b16 %v592, %v588
    %v629 = vpack.c.b16 %v597, %v593
    %v630 = vpack.c.b16 %v598, %v594
    %v631 = vpack.c.b16 %v599, %v595
    %v632 = vpack.c.b16 %v600, %v596
    %665 = vmatprep.subr.bf16.mxu0 %v602
    %666 = vmatpush1.bf16.msra.mxu0 %v601
    %667 = vmatprep.subr.bf16.mxu0 %v606
    %668 = vmatpush1.bf16.msra.mxu0 %v605
    %669 = vmatprep.subr.bf16.mxu0 %v610
    %670 = vmatpush1.bf16.msra.mxu0 %v609
    %671 = vmatprep.subr.bf16.mxu0 %v614
    %672 = vmatpush1.bf16.msra.mxu0 %v613
    %673 = vmatprep.subr.bf16.mxu0 %v618
    %674 = vmatpush1.bf16.msra.mxu0 %v617
    %675 = vmatprep.subr.bf16.mxu0 %v622
    %676 = vmatpush1.bf16.msra.mxu0 %v621
    %677 = vmatprep.subr.bf16.mxu0 %v626
    %678 = vmatpush1.bf16.msra.mxu0 %v625
    %679 = vmatprep.subr.bf16.mxu0 %v630
    %680 = vmatpush1.bf16.msra.mxu0 %v629
    %681 = vmatprep.subr.bf16.mxu0 0
    %682 = vmatpush1.bf16.msra.mxu0 0
    %683 = vmatprep.subr.bf16.mxu0 0
    %684 = vmatpush1.bf16.msra.mxu0 0
    %685 = vmatprep.subr.bf16.mxu0 0
    %686 = vmatpush1.bf16.msra.mxu0 0
    %687 = vmatprep.subr.bf16.mxu0 0
    %688 = vmatpush1.bf16.msra.mxu0 0
    %689 = vmatprep.subr.bf16.mxu0 0
    %690 = vmatpush1.bf16.msra.mxu0 0
    %691 = vmatprep.subr.bf16.mxu0 0
    %692 = vmatpush1.bf16.msra.mxu0 0
    %693 = vmatprep.subr.bf16.mxu0 0
    %694 = vmatpush1.bf16.msra.mxu0 0
    %695 = vmatprep.subr.bf16.mxu0 0
    %696 = vmatpush1.bf16.msra.mxu0 0
    %697 = vmatprep.mubr.bf16.mxu0 0
    %698 = vmatmul.mubr.bf16.gmra.mrb[0].mxu0 0
    %v699 = vpop.f32.mrb[0].mxu0
    %v700 = vadd.f32 0.0, %v699
    %v701 = vpop.f32.mrb[0].mxu0
    %v702 = vadd.f32 0.0, %v701
    %v703 = vpop.f32.mrb[0].mxu0
    %v704 = vpop.f32.mrb[0].mxu0
    %705 = vdwg.mxu0
    %706 = vmatprep.subr.bf16.mxu0 %v604
    %707 = vmatpush1.bf16.msra.mxu0 %v603
    %708 = vmatprep.subr.bf16.mxu0 %v608
    %709 = vmatpush1.bf16.msra.mxu0 %v607
    %710 = vmatprep.subr.bf16.mxu0 %v612
    %711 = vmatpush1.bf16.msra.mxu0 %v611
    %712 = vmatprep.subr.bf16.mxu0 %v616
    %713 = vmatpush1.bf16.msra.mxu0 %v615
    %714 = vmatprep.subr.bf16.mxu0 %v620
    %715 = vmatpush1.bf16.msra.mxu0 %v619
    %716 = vmatprep.subr.bf16.mxu0 %v624
    %717 = vmatpush1.bf16.msra.mxu0 %v623
    %718 = vmatprep.subr.bf16.mxu0 %v628
    %719 = vmatpush1.bf16.msra.mxu0 %v627
    %720 = vmatprep.subr.bf16.mxu0 %v632
    %721 = vmatpush1.bf16.msra.mxu0 %v631
    %722 = vmatprep.subr.bf16.mxu0 0
    %723 = vmatpush1.bf16.msra.mxu0 0
    %724 = vmatprep.subr.bf16.mxu0 0
    %725 = vmatpush1.bf16.msra.mxu0 0
    %726 = vmatprep.subr.bf16.mxu0 0
    %727 = vmatpush1.bf16.msra.mxu0 0
    %728 = vmatprep.subr.bf16.mxu0 0
    %729 = vmatpush1.bf16.msra.mxu0 0
    %730 = vmatprep.subr.bf16.mxu0 0
    %731 = vmatpush1.bf16.msra.mxu0 0
    %732 = vmatprep.subr.bf16.mxu0 0
    %733 = vmatpush1.bf16.msra.mxu0 0
    %734 = vmatprep.subr.bf16.mxu0 0
    %735 = vmatpush1.bf16.msra.mxu0 0
    %736 = vmatprep.subr.bf16.mxu0 0
    %737 = vmatpush1.bf16.msra.mxu0 0
    %738 = vmatprep.mubr.bf16.mxu0 0
    %739 = vmatmul.mubr.bf16.gmra.mrb[0].mxu0 0
    %v740 = vpop.f32.mrb[0].mxu0
    %v741 = vadd.f32 0.0, %v740
    %v742 = vpop.f32.mrb[0].mxu0
    %v743 = vadd.f32 0.0, %v742
    %v744 = vpop.f32.mrb[0].mxu0
    %v745 = vpop.f32.mrb[0].mxu0
    %746 = vdwg.mxu0
    %v747 = vadd.f32 %v362, %v700
    %v748 = vadd.f32 %v364, %v702
    %v749 = vadd.f32 %v435, %v741
    %v750 = vadd.f32 %v437, %v743
    %v752 = vlaneseq
    %v753 = vshrl.u32 %v752, 7
    %v754 = vsub.s32 0, %v753
    %v755 = vrot.slane %v120, %v754
    %v756 = vlaneseq
    %v757 = vshrl.u32 %v756, 7
    %v758 = vsub.s32 1, %v757
    %v759 = vrot.slane %v120, %v758
    %v760 = vlaneseq
    %v761 = vshrl.u32 %v760, 7
    %v762 = vsub.s32 2, %v761
    %v763 = vrot.slane %v120, %v762
    %v764 = vlaneseq
    %v765 = vshrl.u32 %v764, 7
    %v766 = vsub.s32 3, %v765
    %v767 = vrot.slane %v120, %v766
    %v772 = vadd.f32 %v747, %v755
    %v773 = vadd.f32 %v748, %v759
    %v774 = vadd.f32 %v749, %v763
    %v775 = vadd.f32 %v750, %v767
    %v776 = vmul.f32 %v772, %v116
    %v777 = vmul.f32 %v773, %v117
    %v778 = vmul.f32 %v774, %v118
    %v779 = vmul.f32 %v775, %v119
    %v780 = vxor.u32 %v776, 2147483648
    %v781 = vxor.u32 %v777, 2147483648
    %v782 = vxor.u32 %v778, 2147483648
    %v783 = vxor.u32 %v779, 2147483648
    %v784 = vmul.f32 %v780, 1.442695
    %v785 = vpow.pop %v784
    %v786 = vmul.f32 %v781, 1.442695
    %v787 = vpow.pop %v786
    %v788 = vmul.f32 %v782, 1.442695
    %v789 = vpow.pop %v788
    %v790 = vmul.f32 %v783, 1.442695
    %v791 = vpow.pop %v790
    %v792 = vadd.f32 %v785, 1.0
    %v793 = vadd.f32 %v787, 1.0
    %v794 = vadd.f32 %v789, 1.0
    %v795 = vadd.f32 %v791, 1.0
    %v796 = vrcp.pop %v792
    %v797 = vmul.f32 1.0, %v796
    %v798 = vrcp.pop %v793
    %v799 = vmul.f32 1.0, %v798
    %v800 = vrcp.pop %v794
    %v801 = vmul.f32 1.0, %v800
    %v802 = vrcp.pop %v795
    %v803 = vmul.f32 1.0, %v802
    %v804 = vmul.f32 %v801, 2.0
    %v805 = vsub.f32 %v804, 1.0
    %v806 = vmul.f32 %v799, 0.0
    %v807 = vmul.f32 %v797, %v805
    %v808 = vadd.f32 %v806, %v807
    %v809 = vtanh.pop %v808
    %v810 = vmul.f32 %v803, %v809
    %v811 = vpack.c.bf16 %v810, %v810
    %812 = vmatprep.subr.bf16.mxu0 %v602
    %813 = vmatpush1.bf16.msra.mxu0 %v601
    %814 = vmatprep.subr.bf16.mxu0 %v606
    %815 = vmatpush1.bf16.msra.mxu0 %v605
    %816 = vmatprep.subr.bf16.mxu0 %v610
    %817 = vmatpush1.bf16.msra.mxu0 %v609
    %818 = vmatprep.subr.bf16.mxu0 %v614
    %819 = vmatpush1.bf16.msra.mxu0 %v613
    %820 = vmatprep.subr.bf16.mxu0 %v618
    %821 = vmatpush1.bf16.msra.mxu0 %v617
    %822 = vmatprep.subr.bf16.mxu0 %v622
    %823 = vmatpush1.bf16.msra.mxu0 %v621
    %824 = vmatprep.subr.bf16.mxu0 %v626
    %825 = vmatpush1.bf16.msra.mxu0 %v625
    %826 = vmatprep.subr.bf16.mxu0 %v630
    %827 = vmatpush1.bf16.msra.mxu0 %v629
    %828 = vmatprep.subr.bf16.mxu0 0
    %829 = vmatpush1.bf16.msra.mxu0 0
    %830 = vmatprep.subr.bf16.mxu0 0
    %831 = vmatpush1.bf16.msra.mxu0 0
    %832 = vmatprep.subr.bf16.mxu0 0
    %833 = vmatpush1.bf16.msra.mxu0 0
    %834 = vmatprep.subr.bf16.mxu0 0
    %835 = vmatpush1.bf16.msra.mxu0 0
    %836 = vmatprep.subr.bf16.mxu0 0
    %837 = vmatpush1.bf16.msra.mxu0 0
    %838 = vmatprep.subr.bf16.mxu0 0
    %839 = vmatpush1.bf16.msra.mxu0 0
    %840 = vmatprep.subr.bf16.mxu0 0
    %841 = vmatpush1.bf16.msra.mxu0 0
    %842 = vmatprep.subr.bf16.mxu0 0
    %843 = vmatpush1.bf16.msra.mxu0 0
    %844 = vmatprep.mubr.bf16.mxu0 0
    %845 = vmatmul.mubr.bf16.gmra.mrb[0].mxu0 %v811
    %v846 = vpop.f32.mrb[0].mxu0
    %v847 = vadd.f32 0.0, %v846
    %v848 = vpop.f32.mrb[0].mxu0
    %v849 = vadd.f32 0.0, %v848
    %v850 = vpop.f32.mrb[0].mxu0
    %v851 = vpop.f32.mrb[0].mxu0
    %852 = vdwg.mxu0
    %853 = vmatprep.subr.bf16.mxu0 %v604
    %854 = vmatpush1.bf16.msra.mxu0 %v603
    %855 = vmatprep.subr.bf16.mxu0 %v608
    %856 = vmatpush1.bf16.msra.mxu0 %v607
    %857 = vmatprep.subr.bf16.mxu0 %v612
    %858 = vmatpush1.bf16.msra.mxu0 %v611
    %859 = vmatprep.subr.bf16.mxu0 %v616
    %860 = vmatpush1.bf16.msra.mxu0 %v615
    %861 = vmatprep.subr.bf16.mxu0 %v620
    %862 = vmatpush1.bf16.msra.mxu0 %v619
    %863 = vmatprep.subr.bf16.mxu0 %v624
    %864 = vmatpush1.bf16.msra.mxu0 %v623
    %865 = vmatprep.subr.bf16.mxu0 %v628
    %866 = vmatpush1.bf16.msra.mxu0 %v627
    %867 = vmatprep.subr.bf16.mxu0 %v632
    %868 = vmatpush1.bf16.msra.mxu0 %v631
    %869 = vmatprep.subr.bf16.mxu0 0
    %870 = vmatpush1.bf16.msra.mxu0 0
    %871 = vmatprep.subr.bf16.mxu0 0
    %872 = vmatpush1.bf16.msra.mxu0 0
    %873 = vmatprep.subr.bf16.mxu0 0
    %874 = vmatpush1.bf16.msra.mxu0 0
    %875 = vmatprep.subr.bf16.mxu0 0
    %876 = vmatpush1.bf16.msra.mxu0 0
    %877 = vmatprep.subr.bf16.mxu0 0
    %878 = vmatpush1.bf16.msra.mxu0 0
    %879 = vmatprep.subr.bf16.mxu0 0
    %880 = vmatpush1.bf16.msra.mxu0 0
    %881 = vmatprep.subr.bf16.mxu0 0
    %882 = vmatpush1.bf16.msra.mxu0 0
    %883 = vmatprep.subr.bf16.mxu0 0
    %884 = vmatpush1.bf16.msra.mxu0 0
    %885 = vmatprep.mubr.bf16.mxu0 0
    %886 = vmatmul.mubr.bf16.gmra.mrb[0].mxu0 %v811
    %v887 = vpop.f32.mrb[0].mxu0
    %v888 = vadd.f32 0.0, %v887
    %v889 = vpop.f32.mrb[0].mxu0
    %v890 = vadd.f32 0.0, %v889
    %v891 = vpop.f32.mrb[0].mxu0
    %v892 = vpop.f32.mrb[0].mxu0
    %893 = vdwg.mxu0
    %v894 = vadd.f32 %v366, %v847
    %v895 = vadd.f32 %v368, %v849
    %v896 = vadd.f32 %v439, %v888
    %v897 = vadd.f32 %v441, %v890
    %v898 = vadd.f32 %v894, %v755
    %v899 = vadd.f32 %v895, %v759
    %v900 = vadd.f32 %v896, %v763
    %v901 = vadd.f32 %v897, %v767
    %v902 = vmul.f32 %v898, %v116
    %v903 = vmul.f32 %v899, %v117
    %v904 = vmul.f32 %v900, %v118
    %v905 = vmul.f32 %v901, %v119
    %v906 = vxor.u32 %v902, 2147483648
    %v907 = vxor.u32 %v903, 2147483648
    %v908 = vxor.u32 %v904, 2147483648
    %v909 = vxor.u32 %v905, 2147483648
    %v910 = vmul.f32 %v906, 1.442695
    %v911 = vpow.pop %v910
    %v912 = vmul.f32 %v907, 1.442695
    %v913 = vpow.pop %v912
    %v914 = vmul.f32 %v908, 1.442695
    %v915 = vpow.pop %v914
    %v916 = vmul.f32 %v909, 1.442695
    %v917 = vpow.pop %v916
    %v918 = vadd.f32 %v911, 1.0
    %v919 = vadd.f32 %v913, 1.0
    %v920 = vadd.f32 %v915, 1.0
    %v921 = vadd.f32 %v917, 1.0
    %v922 = vrcp.pop %v918
    %v923 = vmul.f32 1.0, %v922
    %v924 = vrcp.pop %v919
    %v925 = vmul.f32 1.0, %v924
    %v926 = vrcp.pop %v920
    %v927 = vmul.f32 1.0, %v926
    %v928 = vrcp.pop %v921
    %v929 = vmul.f32 1.0, %v928
    %v930 = vmul.f32 %v927, 2.0
    %v931 = vsub.f32 %v930, 1.0
    %v932 = vmul.f32 %v925, %v808
    %v933 = vmul.f32 %v923, %v931
    %v934 = vadd.f32 %v932, %v933
    %v935 = vtanh.pop %v934
    %v936 = vmul.f32 %v929, %v935
    %v937 = vpack.c.bf16 %v936, %v936
    %938 = vmatprep.subr.bf16.mxu0 %v602
    %939 = vmatpush1.bf16.msra.mxu0 %v601
    %940 = vmatprep.subr.bf16.mxu0 %v606
    %941 = vmatpush1.bf16.msra.mxu0 %v605
    %942 = vmatprep.subr.bf16.mxu0 %v610
    %943 = vmatpush1.bf16.msra.mxu0 %v609
    %944 = vmatprep.subr.bf16.mxu0 %v614
    %945 = vmatpush1.bf16.msra.mxu0 %v613
    %946 = vmatprep.subr.bf16.mxu0 %v618
    %947 = vmatpush1.bf16.msra.mxu0 %v617
    %948 = vmatprep.subr.bf16.mxu0 %v622
    %949 = vmatpush1.bf16.msra.mxu0 %v621
    %950 = vmatprep.subr.bf16.mxu0 %v626
    %951 = vmatpush1.bf16.msra.mxu0 %v625
    %952 = vmatprep.subr.bf16.mxu0 %v630
    %953 = vmatpush1.bf16.msra.mxu0 %v629
    %954 = vmatprep.subr.bf16.mxu0 0
    %955 = vmatpush1.bf16.msra.mxu0 0
    %956 = vmatprep.subr.bf16.mxu0 0
    %957 = vmatpush1.bf16.msra.mxu0 0
    %958 = vmatprep.subr.bf16.mxu0 0
    %959 = vmatpush1.bf16.msra.mxu0 0
    %960 = vmatprep.subr.bf16.mxu0 0
    %961 = vmatpush1.bf16.msra.mxu0 0
    %962 = vmatprep.subr.bf16.mxu0 0
    %963 = vmatpush1.bf16.msra.mxu0 0
    %964 = vmatprep.subr.bf16.mxu0 0
    %965 = vmatpush1.bf16.msra.mxu0 0
    %966 = vmatprep.subr.bf16.mxu0 0
    %967 = vmatpush1.bf16.msra.mxu0 0
    %968 = vmatprep.subr.bf16.mxu0 0
    %969 = vmatpush1.bf16.msra.mxu0 0
    %970 = vmatprep.mubr.bf16.mxu0 0
    %971 = vmatmul.mubr.bf16.gmra.mrb[0].mxu0 %v937
    %v972 = vpop.f32.mrb[0].mxu0
    %v973 = vadd.f32 0.0, %v972
    %v974 = vpop.f32.mrb[0].mxu0
    %v975 = vadd.f32 0.0, %v974
    %v976 = vpop.f32.mrb[0].mxu0
    %v977 = vpop.f32.mrb[0].mxu0
    %978 = vdwg.mxu0
    %979 = vmatprep.subr.bf16.mxu0 %v604
    %980 = vmatpush1.bf16.msra.mxu0 %v603
    %981 = vmatprep.subr.bf16.mxu0 %v608
    %982 = vmatpush1.bf16.msra.mxu0 %v607
    %983 = vmatprep.subr.bf16.mxu0 %v612
    %984 = vmatpush1.bf16.msra.mxu0 %v611
    %985 = vmatprep.subr.bf16.mxu0 %v616
    %986 = vmatpush1.bf16.msra.mxu0 %v615
    %987 = vmatprep.subr.bf16.mxu0 %v620
    %988 = vmatpush1.bf16.msra.mxu0 %v619
    %989 = vmatprep.subr.bf16.mxu0 %v624
    %990 = vmatpush1.bf16.msra.mxu0 %v623
    %991 = vmatprep.subr.bf16.mxu0 %v628
    %992 = vmatpush1.bf16.msra.mxu0 %v627
    %993 = vmatprep.subr.bf16.mxu0 %v632
    %994 = vmatpush1.bf16.msra.mxu0 %v631
    %995 = vmatprep.subr.bf16.mxu0 0
    %996 = vmatpush1.bf16.msra.mxu0 0
    %997 = vmatprep.subr.bf16.mxu0 0
    %998 = vmatpush1.bf16.msra.mxu0 0
    %999 = vmatprep.subr.bf16.mxu0 0
    %1000 = vmatpush1.bf16.msra.mxu0 0
    %1001 = vmatprep.subr.bf16.mxu0 0
    %1002 = vmatpush1.bf16.msra.mxu0 0
    %1003 = vmatprep.subr.bf16.mxu0 0
    %1004 = vmatpush1.bf16.msra.mxu0 0
    %1005 = vmatprep.subr.bf16.mxu0 0
    %1006 = vmatpush1.bf16.msra.mxu0 0
    %1007 = vmatprep.subr.bf16.mxu0 0
    %1008 = vmatpush1.bf16.msra.mxu0 0
    %1009 = vmatprep.subr.bf16.mxu0 0
    %1010 = vmatpush1.bf16.msra.mxu0 0
    %1011 = vmatprep.mubr.bf16.mxu0 0
    %1012 = vmatmul.mubr.bf16.gmra.mrb[0].mxu0 %v937
    %v1013 = vpop.f32.mrb[0].mxu0
    %v1014 = vadd.f32 0.0, %v1013
    %v1015 = vpop.f32.mrb[0].mxu0
    %v1016 = vadd.f32 0.0, %v1015
    %v1017 = vpop.f32.mrb[0].mxu0
    %v1018 = vpop.f32.mrb[0].mxu0
    %1019 = vdwg.mxu0
    %v1020 = vadd.f32 %v372, %v973
    %v1021 = vadd.f32 %v374, %v975
    %v1022 = vadd.f32 %v445, %v1014
    %v1023 = vadd.f32 %v447, %v1016
    %v1024 = vadd.f32 %v1020, %v755
    %v1025 = vadd.f32 %v1021, %v759
    %v1026 = vadd.f32 %v1022, %v763
    %v1027 = vadd.f32 %v1023, %v767
    %v1028 = vmul.f32 %v1024, %v116
    %v1029 = vmul.f32 %v1025, %v117
    %v1030 = vmul.f32 %v1026, %v118
    %v1031 = vmul.f32 %v1027, %v119
    %v1032 = vxor.u32 %v1028, 2147483648
    %v1033 = vxor.u32 %v1029, 2147483648
    %v1034 = vxor.u32 %v1030, 2147483648
    %v1035 = vxor.u32 %v1031, 2147483648
    %v1036 = vmul.f32 %v1032, 1.442695
    %v1037 = vpow.pop %v1036
    %v1038 = vmul.f32 %v1033, 1.442695
    %v1039 = vpow.pop %v1038
    %v1040 = vmul.f32 %v1034, 1.442695
    %v1041 = vpow.pop %v1040
    %v1042 = vmul.f32 %v1035, 1.442695
    %v1043 = vpow.pop %v1042
    %v1044 = vadd.f32 %v1037, 1.0
    %v1045 = vadd.f32 %v1039, 1.0
    %v1046 = vadd.f32 %v1041, 1.0
    %v1047 = vadd.f32 %v1043, 1.0
    %v1048 = vrcp.pop %v1044
    %v1049 = vmul.f32 1.0, %v1048
    %v1050 = vrcp.pop %v1045
    %v1051 = vmul.f32 1.0, %v1050
    %v1052 = vrcp.pop %v1046
    %v1053 = vmul.f32 1.0, %v1052
    %v1054 = vrcp.pop %v1047
    %v1055 = vmul.f32 1.0, %v1054
    %v1056 = vmul.f32 %v1053, 2.0
    %v1057 = vsub.f32 %v1056, 1.0
    %v1058 = vmul.f32 %v1051, %v934
    %v1059 = vmul.f32 %v1049, %v1057
    %v1060 = vadd.f32 %v1058, %v1059
    %v1061 = vtanh.pop %v1060
    %v1062 = vmul.f32 %v1055, %v1061
    %v1063 = vpack.c.bf16 %v1062, %v1062
    %1064 = vmatprep.subr.bf16.mxu0 %v602
    %1065 = vmatpush1.bf16.msra.mxu0 %v601
    %1066 = vmatprep.subr.bf16.mxu0 %v606
    %1067 = vmatpush1.bf16.msra.mxu0 %v605
    %1068 = vmatprep.subr.bf16.mxu0 %v610
    %1069 = vmatpush1.bf16.msra.mxu0 %v609
    %1070 = vmatprep.subr.bf16.mxu0 %v614
    %1071 = vmatpush1.bf16.msra.mxu0 %v613
    %1072 = vmatprep.subr.bf16.mxu0 %v618
    %1073 = vmatpush1.bf16.msra.mxu0 %v617
    %1074 = vmatprep.subr.bf16.mxu0 %v622
    %1075 = vmatpush1.bf16.msra.mxu0 %v621
    %1076 = vmatprep.subr.bf16.mxu0 %v626
    %1077 = vmatpush1.bf16.msra.mxu0 %v625
    %1078 = vmatprep.subr.bf16.mxu0 %v630
    %1079 = vmatpush1.bf16.msra.mxu0 %v629
    %1080 = vmatprep.subr.bf16.mxu0 0
    %1081 = vmatpush1.bf16.msra.mxu0 0
    %1082 = vmatprep.subr.bf16.mxu0 0
    %1083 = vmatpush1.bf16.msra.mxu0 0
    %1084 = vmatprep.subr.bf16.mxu0 0
    %1085 = vmatpush1.bf16.msra.mxu0 0
    %1086 = vmatprep.subr.bf16.mxu0 0
    %1087 = vmatpush1.bf16.msra.mxu0 0
    %1088 = vmatprep.subr.bf16.mxu0 0
    %1089 = vmatpush1.bf16.msra.mxu0 0
    %1090 = vmatprep.subr.bf16.mxu0 0
    %1091 = vmatpush1.bf16.msra.mxu0 0
    %1092 = vmatprep.subr.bf16.mxu0 0
    %1093 = vmatpush1.bf16.msra.mxu0 0
    %1094 = vmatprep.subr.bf16.mxu0 0
    %1095 = vmatpush1.bf16.msra.mxu0 0
    %1096 = vmatprep.mubr.bf16.mxu0 0
    %1097 = vmatmul.mubr.bf16.gmra.mrb[0].mxu0 %v1063
    %v1098 = vpop.f32.mrb[0].mxu0
    %v1099 = vadd.f32 0.0, %v1098
    %v1100 = vpop.f32.mrb[0].mxu0
    %v1101 = vadd.f32 0.0, %v1100
    %v1102 = vpop.f32.mrb[0].mxu0
    %v1103 = vpop.f32.mrb[0].mxu0
    %1104 = vdwg.mxu0
    %1105 = vmatprep.subr.bf16.mxu0 %v604
    %1106 = vmatpush1.bf16.msra.mxu0 %v603
    %1107 = vmatprep.subr.bf16.mxu0 %v608
    %1108 = vmatpush1.bf16.msra.mxu0 %v607
    %1109 = vmatprep.subr.bf16.mxu0 %v612
    %1110 = vmatpush1.bf16.msra.mxu0 %v611
    %1111 = vmatprep.subr.bf16.mxu0 %v616
    %1112 = vmatpush1.bf16.msra.mxu0 %v615
    %1113 = vmatprep.subr.bf16.mxu0 %v620
    %1114 = vmatpush1.bf16.msra.mxu0 %v619
    %1115 = vmatprep.subr.bf16.mxu0 %v624
    %1116 = vmatpush1.bf16.msra.mxu0 %v623
    %1117 = vmatprep.subr.bf16.mxu0 %v628
    %1118 = vmatpush1.bf16.msra.mxu0 %v627
    %1119 = vmatprep.subr.bf16.mxu0 %v632
    %1120 = vmatpush1.bf16.msra.mxu0 %v631
    %1121 = vmatprep.subr.bf16.mxu0 0
    %1122 = vmatpush1.bf16.msra.mxu0 0
    %1123 = vmatprep.subr.bf16.mxu0 0
    %1124 = vmatpush1.bf16.msra.mxu0 0
    %1125 = vmatprep.subr.bf16.mxu0 0
    %1126 = vmatpush1.bf16.msra.mxu0 0
    %1127 = vmatprep.subr.bf16.mxu0 0
    %1128 = vmatpush1.bf16.msra.mxu0 0
    %1129 = vmatprep.subr.bf16.mxu0 0
    %1130 = vmatpush1.bf16.msra.mxu0 0
    %1131 = vmatprep.subr.bf16.mxu0 0
    %1132 = vmatpush1.bf16.msra.mxu0 0
    %1133 = vmatprep.subr.bf16.mxu0 0
    %1134 = vmatpush1.bf16.msra.mxu0 0
    %1135 = vmatprep.subr.bf16.mxu0 0
    %1136 = vmatpush1.bf16.msra.mxu0 0
    %1137 = vmatprep.mubr.bf16.mxu0 0
    %1138 = vmatmul.mubr.bf16.gmra.mrb[0].mxu0 %v1063
    %v1139 = vpop.f32.mrb[0].mxu0
    %v1140 = vadd.f32 0.0, %v1139
    %v1141 = vpop.f32.mrb[0].mxu0
    %v1142 = vadd.f32 0.0, %v1141
    %v1143 = vpop.f32.mrb[0].mxu0
    %v1144 = vpop.f32.mrb[0].mxu0
    %1145 = vdwg.mxu0
    %v1146 = vadd.f32 %v376, %v1099
    %v1147 = vadd.f32 %v378, %v1101
    %v1148 = vadd.f32 %v449, %v1140
    %v1149 = vadd.f32 %v451, %v1142
    %v1150 = vadd.f32 %v1146, %v755
    %v1151 = vadd.f32 %v1147, %v759
    %v1152 = vadd.f32 %v1148, %v763
    %v1153 = vadd.f32 %v1149, %v767
    %v1154 = vmul.f32 %v1150, %v116
    %v1155 = vmul.f32 %v1151, %v117
    %v1156 = vmul.f32 %v1152, %v118
    %v1157 = vmul.f32 %v1153, %v119
    %v1158 = vxor.u32 %v1154, 2147483648
    %v1159 = vxor.u32 %v1155, 2147483648
    %v1160 = vxor.u32 %v1156, 2147483648
    %v1161 = vxor.u32 %v1157, 2147483648
    %v1162 = vmul.f32 %v1158, 1.442695
    %v1163 = vpow.pop %v1162
    %v1164 = vmul.f32 %v1159, 1.442695
    %v1165 = vpow.pop %v1164
    %v1166 = vmul.f32 %v1160, 1.442695
    %v1167 = vpow.pop %v1166
    %v1168 = vmul.f32 %v1161, 1.442695
    %v1169 = vpow.pop %v1168
    %v1170 = vadd.f32 %v1163, 1.0
    %v1171 = vadd.f32 %v1165, 1.0
    %v1172 = vadd.f32 %v1167, 1.0
    %v1173 = vadd.f32 %v1169, 1.0
    %v1174 = vrcp.pop %v1170
    %v1175 = vmul.f32 1.0, %v1174
    %v1176 = vrcp.pop %v1171
    %v1177 = vmul.f32 1.0, %v1176
    %v1178 = vrcp.pop %v1172
    %v1179 = vmul.f32 1.0, %v1178
    %v1180 = vrcp.pop %v1173
    %v1181 = vmul.f32 1.0, %v1180
    %v1182 = vmul.f32 %v1179, 2.0
    %v1183 = vsub.f32 %v1182, 1.0
    %v1184 = vmul.f32 %v1177, %v1060
    %v1185 = vmul.f32 %v1175, %v1183
    %v1186 = vadd.f32 %v1184, %v1185
    %v1187 = vtanh.pop %v1186
    %v1188 = vmul.f32 %v1181, %v1187
    %v1189 = vpack.c.bf16 %v1188, %v1188
    %1190 = vmatprep.subr.bf16.mxu0 %v602
    %1191 = vmatpush1.bf16.msra.mxu0 %v601
    %1192 = vmatprep.subr.bf16.mxu0 %v606
    %1193 = vmatpush1.bf16.msra.mxu0 %v605
    %1194 = vmatprep.subr.bf16.mxu0 %v610
    %1195 = vmatpush1.bf16.msra.mxu0 %v609
    %1196 = vmatprep.subr.bf16.mxu0 %v614
    %1197 = vmatpush1.bf16.msra.mxu0 %v613
    %1198 = vmatprep.subr.bf16.mxu0 %v618
    %1199 = vmatpush1.bf16.msra.mxu0 %v617
    %1200 = vmatprep.subr.bf16.mxu0 %v622
    %1201 = vmatpush1.bf16.msra.mxu0 %v621
    %1202 = vmatprep.subr.bf16.mxu0 %v626
    %1203 = vmatpush1.bf16.msra.mxu0 %v625
    %1204 = vmatprep.subr.bf16.mxu0 %v630
    %1205 = vmatpush1.bf16.msra.mxu0 %v629
    %1206 = vmatprep.subr.bf16.mxu0 0
    %1207 = vmatpush1.bf16.msra.mxu0 0
    %1208 = vmatprep.subr.bf16.mxu0 0
    %1209 = vmatpush1.bf16.msra.mxu0 0
    %1210 = vmatprep.subr.bf16.mxu0 0
    %1211 = vmatpush1.bf16.msra.mxu0 0
    %1212 = vmatprep.subr.bf16.mxu0 0
    %1213 = vmatpush1.bf16.msra.mxu0 0
    %1214 = vmatprep.subr.bf16.mxu0 0
    %1215 = vmatpush1.bf16.msra.mxu0 0
    %1216 = vmatprep.subr.bf16.mxu0 0
    %1217 = vmatpush1.bf16.msra.mxu0 0
    %1218 = vmatprep.subr.bf16.mxu0 0
    %1219 = vmatpush1.bf16.msra.mxu0 0
    %1220 = vmatprep.subr.bf16.mxu0 0
    %1221 = vmatpush1.bf16.msra.mxu0 0
    %1222 = vmatprep.mubr.bf16.mxu0 0
    %1223 = vmatmul.mubr.bf16.gmra.mrb[0].mxu0 %v1189
    %v1224 = vpop.f32.mrb[0].mxu0
    %v1225 = vadd.f32 0.0, %v1224
    %v1226 = vpop.f32.mrb[0].mxu0
    %v1227 = vadd.f32 0.0, %v1226
    %v1228 = vpop.f32.mrb[0].mxu0
    %v1229 = vpop.f32.mrb[0].mxu0
    %1230 = vdwg.mxu0
    %1231 = vmatprep.subr.bf16.mxu0 %v604
    %1232 = vmatpush1.bf16.msra.mxu0 %v603
    %1233 = vmatprep.subr.bf16.mxu0 %v608
    %1234 = vmatpush1.bf16.msra.mxu0 %v607
    %1235 = vmatprep.subr.bf16.mxu0 %v612
    %1236 = vmatpush1.bf16.msra.mxu0 %v611
    %1237 = vmatprep.subr.bf16.mxu0 %v616
    %1238 = vmatpush1.bf16.msra.mxu0 %v615
    %1239 = vmatprep.subr.bf16.mxu0 %v620
    %1240 = vmatpush1.bf16.msra.mxu0 %v619
    %1241 = vmatprep.subr.bf16.mxu0 %v624
    %1242 = vmatpush1.bf16.msra.mxu0 %v623
    %1243 = vmatprep.subr.bf16.mxu0 %v628
    %1244 = vmatpush1.bf16.msra.mxu0 %v627
    %1245 = vmatprep.subr.bf16.mxu0 %v632
    %1246 = vmatpush1.bf16.msra.mxu0 %v631
    %1247 = vmatprep.subr.bf16.mxu0 0
    %1248 = vmatpush1.bf16.msra.mxu0 0
    %1249 = vmatprep.subr.bf16.mxu0 0
    %1250 = vmatpush1.bf16.msra.mxu0 0
    %1251 = vmatprep.subr.bf16.mxu0 0
    %1252 = vmatpush1.bf16.msra.mxu0 0
    %1253 = vmatprep.subr.bf16.mxu0 0
    %1254 = vmatpush1.bf16.msra.mxu0 0
    %1255 = vmatprep.subr.bf16.mxu0 0
    %1256 = vmatpush1.bf16.msra.mxu0 0
    %1257 = vmatprep.subr.bf16.mxu0 0
    %1258 = vmatpush1.bf16.msra.mxu0 0
    %1259 = vmatprep.subr.bf16.mxu0 0
    %1260 = vmatpush1.bf16.msra.mxu0 0
    %1261 = vmatprep.subr.bf16.mxu0 0
    %1262 = vmatpush1.bf16.msra.mxu0 0
    %1263 = vmatprep.mubr.bf16.mxu0 0
    %1264 = vmatmul.mubr.bf16.gmra.mrb[0].mxu0 %v1189
    %v1265 = vpop.f32.mrb[0].mxu0
    %v1266 = vadd.f32 0.0, %v1265
    %v1267 = vpop.f32.mrb[0].mxu0
    %v1268 = vadd.f32 0.0, %v1267
    %v1269 = vpop.f32.mrb[0].mxu0
    %v1270 = vpop.f32.mrb[0].mxu0
    %1271 = vdwg.mxu0
    %v1272 = vadd.f32 %v382, %v1225
    %v1273 = vadd.f32 %v384, %v1227
    %v1274 = vadd.f32 %v455, %v1266
    %v1275 = vadd.f32 %v457, %v1268
    %v1276 = vadd.f32 %v1272, %v755
    %v1277 = vadd.f32 %v1273, %v759
    %v1278 = vadd.f32 %v1274, %v763
    %v1279 = vadd.f32 %v1275, %v767
    %v1280 = vmul.f32 %v1276, %v116
    %v1281 = vmul.f32 %v1277, %v117
    %v1282 = vmul.f32 %v1278, %v118
    %v1283 = vmul.f32 %v1279, %v119
    %v1284 = vxor.u32 %v1280, 2147483648
    %v1285 = vxor.u32 %v1281, 2147483648
    %v1286 = vxor.u32 %v1282, 2147483648
    %v1287 = vxor.u32 %v1283, 2147483648
    %v1288 = vmul.f32 %v1284, 1.442695
    %v1289 = vpow.pop %v1288
    %v1290 = vmul.f32 %v1285, 1.442695
    %v1291 = vpow.pop %v1290
    %v1292 = vmul.f32 %v1286, 1.442695
    %v1293 = vpow.pop %v1292
    %v1294 = vmul.f32 %v1287, 1.442695
    %v1295 = vpow.pop %v1294
    %v1296 = vadd.f32 %v1289, 1.0
    %v1297 = vadd.f32 %v1291, 1.0
    %v1298 = vadd.f32 %v1293, 1.0
    %v1299 = vadd.f32 %v1295, 1.0
    %v1300 = vrcp.pop %v1296
    %v1301 = vmul.f32 1.0, %v1300
    %v1302 = vrcp.pop %v1297
    %v1303 = vmul.f32 1.0, %v1302
    %v1304 = vrcp.pop %v1298
    %v1305 = vmul.f32 1.0, %v1304
    %v1306 = vrcp.pop %v1299
    %v1307 = vmul.f32 1.0, %v1306
    %v1308 = vmul.f32 %v1305, 2.0
    %v1309 = vsub.f32 %v1308, 1.0
    %v1310 = vmul.f32 %v1303, %v1186
    %v1311 = vmul.f32 %v1301, %v1309
    %v1312 = vadd.f32 %v1310, %v1311
    %v1313 = vtanh.pop %v1312
    %v1314 = vmul.f32 %v1307, %v1313
    %v1315 = vpack.c.bf16 %v1314, %v1314
    %1316 = vmatprep.subr.bf16.mxu0 %v602
    %1317 = vmatpush1.bf16.msra.mxu0 %v601
    %1318 = vmatprep.subr.bf16.mxu0 %v606
    %1319 = vmatpush1.bf16.msra.mxu0 %v605
    %1320 = vmatprep.subr.bf16.mxu0 %v610
    %1321 = vmatpush1.bf16.msra.mxu0 %v609
    %1322 = vmatprep.subr.bf16.mxu0 %v614
    %1323 = vmatpush1.bf16.msra.mxu0 %v613
    %1324 = vmatprep.subr.bf16.mxu0 %v618
    %1325 = vmatpush1.bf16.msra.mxu0 %v617
    %1326 = vmatprep.subr.bf16.mxu0 %v622
    %1327 = vmatpush1.bf16.msra.mxu0 %v621
    %1328 = vmatprep.subr.bf16.mxu0 %v626
    %1329 = vmatpush1.bf16.msra.mxu0 %v625
    %1330 = vmatprep.subr.bf16.mxu0 %v630
    %1331 = vmatpush1.bf16.msra.mxu0 %v629
    %1332 = vmatprep.subr.bf16.mxu0 0
    %1333 = vmatpush1.bf16.msra.mxu0 0
    %1334 = vmatprep.subr.bf16.mxu0 0
    %1335 = vmatpush1.bf16.msra.mxu0 0
    %1336 = vmatprep.subr.bf16.mxu0 0
    %1337 = vmatpush1.bf16.msra.mxu0 0
    %1338 = vmatprep.subr.bf16.mxu0 0
    %1339 = vmatpush1.bf16.msra.mxu0 0
    %1340 = vmatprep.subr.bf16.mxu0 0
    %1341 = vmatpush1.bf16.msra.mxu0 0
    %1342 = vmatprep.subr.bf16.mxu0 0
    %1343 = vmatpush1.bf16.msra.mxu0 0
    %1344 = vmatprep.subr.bf16.mxu0 0
    %1345 = vmatpush1.bf16.msra.mxu0 0
    %1346 = vmatprep.subr.bf16.mxu0 0
    %1347 = vmatpush1.bf16.msra.mxu0 0
    %1348 = vmatprep.mubr.bf16.mxu0 0
    %1349 = vmatmul.mubr.bf16.gmra.mrb[0].mxu0 %v1315
    %v1350 = vpop.f32.mrb[0].mxu0
    %v1351 = vadd.f32 0.0, %v1350
    %v1352 = vpop.f32.mrb[0].mxu0
    %v1353 = vadd.f32 0.0, %v1352
    %v1354 = vpop.f32.mrb[0].mxu0
    %v1355 = vpop.f32.mrb[0].mxu0
    %1356 = vdwg.mxu0
    %1357 = vmatprep.subr.bf16.mxu0 %v604
    %1358 = vmatpush1.bf16.msra.mxu0 %v603
    %1359 = vmatprep.subr.bf16.mxu0 %v608
    %1360 = vmatpush1.bf16.msra.mxu0 %v607
    %1361 = vmatprep.subr.bf16.mxu0 %v612
    %1362 = vmatpush1.bf16.msra.mxu0 %v611
    %1363 = vmatprep.subr.bf16.mxu0 %v616
    %1364 = vmatpush1.bf16.msra.mxu0 %v615
    %1365 = vmatprep.subr.bf16.mxu0 %v620
    %1366 = vmatpush1.bf16.msra.mxu0 %v619
    %1367 = vmatprep.subr.bf16.mxu0 %v624
    %1368 = vmatpush1.bf16.msra.mxu0 %v623
    %1369 = vmatprep.subr.bf16.mxu0 %v628
    %1370 = vmatpush1.bf16.msra.mxu0 %v627
    %1371 = vmatprep.subr.bf16.mxu0 %v632
    %1372 = vmatpush1.bf16.msra.mxu0 %v631
    %1373 = vmatprep.subr.bf16.mxu0 0
    %1374 = vmatpush1.bf16.msra.mxu0 0
    %1375 = vmatprep.subr.bf16.mxu0 0
    %1376 = vmatpush1.bf16.msra.mxu0 0
    %1377 = vmatprep.subr.bf16.mxu0 0
    %1378 = vmatpush1.bf16.msra.mxu0 0
    %1379 = vmatprep.subr.bf16.mxu0 0
    %1380 = vmatpush1.bf16.msra.mxu0 0
    %1381 = vmatprep.subr.bf16.mxu0 0
    %1382 = vmatpush1.bf16.msra.mxu0 0
    %1383 = vmatprep.subr.bf16.mxu0 0
    %1384 = vmatpush1.bf16.msra.mxu0 0
    %1385 = vmatprep.subr.bf16.mxu0 0
    %1386 = vmatpush1.bf16.msra.mxu0 0
    %1387 = vmatprep.subr.bf16.mxu0 0
    %1388 = vmatpush1.bf16.msra.mxu0 0
    %1389 = vmatprep.mubr.bf16.mxu0 0
    %1390 = vmatmul.mubr.bf16.gmra.mrb[0].mxu0 %v1315
    %v1391 = vpop.f32.mrb[0].mxu0
    %v1392 = vadd.f32 0.0, %v1391
    %v1393 = vpop.f32.mrb[0].mxu0
    %v1394 = vadd.f32 0.0, %v1393
    %v1395 = vpop.f32.mrb[0].mxu0
    %v1396 = vpop.f32.mrb[0].mxu0
    %1397 = vdwg.mxu0
    %v1398 = vadd.f32 %v386, %v1351
    %v1399 = vadd.f32 %v388, %v1353
    %v1400 = vadd.f32 %v459, %v1392
    %v1401 = vadd.f32 %v461, %v1394
    %v1402 = vadd.f32 %v1398, %v755
    %v1403 = vadd.f32 %v1399, %v759
    %v1404 = vadd.f32 %v1400, %v763
    %v1405 = vadd.f32 %v1401, %v767
    %v1406 = vmul.f32 %v1402, %v116
    %v1407 = vmul.f32 %v1403, %v117
    %v1408 = vmul.f32 %v1404, %v118
    %v1409 = vmul.f32 %v1405, %v119
    %v1410 = vxor.u32 %v1406, 2147483648
    %v1411 = vxor.u32 %v1407, 2147483648
    %v1412 = vxor.u32 %v1408, 2147483648
    %v1413 = vxor.u32 %v1409, 2147483648
    %v1414 = vmul.f32 %v1410, 1.442695
    %v1415 = vpow.pop %v1414
    %v1416 = vmul.f32 %v1411, 1.442695
    %v1417 = vpow.pop %v1416
    %v1418 = vmul.f32 %v1412, 1.442695
    %v1419 = vpow.pop %v1418
    %v1420 = vmul.f32 %v1413, 1.442695
    %v1421 = vpow.pop %v1420
    %v1422 = vadd.f32 %v1415, 1.0
    %v1423 = vadd.f32 %v1417, 1.0
    %v1424 = vadd.f32 %v1419, 1.0
    %v1425 = vadd.f32 %v1421, 1.0
    %v1426 = vrcp.pop %v1422
    %v1427 = vmul.f32 1.0, %v1426
    %v1428 = vrcp.pop %v1423
    %v1429 = vmul.f32 1.0, %v1428
    %v1430 = vrcp.pop %v1424
    %v1431 = vmul.f32 1.0, %v1430
    %v1432 = vrcp.pop %v1425
    %v1433 = vmul.f32 1.0, %v1432
    %v1434 = vmul.f32 %v1431, 2.0
    %v1435 = vsub.f32 %v1434, 1.0
    %v1436 = vmul.f32 %v1429, %v1312
    %v1437 = vmul.f32 %v1427, %v1435
    %v1438 = vadd.f32 %v1436, %v1437
    %v1439 = vtanh.pop %v1438
    %v1440 = vmul.f32 %v1433, %v1439
    %v1441 = vpack.c.bf16 %v1440, %v1440
    %1442 = vmatprep.subr.bf16.mxu0 %v602
    %1443 = vmatpush1.bf16.msra.mxu0 %v601
    %1444 = vmatprep.subr.bf16.mxu0 %v606
    %1445 = vmatpush1.bf16.msra.mxu0 %v605
    %1446 = vmatprep.subr.bf16.mxu0 %v610
    %1447 = vmatpush1.bf16.msra.mxu0 %v609
    %1448 = vmatprep.subr.bf16.mxu0 %v614
    %1449 = vmatpush1.bf16.msra.mxu0 %v613
    %1450 = vmatprep.subr.bf16.mxu0 %v618
    %1451 = vmatpush1.bf16.msra.mxu0 %v617
    %1452 = vmatprep.subr.bf16.mxu0 %v622
    %1453 = vmatpush1.bf16.msra.mxu0 %v621
    %1454 = vmatprep.subr.bf16.mxu0 %v626
    %1455 = vmatpush1.bf16.msra.mxu0 %v625
    %1456 = vmatprep.subr.bf16.mxu0 %v630
    %1457 = vmatpush1.bf16.msra.mxu0 %v629
    %1458 = vmatprep.subr.bf16.mxu0 0
    %1459 = vmatpush1.bf16.msra.mxu0 0
    %1460 = vmatprep.subr.bf16.mxu0 0
    %1461 = vmatpush1.bf16.msra.mxu0 0
    %1462 = vmatprep.subr.bf16.mxu0 0
    %1463 = vmatpush1.bf16.msra.mxu0 0
    %1464 = vmatprep.subr.bf16.mxu0 0
    %1465 = vmatpush1.bf16.msra.mxu0 0
    %1466 = vmatprep.subr.bf16.mxu0 0
    %1467 = vmatpush1.bf16.msra.mxu0 0
    %1468 = vmatprep.subr.bf16.mxu0 0
    %1469 = vmatpush1.bf16.msra.mxu0 0
    %1470 = vmatprep.subr.bf16.mxu0 0
    %1471 = vmatpush1.bf16.msra.mxu0 0
    %1472 = vmatprep.subr.bf16.mxu0 0
    %1473 = vmatpush1.bf16.msra.mxu0 0
    %1474 = vmatprep.mubr.bf16.mxu0 0
    %1475 = vmatmul.mubr.bf16.gmra.mrb[0].mxu0 %v1441
    %v1476 = vpop.f32.mrb[0].mxu0
    %v1477 = vadd.f32 0.0, %v1476
    %v1478 = vpop.f32.mrb[0].mxu0
    %v1479 = vadd.f32 0.0, %v1478
    %v1480 = vpop.f32.mrb[0].mxu0
    %v1481 = vpop.f32.mrb[0].mxu0
    %1482 = vdwg.mxu0
    %1483 = vmatprep.subr.bf16.mxu0 %v604
    %1484 = vmatpush1.bf16.msra.mxu0 %v603
    %1485 = vmatprep.subr.bf16.mxu0 %v608
    %1486 = vmatpush1.bf16.msra.mxu0 %v607
    %1487 = vmatprep.subr.bf16.mxu0 %v612
    %1488 = vmatpush1.bf16.msra.mxu0 %v611
    %1489 = vmatprep.subr.bf16.mxu0 %v616
    %1490 = vmatpush1.bf16.msra.mxu0 %v615
    %1491 = vmatprep.subr.bf16.mxu0 %v620
    %1492 = vmatpush1.bf16.msra.mxu0 %v619
    %1493 = vmatprep.subr.bf16.mxu0 %v624
    %1494 = vmatpush1.bf16.msra.mxu0 %v623
    %1495 = vmatprep.subr.bf16.mxu0 %v628
    %1496 = vmatpush1.bf16.msra.mxu0 %v627
    %1497 = vmatprep.subr.bf16.mxu0 %v632
    %1498 = vmatpush1.bf16.msra.mxu0 %v631
    %1499 = vmatprep.subr.bf16.mxu0 0
    %1500 = vmatpush1.bf16.msra.mxu0 0
    %1501 = vmatprep.subr.bf16.mxu0 0
    %1502 = vmatpush1.bf16.msra.mxu0 0
    %1503 = vmatprep.subr.bf16.mxu0 0
    %1504 = vmatpush1.bf16.msra.mxu0 0
    %1505 = vmatprep.subr.bf16.mxu0 0
    %1506 = vmatpush1.bf16.msra.mxu0 0
    %1507 = vmatprep.subr.bf16.mxu0 0
    %1508 = vmatpush1.bf16.msra.mxu0 0
    %1509 = vmatprep.subr.bf16.mxu0 0
    %1510 = vmatpush1.bf16.msra.mxu0 0
    %1511 = vmatprep.subr.bf16.mxu0 0
    %1512 = vmatpush1.bf16.msra.mxu0 0
    %1513 = vmatprep.subr.bf16.mxu0 0
    %1514 = vmatpush1.bf16.msra.mxu0 0
    %1515 = vmatprep.mubr.bf16.mxu0 0
    %1516 = vmatmul.mubr.bf16.gmra.mrb[0].mxu0 %v1441
    %v1517 = vpop.f32.mrb[0].mxu0
    %v1518 = vadd.f32 0.0, %v1517
    %v1519 = vpop.f32.mrb[0].mxu0
    %v1520 = vadd.f32 0.0, %v1519
    %v1521 = vpop.f32.mrb[0].mxu0
    %v1522 = vpop.f32.mrb[0].mxu0
    %1523 = vdwg.mxu0
    %v1524 = vadd.f32 %v392, %v1477
    %v1525 = vadd.f32 %v394, %v1479
    %v1526 = vadd.f32 %v465, %v1518
    %v1527 = vadd.f32 %v467, %v1520
    %v1528 = vadd.f32 %v1524, %v755
    %v1529 = vadd.f32 %v1525, %v759
    %v1530 = vadd.f32 %v1526, %v763
    %v1531 = vadd.f32 %v1527, %v767
    %v1532 = vmul.f32 %v1528, %v116
    %v1533 = vmul.f32 %v1529, %v117
    %v1534 = vmul.f32 %v1530, %v118
    %v1535 = vmul.f32 %v1531, %v119
    %v1536 = vxor.u32 %v1532, 2147483648
    %v1537 = vxor.u32 %v1533, 2147483648
    %v1538 = vxor.u32 %v1534, 2147483648
    %v1539 = vxor.u32 %v1535, 2147483648
    %v1540 = vmul.f32 %v1536, 1.442695
    %v1541 = vpow.pop %v1540
    %v1542 = vmul.f32 %v1537, 1.442695
    %v1543 = vpow.pop %v1542
    %v1544 = vmul.f32 %v1538, 1.442695
    %v1545 = vpow.pop %v1544
    %v1546 = vmul.f32 %v1539, 1.442695
    %v1547 = vpow.pop %v1546
    %v1548 = vadd.f32 %v1541, 1.0
    %v1549 = vadd.f32 %v1543, 1.0
    %v1550 = vadd.f32 %v1545, 1.0
    %v1551 = vadd.f32 %v1547, 1.0
    %v1552 = vrcp.pop %v1548
    %v1553 = vmul.f32 1.0, %v1552
    %v1554 = vrcp.pop %v1549
    %v1555 = vmul.f32 1.0, %v1554
    %v1556 = vrcp.pop %v1550
    %v1557 = vmul.f32 1.0, %v1556
    %v1558 = vrcp.pop %v1551
    %v1559 = vmul.f32 1.0, %v1558
    %v1560 = vmul.f32 %v1557, 2.0
    %v1561 = vsub.f32 %v1560, 1.0
    %v1562 = vmul.f32 %v1555, %v1438
    %v1563 = vmul.f32 %v1553, %v1561
    %v1564 = vadd.f32 %v1562, %v1563
    %v1565 = vtanh.pop %v1564
    %v1566 = vmul.f32 %v1559, %v1565
    %v1567 = vpack.c.bf16 %v1566, %v1566
    %1568 = vmatprep.subr.bf16.mxu0 %v602
    %1569 = vmatpush1.bf16.msra.mxu0 %v601
    %1570 = vmatprep.subr.bf16.mxu0 %v606
    %1571 = vmatpush1.bf16.msra.mxu0 %v605
    %1572 = vmatprep.subr.bf16.mxu0 %v610
    %1573 = vmatpush1.bf16.msra.mxu0 %v609
    %1574 = vmatprep.subr.bf16.mxu0 %v614
    %1575 = vmatpush1.bf16.msra.mxu0 %v613
    %1576 = vmatprep.subr.bf16.mxu0 %v618
    %1577 = vmatpush1.bf16.msra.mxu0 %v617
    %1578 = vmatprep.subr.bf16.mxu0 %v622
    %1579 = vmatpush1.bf16.msra.mxu0 %v621
    %1580 = vmatprep.subr.bf16.mxu0 %v626
    %1581 = vmatpush1.bf16.msra.mxu0 %v625
    %1582 = vmatprep.subr.bf16.mxu0 %v630
    %1583 = vmatpush1.bf16.msra.mxu0 %v629
    %1584 = vmatprep.subr.bf16.mxu0 0
    %1585 = vmatpush1.bf16.msra.mxu0 0
    %1586 = vmatprep.subr.bf16.mxu0 0
    %1587 = vmatpush1.bf16.msra.mxu0 0
    %1588 = vmatprep.subr.bf16.mxu0 0
    %1589 = vmatpush1.bf16.msra.mxu0 0
    %1590 = vmatprep.subr.bf16.mxu0 0
    %1591 = vmatpush1.bf16.msra.mxu0 0
    %1592 = vmatprep.subr.bf16.mxu0 0
    %1593 = vmatpush1.bf16.msra.mxu0 0
    %1594 = vmatprep.subr.bf16.mxu0 0
    %1595 = vmatpush1.bf16.msra.mxu0 0
    %1596 = vmatprep.subr.bf16.mxu0 0
    %1597 = vmatpush1.bf16.msra.mxu0 0
    %1598 = vmatprep.subr.bf16.mxu0 0
    %1599 = vmatpush1.bf16.msra.mxu0 0
    %1600 = vmatprep.mubr.bf16.mxu0 0
    %1601 = vmatmul.mubr.bf16.gmra.mrb[0].mxu0 %v1567
    %v1602 = vpop.f32.mrb[0].mxu0
    %v1603 = vadd.f32 0.0, %v1602
    %v1604 = vpop.f32.mrb[0].mxu0
    %v1605 = vadd.f32 0.0, %v1604
    %v1606 = vpop.f32.mrb[0].mxu0
    %v1607 = vpop.f32.mrb[0].mxu0
    %1608 = vdwg.mxu0
    %1609 = vmatprep.subr.bf16.mxu0 %v604
    %1610 = vmatpush1.bf16.msra.mxu0 %v603
    %1611 = vmatprep.subr.bf16.mxu0 %v608
    %1612 = vmatpush1.bf16.msra.mxu0 %v607
    %1613 = vmatprep.subr.bf16.mxu0 %v612
    %1614 = vmatpush1.bf16.msra.mxu0 %v611
    %1615 = vmatprep.subr.bf16.mxu0 %v616
    %1616 = vmatpush1.bf16.msra.mxu0 %v615
    %1617 = vmatprep.subr.bf16.mxu0 %v620
    %1618 = vmatpush1.bf16.msra.mxu0 %v619
    %1619 = vmatprep.subr.bf16.mxu0 %v624
    %1620 = vmatpush1.bf16.msra.mxu0 %v623
    %1621 = vmatprep.subr.bf16.mxu0 %v628
    %1622 = vmatpush1.bf16.msra.mxu0 %v627
    %1623 = vmatprep.subr.bf16.mxu0 %v632
    %1624 = vmatpush1.bf16.msra.mxu0 %v631
    %1625 = vmatprep.subr.bf16.mxu0 0
    %1626 = vmatpush1.bf16.msra.mxu0 0
    %1627 = vmatprep.subr.bf16.mxu0 0
    %1628 = vmatpush1.bf16.msra.mxu0 0
    %1629 = vmatprep.subr.bf16.mxu0 0
    %1630 = vmatpush1.bf16.msra.mxu0 0
    %1631 = vmatprep.subr.bf16.mxu0 0
    %1632 = vmatpush1.bf16.msra.mxu0 0
    %1633 = vmatprep.subr.bf16.mxu0 0
    %1634 = vmatpush1.bf16.msra.mxu0 0
    %1635 = vmatprep.subr.bf16.mxu0 0
    %1636 = vmatpush1.bf16.msra.mxu0 0
    %1637 = vmatprep.subr.bf16.mxu0 0
    %1638 = vmatpush1.bf16.msra.mxu0 0
    %1639 = vmatprep.subr.bf16.mxu0 0
    %1640 = vmatpush1.bf16.msra.mxu0 0
    %1641 = vmatprep.mubr.bf16.mxu0 0
    %1642 = vmatmul.mubr.bf16.gmra.mrb[0].mxu0 %v1567
    %v1643 = vpop.f32.mrb[0].mxu0
    %v1644 = vadd.f32 0.0, %v1643
    %v1645 = vpop.f32.mrb[0].mxu0
    %v1646 = vadd.f32 0.0, %v1645
    %v1647 = vpop.f32.mrb[0].mxu0
    %v1648 = vpop.f32.mrb[0].mxu0
    %1649 = vdwg.mxu0
    %v1650 = vadd.f32 %v396, %v1603
    %v1651 = vadd.f32 %v398, %v1605
    %v1652 = vadd.f32 %v469, %v1644
    %v1653 = vadd.f32 %v471, %v1646
    %v1654 = vadd.f32 %v1650, %v755
    %v1655 = vadd.f32 %v1651, %v759
    %v1656 = vadd.f32 %v1652, %v763
    %v1657 = vadd.f32 %v1653, %v767
    %v1658 = vmul.f32 %v1654, %v116
    %v1659 = vmul.f32 %v1655, %v117
    %v1660 = vmul.f32 %v1656, %v118
    %v1661 = vmul.f32 %v1657, %v119
    %v1662 = vxor.u32 %v1658, 2147483648
    %v1663 = vxor.u32 %v1659, 2147483648
    %v1664 = vxor.u32 %v1660, 2147483648
    %v1665 = vxor.u32 %v1661, 2147483648
    %v1666 = vmul.f32 %v1662, 1.442695
    %v1667 = vpow.pop %v1666
    %v1668 = vmul.f32 %v1663, 1.442695
    %v1669 = vpow.pop %v1668
    %v1670 = vmul.f32 %v1664, 1.442695
    %v1671 = vpow.pop %v1670
    %v1672 = vmul.f32 %v1665, 1.442695
    %v1673 = vpow.pop %v1672
    %v1674 = vadd.f32 %v1667, 1.0
    %v1675 = vadd.f32 %v1669, 1.0
    %v1676 = vadd.f32 %v1671, 1.0
    %v1677 = vadd.f32 %v1673, 1.0
    %v1678 = vrcp.pop %v1674
    %v1679 = vmul.f32 1.0, %v1678
    %v1680 = vrcp.pop %v1675
    %v1681 = vmul.f32 1.0, %v1680
    %v1682 = vrcp.pop %v1676
    %v1683 = vmul.f32 1.0, %v1682
    %v1684 = vrcp.pop %v1677
    %v1685 = vmul.f32 1.0, %v1684
    %v1686 = vmul.f32 %v1683, 2.0
    %v1687 = vsub.f32 %v1686, 1.0
    %v1688 = vmul.f32 %v1681, %v1564
    %v1689 = vmul.f32 %v1679, %v1687
    %v1690 = vadd.f32 %v1688, %v1689
    %v1691 = vtanh.pop %v1690
    %v1692 = vmul.f32 %v1685, %v1691
    %v1693 = vld [vmem:[%s0] sm:$0xff]
    %v1694 = vpack.c.bf16 %v1693, %v1693
    %v1695 = vld [vmem:[#allocation5] sm:$0xff]
    %v1696 = vld [vmem:[#allocation5 + $0x8] sm:$0xff]
    %v1697 = vld [vmem:[#allocation5 + $0x10] sm:$0xff]
    %v1698 = vld [vmem:[#allocation5 + $0x18] sm:$0xff]
    %v1699 = vld [vmem:[#allocation5 + $0x20] sm:$0xff]
    %v1700 = vld [vmem:[#allocation5 + $0x28] sm:$0xff]
    %v1701 = vld [vmem:[#allocation5 + $0x30] sm:$0xff]
    %v1702 = vld [vmem:[#allocation5 + $0x38] sm:$0xff]
    %v1703 = vld [vmem:[#allocation5 + $0x40] sm:$0xff]
    %v1704 = vld [vmem:[#allocation5 + $0x48] sm:$0xff]
    %v1705 = vld [vmem:[#allocation5 + $0x50] sm:$0xff]
    %v1706 = vld [vmem:[#allocation5 + $0x58] sm:$0xff]
    %v1707 = vld [vmem:[#allocation5 + $0x60] sm:$0xff]
    %v1708 = vld [vmem:[#allocation5 + $0x68] sm:$0xff]
    %v1709 = vld [vmem:[#allocation5 + $0x70] sm:$0xff]
    %v1710 = vld [vmem:[#allocation5 + $0x78] sm:$0xff]
    %v1711 = vld [vmem:[#allocation5 + $0x80] sm:$0xff]
    %v1712 = vld [vmem:[#allocation5 + $0x88] sm:$0xff]
    %v1713 = vld [vmem:[#allocation5 + $0x90] sm:$0xff]
    %v1714 = vld [vmem:[#allocation5 + $0x98] sm:$0xff]
    %v1715 = vld [vmem:[#allocation5 + $0xa0] sm:$0xff]
    %v1716 = vld [vmem:[#allocation5 + $0xa8] sm:$0xff]
    %v1717 = vld [vmem:[#allocation5 + $0xb0] sm:$0xff]
    %v1718 = vld [vmem:[#allocation5 + $0xb8] sm:$0xff]
    %v1719 = vld [vmem:[#allocation5 + $0xc0] sm:$0xff]
    %v1720 = vld [vmem:[#allocation5 + $0xc8] sm:$0xff]
    %v1721 = vld [vmem:[#allocation5 + $0xd0] sm:$0xff]
    %v1722 = vld [vmem:[#allocation5 + $0xd8] sm:$0xff]
    %v1723 = vld [vmem:[#allocation5 + $0xe0] sm:$0xff]
    %v1724 = vld [vmem:[#allocation5 + $0xe8] sm:$0xff]
    %v1725 = vld [vmem:[#allocation5 + $0xf0] sm:$0xff]
    %v1726 = vld [vmem:[#allocation5 + $0xf8] sm:$0xff]
    %v1727 = vpack.c.bf16 %v1692, %v1692
    %v1728 = vld [vmem:[#allocation7] sm:$0xff]
    %v1729 = vld [vmem:[#allocation7 + $0x8] sm:$0xff]
    %v1730 = vld [vmem:[#allocation7 + $0x10] sm:$0xff]
    %v1731 = vld [vmem:[#allocation7 + $0x18] sm:$0xff]
    %v1732 = vld [vmem:[#allocation7 + $0x20] sm:$0xff]
    %v1733 = vld [vmem:[#allocation7 + $0x28] sm:$0xff]
    %v1734 = vld [vmem:[#allocation7 + $0x30] sm:$0xff]
    %v1735 = vld [vmem:[#allocation7 + $0x38] sm:$0xff]
    %v1736 = vld [vmem:[#allocation7 + $0x40] sm:$0xff]
    %v1737 = vld [vmem:[#allocation7 + $0x48] sm:$0xff]
    %v1738 = vld [vmem:[#allocation7 + $0x50] sm:$0xff]
    %v1739 = vld [vmem:[#allocation7 + $0x58] sm:$0xff]
    %v1740 = vld [vmem:[#allocation7 + $0x60] sm:$0xff]
    %v1741 = vld [vmem:[#allocation7 + $0x68] sm:$0xff]
    %v1742 = vld [vmem:[#allocation7 + $0x70] sm:$0xff]
    %v1743 = vld [vmem:[#allocation7 + $0x78] sm:$0xff]
    %v1744 = vld [vmem:[#allocation7 + $0x80] sm:$0xff]
    %v1745 = vld [vmem:[#allocation7 + $0x88] sm:$0xff]
    %v1746 = vld [vmem:[#allocation7 + $0x90] sm:$0xff]
    %v1747 = vld [vmem:[#allocation7 + $0x98] sm:$0xff]
    %v1748 = vld [vmem:[#allocation7 + $0xa0] sm:$0xff]
    %v1749 = vld [vmem:[#allocation7 + $0xa8] sm:$0xff]
    %v1750 = vld [vmem:[#allocation7 + $0xb0] sm:$0xff]
    %v1751 = vld [vmem:[#allocation7 + $0xb8] sm:$0xff]
    %v1752 = vld [vmem:[#allocation7 + $0xc0] sm:$0xff]
    %v1753 = vld [vmem:[#allocation7 + $0xc8] sm:$0xff]
    %v1754 = vld [vmem:[#allocation7 + $0xd0] sm:$0xff]
    %v1755 = vld [vmem:[#allocation7 + $0xd8] sm:$0xff]
    %v1756 = vld [vmem:[#allocation7 + $0xe0] sm:$0xff]
    %v1757 = vld [vmem:[#allocation7 + $0xe8] sm:$0xff]
    %v1758 = vld [vmem:[#allocation7 + $0xf0] sm:$0xff]
    %v1759 = vld [vmem:[#allocation7 + $0xf8] sm:$0xff]
    %v1792 = vunpack.c.l.b16 %v1728
    %v1793 = vunpack.c.h.b16 %v1728
    %v1794 = vunpack.c.l.b16 %v1729
    %v1795 = vunpack.c.h.b16 %v1729
    %v1796 = vunpack.c.l.b16 %v1730
    %v1797 = vunpack.c.h.b16 %v1730
    %v1798 = vunpack.c.l.b16 %v1731
    %v1799 = vunpack.c.h.b16 %v1731
    %v1800 = vunpack.c.l.b16 %v1732
    %v1801 = vunpack.c.h.b16 %v1732
    %v1802 = vunpack.c.l.b16 %v1733
    %v1803 = vunpack.c.h.b16 %v1733
    %v1804 = vunpack.c.l.b16 %v1734
    %v1805 = vunpack.c.h.b16 %v1734
    %v1806 = vunpack.c.l.b16 %v1735
    %v1807 = vunpack.c.h.b16 %v1735
    %v1808 = vunpack.c.l.b16 %v1736
    %v1809 = vunpack.c.h.b16 %v1736
    %v1810 = vunpack.c.l.b16 %v1737
    %v1811 = vunpack.c.h.b16 %v1737
    %v1812 = vunpack.c.l.b16 %v1738
    %v1813 = vunpack.c.h.b16 %v1738
    %v1814 = vunpack.c.l.b16 %v1739
    %v1815 = vunpack.c.h.b16 %v1739
    %v1816 = vunpack.c.l.b16 %v1740
    %v1817 = vunpack.c.h.b16 %v1740
    %v1818 = vunpack.c.l.b16 %v1741
    %v1819 = vunpack.c.h.b16 %v1741
    %v1820 = vunpack.c.l.b16 %v1742
    %v1821 = vunpack.c.h.b16 %v1742
    %v1822 = vunpack.c.l.b16 %v1743
    %v1823 = vunpack.c.h.b16 %v1743
    %v1824 = vunpack.c.l.b16 %v1744
    %v1825 = vunpack.c.h.b16 %v1744
    %v1826 = vunpack.c.l.b16 %v1745
    %v1827 = vunpack.c.h.b16 %v1745
    %v1828 = vunpack.c.l.b16 %v1746
    %v1829 = vunpack.c.h.b16 %v1746
    %v1830 = vunpack.c.l.b16 %v1747
    %v1831 = vunpack.c.h.b16 %v1747
    %v1832 = vunpack.c.l.b16 %v1748
    %v1833 = vunpack.c.h.b16 %v1748
    %v1834 = vunpack.c.l.b16 %v1749
    %v1835 = vunpack.c.h.b16 %v1749
    %v1836 = vunpack.c.l.b16 %v1750
    %v1837 = vunpack.c.h.b16 %v1750
    %v1838 = vunpack.c.l.b16 %v1751
    %v1839 = vunpack.c.h.b16 %v1751
    %v1840 = vunpack.c.l.b16 %v1752
    %v1841 = vunpack.c.h.b16 %v1752
    %v1842 = vunpack.c.l.b16 %v1753
    %v1843 = vunpack.c.h.b16 %v1753
    %v1844 = vunpack.c.l.b16 %v1754
    %v1845 = vunpack.c.h.b16 %v1754
    %v1846 = vunpack.c.l.b16 %v1755
    %v1847 = vunpack.c.h.b16 %v1755
    %v1848 = vunpack.c.l.b16 %v1756
    %v1849 = vunpack.c.h.b16 %v1756
    %v1850 = vunpack.c.l.b16 %v1757
    %v1851 = vunpack.c.h.b16 %v1757
    %v1852 = vunpack.c.l.b16 %v1758
    %v1853 = vunpack.c.h.b16 %v1758
    %v1854 = vunpack.c.l.b16 %v1759
    %v1855 = vunpack.c.h.b16 %v1759
    %v1856 = vpack.c.b16 %v1796, %v1792
    %v1857 = vpack.c.b16 %v1797, %v1793
    %v1858 = vpack.c.b16 %v1798, %v1794
    %v1859 = vpack.c.b16 %v1799, %v1795
    %v1860 = vpack.c.b16 %v1804, %v1800
    %v1861 = vpack.c.b16 %v1805, %v1801
    %v1862 = vpack.c.b16 %v1806, %v1802
    %v1863 = vpack.c.b16 %v1807, %v1803
    %v1864 = vpack.c.b16 %v1812, %v1808
    %v1865 = vpack.c.b16 %v1813, %v1809
    %v1866 = vpack.c.b16 %v1814, %v1810
    %v1867 = vpack.c.b16 %v1815, %v1811
    %v1868 = vpack.c.b16 %v1820, %v1816
    %v1869 = vpack.c.b16 %v1821, %v1817
    %v1870 = vpack.c.b16 %v1822, %v1818
    %v1871 = vpack.c.b16 %v1823, %v1819
    %v1872 = vpack.c.b16 %v1828, %v1824
    %v1873 = vpack.c.b16 %v1829, %v1825
    %v1874 = vpack.c.b16 %v1830, %v1826
    %v1875 = vpack.c.b16 %v1831, %v1827
    %v1876 = vpack.c.b16 %v1836, %v1832
    %v1877 = vpack.c.b16 %v1837, %v1833
    %v1878 = vpack.c.b16 %v1838, %v1834
    %v1879 = vpack.c.b16 %v1839, %v1835
    %v1880 = vpack.c.b16 %v1844, %v1840
    %v1881 = vpack.c.b16 %v1845, %v1841
    %v1882 = vpack.c.b16 %v1846, %v1842
    %v1883 = vpack.c.b16 %v1847, %v1843
    %v1884 = vpack.c.b16 %v1852, %v1848
    %v1885 = vpack.c.b16 %v1853, %v1849
    %v1886 = vpack.c.b16 %v1854, %v1850
    %v1887 = vpack.c.b16 %v1855, %v1851
    %1920 = vmatprep.subr.bf16.mxu0 %v1857
    %1921 = vmatpush1.bf16.msra.mxu0 %v1856
    %1922 = vmatprep.subr.bf16.mxu0 %v1861
    %1923 = vmatpush1.bf16.msra.mxu0 %v1860
    %1924 = vmatprep.subr.bf16.mxu0 %v1865
    %1925 = vmatpush1.bf16.msra.mxu0 %v1864
    %1926 = vmatprep.subr.bf16.mxu0 %v1869
    %1927 = vmatpush1.bf16.msra.mxu0 %v1868
    %1928 = vmatprep.subr.bf16.mxu0 %v1873
    %1929 = vmatpush1.bf16.msra.mxu0 %v1872
    %1930 = vmatprep.subr.bf16.mxu0 %v1877
    %1931 = vmatpush1.bf16.msra.mxu0 %v1876
    %1932 = vmatprep.subr.bf16.mxu0 %v1881
    %1933 = vmatpush1.bf16.msra.mxu0 %v1880
    %1934 = vmatprep.subr.bf16.mxu0 %v1885
    %1935 = vmatpush1.bf16.msra.mxu0 %v1884
    %1936 = vmatprep.subr.bf16.mxu0 0
    %1937 = vmatpush1.bf16.msra.mxu0 0
    %1938 = vmatprep.subr.bf16.mxu0 0
    %1939 = vmatpush1.bf16.msra.mxu0 0
    %1940 = vmatprep.subr.bf16.mxu0 0
    %1941 = vmatpush1.bf16.msra.mxu0 0
    %1942 = vmatprep.subr.bf16.mxu0 0
    %1943 = vmatpush1.bf16.msra.mxu0 0
    %1944 = vmatprep.subr.bf16.mxu0 0
    %1945 = vmatpush1.bf16.msra.mxu0 0
    %1946 = vmatprep.subr.bf16.mxu0 0
    %1947 = vmatpush1.bf16.msra.mxu0 0
    %1948 = vmatprep.subr.bf16.mxu0 0
    %1949 = vmatpush1.bf16.msra.mxu0 0
    %1950 = vmatprep.subr.bf16.mxu0 0
    %1951 = vmatpush1.bf16.msra.mxu0 0
    %1952 = vmatprep.mubr.bf16.mxu0 0
    %1953 = vmatmul.mubr.bf16.gmra.mrb[0].mxu0 %v1727
    %v1954 = vpop.f32.mrb[0].mxu0
    %v1955 = vadd.f32 0.0, %v1954
    %v1956 = vpop.f32.mrb[0].mxu0
    %v1957 = vadd.f32 0.0, %v1956
    %v1958 = vpop.f32.mrb[0].mxu0
    %v1959 = vpop.f32.mrb[0].mxu0
    %1960 = vdwg.mxu0
    %1961 = vmatprep.subr.bf16.mxu0 %v1859
    %1962 = vmatpush1.bf16.msra.mxu0 %v1858
    %1963 = vmatprep.subr.bf16.mxu0 %v1863
    %1964 = vmatpush1.bf16.msra.mxu0 %v1862
    %1965 = vmatprep.subr.bf16.mxu0 %v1867
    %1966 = vmatpush1.bf16.msra.mxu0 %v1866
    %1967 = vmatprep.subr.bf16.mxu0 %v1871
    %1968 = vmatpush1.bf16.msra.mxu0 %v1870
    %1969 = vmatprep.subr.bf16.mxu0 %v1875
    %1970 = vmatpush1.bf16.msra.mxu0 %v1874
    %1971 = vmatprep.subr.bf16.mxu0 %v1879
    %1972 = vmatpush1.bf16.msra.mxu0 %v1878
    %1973 = vmatprep.subr.bf16.mxu0 %v1883
    %1974 = vmatpush1.bf16.msra.mxu0 %v1882
    %1975 = vmatprep.subr.bf16.mxu0 %v1887
    %1976 = vmatpush1.bf16.msra.mxu0 %v1886
    %1977 = vmatprep.subr.bf16.mxu0 0
    %1978 = vmatpush1.bf16.msra.mxu0 0
    %1979 = vmatprep.subr.bf16.mxu0 0
    %1980 = vmatpush1.bf16.msra.mxu0 0
    %1981 = vmatprep.subr.bf16.mxu0 0
    %1982 = vmatpush1.bf16.msra.mxu0 0
    %1983 = vmatprep.subr.bf16.mxu0 0
    %1984 = vmatpush1.bf16.msra.mxu0 0
    %1985 = vmatprep.subr.bf16.mxu0 0
    %1986 = vmatpush1.bf16.msra.mxu0 0
    %1987 = vmatprep.subr.bf16.mxu0 0
    %1988 = vmatpush1.bf16.msra.mxu0 0
    %1989 = vmatprep.subr.bf16.mxu0 0
    %1990 = vmatpush1.bf16.msra.mxu0 0
    %1991 = vmatprep.subr.bf16.mxu0 0
    %1992 = vmatpush1.bf16.msra.mxu0 0
    %1993 = vmatprep.mubr.bf16.mxu0 0
    %1994 = vmatmul.mubr.bf16.gmra.mrb[0].mxu0 %v1727
    %v1995 = vpop.f32.mrb[0].mxu0
    %v1996 = vadd.f32 0.0, %v1995
    %v1997 = vpop.f32.mrb[0].mxu0
    %v1998 = vadd.f32 0.0, %v1997
    %v1999 = vpop.f32.mrb[0].mxu0
    %v2000 = vpop.f32.mrb[0].mxu0
    %2001 = vdwg.mxu0
    %v2034 = vunpack.c.l.b16 %v1695
    %v2035 = vunpack.c.h.b16 %v1695
    %v2036 = vunpack.c.l.b16 %v1696
    %v2037 = vunpack.c.h.b16 %v1696
    %v2038 = vunpack.c.l.b16 %v1697
    %v2039 = vunpack.c.h.b16 %v1697
    %v2040 = vunpack.c.l.b16 %v1698
    %v2041 = vunpack.c.h.b16 %v1698
    %v2042 = vunpack.c.l.b16 %v1699
    %v2043 = vunpack.c.h.b16 %v1699
    %v2044 = vunpack.c.l.b16 %v1700
    %v2045 = vunpack.c.h.b16 %v1700
    %v2046 = vunpack.c.l.b16 %v1701
    %v2047 = vunpack.c.h.b16 %v1701
    %v2048 = vunpack.c.l.b16 %v1702
    %v2049 = vunpack.c.h.b16 %v1702
    %v2050 = vunpack.c.l.b16 %v1703
    %v2051 = vunpack.c.h.b16 %v1703
    %v2052 = vunpack.c.l.b16 %v1704
    %v2053 = vunpack.c.h.b16 %v1704
    %v2054 = vunpack.c.l.b16 %v1705
    %v2055 = vunpack.c.h.b16 %v1705
    %v2056 = vunpack.c.l.b16 %v1706
    %v2057 = vunpack.c.h.b16 %v1706
    %v2058 = vunpack.c.l.b16 %v1707
    %v2059 = vunpack.c.h.b16 %v1707
    %v2060 = vunpack.c.l.b16 %v1708
    %v2061 = vunpack.c.h.b16 %v1708
    %v2062 = vunpack.c.l.b16 %v1709
    %v2063 = vunpack.c.h.b16 %v1709
    %v2064 = vunpack.c.l.b16 %v1710
    %v2065 = vunpack.c.h.b16 %v1710
    %v2066 = vunpack.c.l.b16 %v1711
    %v2067 = vunpack.c.h.b16 %v1711
    %v2068 = vunpack.c.l.b16 %v1712
    %v2069 = vunpack.c.h.b16 %v1712
    %v2070 = vunpack.c.l.b16 %v1713
    %v2071 = vunpack.c.h.b16 %v1713
    %v2072 = vunpack.c.l.b16 %v1714
    %v2073 = vunpack.c.h.b16 %v1714
    %v2074 = vunpack.c.l.b16 %v1715
    %v2075 = vunpack.c.h.b16 %v1715
    %v2076 = vunpack.c.l.b16 %v1716
    %v2077 = vunpack.c.h.b16 %v1716
    %v2078 = vunpack.c.l.b16 %v1717
    %v2079 = vunpack.c.h.b16 %v1717
    %v2080 = vunpack.c.l.b16 %v1718
    %v2081 = vunpack.c.h.b16 %v1718
    %v2082 = vunpack.c.l.b16 %v1719
    %v2083 = vunpack.c.h.b16 %v1719
    %v2084 = vunpack.c.l.b16 %v1720
    %v2085 = vunpack.c.h.b16 %v1720
    %v2086 = vunpack.c.l.b16 %v1721
    %v2087 = vunpack.c.h.b16 %v1721
    %v2088 = vunpack.c.l.b16 %v1722
    %v2089 = vunpack.c.h.b16 %v1722
    %v2090 = vunpack.c.l.b16 %v1723
    %v2091 = vunpack.c.h.b16 %v1723
    %v2092 = vunpack.c.l.b16 %v1724
    %v2093 = vunpack.c.h.b16 %v1724
    %v2094 = vunpack.c.l.b16 %v1725
    %v2095 = vunpack.c.h.b16 %v1725
    %v2096 = vunpack.c.l.b16 %v1726
    %v2097 = vunpack.c.h.b16 %v1726
    %v2098 = vpack.c.b16 %v2038, %v2034
    %v2099 = vpack.c.b16 %v2039, %v2035
    %v2100 = vpack.c.b16 %v2040, %v2036
    %v2101 = vpack.c.b16 %v2041, %v2037
    %v2102 = vpack.c.b16 %v2046, %v2042
    %v2103 = vpack.c.b16 %v2047, %v2043
    %v2104 = vpack.c.b16 %v2048, %v2044
    %v2105 = vpack.c.b16 %v2049, %v2045
    %v2106 = vpack.c.b16 %v2054, %v2050
    %v2107 = vpack.c.b16 %v2055, %v2051
    %v2108 = vpack.c.b16 %v2056, %v2052
    %v2109 = vpack.c.b16 %v2057, %v2053
    %v2110 = vpack.c.b16 %v2062, %v2058
    %v2111 = vpack.c.b16 %v2063, %v2059
    %v2112 = vpack.c.b16 %v2064, %v2060
    %v2113 = vpack.c.b16 %v2065, %v2061
    %v2114 = vpack.c.b16 %v2070, %v2066
    %v2115 = vpack.c.b16 %v2071, %v2067
    %v2116 = vpack.c.b16 %v2072, %v2068
    %v2117 = vpack.c.b16 %v2073, %v2069
    %v2118 = vpack.c.b16 %v2078, %v2074
    %v2119 = vpack.c.b16 %v2079, %v2075
    %v2120 = vpack.c.b16 %v2080, %v2076
    %v2121 = vpack.c.b16 %v2081, %v2077
    %v2122 = vpack.c.b16 %v2086, %v2082
    %v2123 = vpack.c.b16 %v2087, %v2083
    %v2124 = vpack.c.b16 %v2088, %v2084
    %v2125 = vpack.c.b16 %v2089, %v2085
    %v2126 = vpack.c.b16 %v2094, %v2090
    %v2127 = vpack.c.b16 %v2095, %v2091
    %v2128 = vpack.c.b16 %v2096, %v2092
    %v2129 = vpack.c.b16 %v2097, %v2093
    %2162 = vmatprep.subr.bf16.mxu0 %v2099
    %2163 = vmatpush1.bf16.msra.mxu0 %v2098
    %2164 = vmatprep.subr.bf16.mxu0 %v2103
    %2165 = vmatpush1.bf16.msra.mxu0 %v2102
    %2166 = vmatprep.subr.bf16.mxu0 %v2107
    %2167 = vmatpush1.bf16.msra.mxu0 %v2106
    %2168 = vmatprep.subr.bf16.mxu0 %v2111
    %2169 = vmatpush1.bf16.msra.mxu0 %v2110
    %2170 = vmatprep.subr.bf16.mxu0 %v2115
    %2171 = vmatpush1.bf16.msra.mxu0 %v2114
    %2172 = vmatprep.subr.bf16.mxu0 %v2119
    %2173 = vmatpush1.bf16.msra.mxu0 %v2118
    %2174 = vmatprep.subr.bf16.mxu0 %v2123
    %2175 = vmatpush1.bf16.msra.mxu0 %v2122
    %2176 = vmatprep.subr.bf16.mxu0 %v2127
    %2177 = vmatpush1.bf16.msra.mxu0 %v2126
    %2178 = vmatprep.subr.bf16.mxu0 0
    %2179 = vmatpush1.bf16.msra.mxu0 0
    %2180 = vmatprep.subr.bf16.mxu0 0
    %2181 = vmatpush1.bf16.msra.mxu0 0
    %2182 = vmatprep.subr.bf16.mxu0 0
    %2183 = vmatpush1.bf16.msra.mxu0 0
    %2184 = vmatprep.subr.bf16.mxu0 0
    %2185 = vmatpush1.bf16.msra.mxu0 0
    %2186 = vmatprep.subr.bf16.mxu0 0
    %2187 = vmatpush1.bf16.msra.mxu0 0
    %2188 = vmatprep.subr.bf16.mxu0 0
    %2189 = vmatpush1.bf16.msra.mxu0 0
    %2190 = vmatprep.subr.bf16.mxu0 0
    %2191 = vmatpush1.bf16.msra.mxu0 0
    %2192 = vmatprep.subr.bf16.mxu0 0
    %2193 = vmatpush1.bf16.msra.mxu0 0
    %2194 = vmatprep.mubr.bf16.mxu0 0
    %2195 = vmatmul.mubr.bf16.gmra.mrb[0].mxu0 %v1694
    %v2196 = vpop.f32.mrb[0].mxu0
    %v2197 = vadd.f32 %v1955, %v2196
    %v2198 = vpop.f32.mrb[0].mxu0
    %v2199 = vadd.f32 %v1957, %v2198
    %v2200 = vpop.f32.mrb[0].mxu0
    %v2201 = vpop.f32.mrb[0].mxu0
    %2202 = vdwg.mxu0
    %2203 = vmatprep.subr.bf16.mxu0 %v2101
    %2204 = vmatpush1.bf16.msra.mxu0 %v2100
    %2205 = vmatprep.subr.bf16.mxu0 %v2105
    %2206 = vmatpush1.bf16.msra.mxu0 %v2104
    %2207 = vmatprep.subr.bf16.mxu0 %v2109
    %2208 = vmatpush1.bf16.msra.mxu0 %v2108
    %2209 = vmatprep.subr.bf16.mxu0 %v2113
    %2210 = vmatpush1.bf16.msra.mxu0 %v2112
    %2211 = vmatprep.subr.bf16.mxu0 %v2117
    %2212 = vmatpush1.bf16.msra.mxu0 %v2116
    %2213 = vmatprep.subr.bf16.mxu0 %v2121
    %2214 = vmatpush1.bf16.msra.mxu0 %v2120
    %2215 = vmatprep.subr.bf16.mxu0 %v2125
    %2216 = vmatpush1.bf16.msra.mxu0 %v2124
    %2217 = vmatprep.subr.bf16.mxu0 %v2129
    %2218 = vmatpush1.bf16.msra.mxu0 %v2128
    %2219 = vmatprep.subr.bf16.mxu0 0
    %2220 = vmatpush1.bf16.msra.mxu0 0
    %2221 = vmatprep.subr.bf16.mxu0 0
    %2222 = vmatpush1.bf16.msra.mxu0 0
    %2223 = vmatprep.subr.bf16.mxu0 0
    %2224 = vmatpush1.bf16.msra.mxu0 0
    %2225 = vmatprep.subr.bf16.mxu0 0
    %2226 = vmatpush1.bf16.msra.mxu0 0
    %2227 = vmatprep.subr.bf16.mxu0 0
    %2228 = vmatpush1.bf16.msra.mxu0 0
    %2229 = vmatprep.subr.bf16.mxu0 0
    %2230 = vmatpush1.bf16.msra.mxu0 0
    %2231 = vmatprep.subr.bf16.mxu0 0
    %2232 = vmatpush1.bf16.msra.mxu0 0
    %2233 = vmatprep.subr.bf16.mxu0 0
    %2234 = vmatpush1.bf16.msra.mxu0 0
    %2235 = vmatprep.mubr.bf16.mxu0 0
    %2236 = vmatmul.mubr.bf16.gmra.mrb[0].mxu0 %v1694
    %v2237 = vpop.f32.mrb[0].mxu0
    %v2238 = vadd.f32 %v1996, %v2237
    %v2239 = vpop.f32.mrb[0].mxu0
    %v2240 = vadd.f32 %v1998, %v2239
    %v2241 = vpop.f32.mrb[0].mxu0
    %v2242 = vpop.f32.mrb[0].mxu0
    %2243 = vdwg.mxu0
    %v2245 = vlaneseq
    %v2246 = vshrl.u32 %v2245, 7
    %v2247 = vsub.s32 0, %v2246
    %v2248 = vrot.slane %v121, %v2247
    %v2249 = vlaneseq
    %v2250 = vshrl.u32 %v2249, 7
    %v2251 = vsub.s32 1, %v2250
    %v2252 = vrot.slane %v121, %v2251
    %v2253 = vlaneseq
    %v2254 = vshrl.u32 %v2253, 7
    %v2255 = vsub.s32 2, %v2254
    %v2256 = vrot.slane %v121, %v2255
    %v2257 = vlaneseq
    %v2258 = vshrl.u32 %v2257, 7
    %v2259 = vsub.s32 3, %v2258
    %v2260 = vrot.slane %v121, %v2259
    %v2265 = vadd.f32 %v2197, %v2248
    %v2266 = vadd.f32 %v2199, %v2252
    %v2267 = vadd.f32 %v2238, %v2256
    %v2268 = vadd.f32 %v2240, %v2260
    %v2269 = vmul.f32 %v2265, %v116
    %v2270 = vmul.f32 %v2266, %v117
    %v2271 = vmul.f32 %v2267, %v118
    %v2272 = vmul.f32 %v2268, %v119
    %v2273 = vxor.u32 %v2269, 2147483648
    %v2274 = vxor.u32 %v2270, 2147483648
    %v2275 = vxor.u32 %v2271, 2147483648
    %v2276 = vxor.u32 %v2272, 2147483648
    %v2277 = vmul.f32 %v2273, 1.442695
    %v2278 = vpow.pop %v2277
    %v2279 = vmul.f32 %v2274, 1.442695
    %v2280 = vpow.pop %v2279
    %v2281 = vmul.f32 %v2275, 1.442695
    %v2282 = vpow.pop %v2281
    %v2283 = vmul.f32 %v2276, 1.442695
    %v2284 = vpow.pop %v2283
    %v2285 = vadd.f32 %v2278, 1.0
    %v2286 = vadd.f32 %v2280, 1.0
    %v2287 = vadd.f32 %v2282, 1.0
    %v2288 = vadd.f32 %v2284, 1.0
    %v2289 = vrcp.pop %v2285
    %v2290 = vmul.f32 1.0, %v2289
    %v2291 = vrcp.pop %v2286
    %v2292 = vmul.f32 1.0, %v2291
    %v2293 = vrcp.pop %v2287
    %v2294 = vmul.f32 1.0, %v2293
    %v2295 = vrcp.pop %v2288
    %v2296 = vmul.f32 1.0, %v2295
    %v2297 = vmul.f32 %v2294, 2.0
    %v2298 = vsub.f32 %v2297, 1.0
    %v2299 = vmul.f32 %v2292, %v1690
    %v2300 = vmul.f32 %v2290, %v2298
    %v2301 = vadd.f32 %v2299, %v2300
    %v2302 = vtanh.pop %v2301
    %v2303 = vmul.f32 %v2296, %v2302
    %v2304 = vpack.c.bf16 %v2303, %v2303
    %v2305 = vld [vmem:[#allocation8] sm:$0xf]
    %v2306 = vld [vmem:[#allocation8 + $0x4] sm:$0xf]
    %v2307 = vld [vmem:[#allocation8 + $0x8] sm:$0xf]
    %v2308 = vld [vmem:[#allocation8 + $0xc] sm:$0xf]
    %v2309 = vld [vmem:[#allocation8 + $0x10] sm:$0xf]
    %v2310 = vld [vmem:[#allocation8 + $0x14] sm:$0xf]
    %v2311 = vld [vmem:[#allocation8 + $0x18] sm:$0xf]
    %v2312 = vld [vmem:[#allocation8 + $0x1c] sm:$0xf]
    %v2313 = vld [vmem:[#allocation8 + $0x20] sm:$0xf]
    %v2314 = vld [vmem:[#allocation8 + $0x24] sm:$0xf]
    %v2315 = vld [vmem:[#allocation8 + $0x28] sm:$0xf]
    %v2316 = vld [vmem:[#allocation8 + $0x2c] sm:$0xf]
    %v2317 = vld [vmem:[#allocation8 + $0x30] sm:$0xf]
    %v2318 = vld [vmem:[#allocation8 + $0x34] sm:$0xf]
    %v2319 = vld [vmem:[#allocation8 + $0x38] sm:$0xf]
    %v2320 = vld [vmem:[#allocation8 + $0x3c] sm:$0xf]
    %v2322 = vlaneseq
    %v2323 = vshrl.u32 %v2322, 7
    %v2324 = vsub.s32 0, %v2323
    %v2325 = vrot.slane %v122, %v2324
    %v2343 = vunpack.c.l.b16 %v2305
    %v2344 = vunpack.c.l.b16 %v2306
    %v2345 = vunpack.c.l.b16 %v2307
    %v2346 = vunpack.c.l.b16 %v2308
    %v2347 = vunpack.c.l.b16 %v2309
    %v2348 = vunpack.c.l.b16 %v2310
    %v2349 = vunpack.c.l.b16 %v2311
    %v2350 = vunpack.c.l.b16 %v2312
    %v2351 = vunpack.c.l.b16 %v2313
    %v2352 = vunpack.c.l.b16 %v2314
    %v2353 = vunpack.c.l.b16 %v2315
    %v2354 = vunpack.c.l.b16 %v2316
    %v2355 = vunpack.c.l.b16 %v2317
    %v2356 = vunpack.c.l.b16 %v2318
    %v2357 = vunpack.c.l.b16 %v2319
    %v2358 = vunpack.c.l.b16 %v2320
    %v2359 = vpack.c.b16 %v2344, %v2343
    %v2360 = vpack.c.b16 %v2346, %v2345
    %v2361 = vpack.c.b16 %v2348, %v2347
    %v2362 = vpack.c.b16 %v2350, %v2349
    %v2363 = vpack.c.b16 %v2352, %v2351
    %v2364 = vpack.c.b16 %v2354, %v2353
    %v2365 = vpack.c.b16 %v2356, %v2355
    %v2366 = vpack.c.b16 %v2358, %v2357
    %2375 = vmatprep.subr.bf16.mxu0 0
    %2376 = vmatpush1.bf16.msra.mxu0 %v2359
    %2377 = vmatprep.subr.bf16.mxu0 0
    %2378 = vmatpush1.bf16.msra.mxu0 %v2360
    %2379 = vmatprep.subr.bf16.mxu0 0
    %2380 = vmatpush1.bf16.msra.mxu0 %v2361
    %2381 = vmatprep.subr.bf16.mxu0 0
    %2382 = vmatpush1.bf16.msra.mxu0 %v2362
    %2383 = vmatprep.subr.bf16.mxu0 0
    %2384 = vmatpush1.bf16.msra.mxu0 %v2363
    %2385 = vmatprep.subr.bf16.mxu0 0
    %2386 = vmatpush1.bf16.msra.mxu0 %v2364
    %2387 = vmatprep.subr.bf16.mxu0 0
    %2388 = vmatpush1.bf16.msra.mxu0 %v2365
    %2389 = vmatprep.subr.bf16.mxu0 0
    %2390 = vmatpush1.bf16.msra.mxu0 %v2366
    %2391 = vmatprep.subr.bf16.mxu0 0
    %2392 = vmatpush1.bf16.msra.mxu0 0
    %2393 = vmatprep.subr.bf16.mxu0 0
    %2394 = vmatpush1.bf16.msra.mxu0 0
    %2395 = vmatprep.subr.bf16.mxu0 0
    %2396 = vmatpush1.bf16.msra.mxu0 0
    %2397 = vmatprep.subr.bf16.mxu0 0
    %2398 = vmatpush1.bf16.msra.mxu0 0
    %2399 = vmatprep.subr.bf16.mxu0 0
    %2400 = vmatpush1.bf16.msra.mxu0 0
    %2401 = vmatprep.subr.bf16.mxu0 0
    %2402 = vmatpush1.bf16.msra.mxu0 0
    %2403 = vmatprep.subr.bf16.mxu0 0
    %2404 = vmatpush1.bf16.msra.mxu0 0
    %2405 = vmatprep.subr.bf16.mxu0 0
    %2406 = vmatpush1.bf16.msra.mxu0 0
    %2407 = vmatprep.mubr.bf16.mxu0 0
    %2408 = vmatmul.mubr.bf16.gmra.mrb[0].mxu0 %v2304
    %v2409 = vpop.f32.mrb[0].mxu0
    %v2410 = vadd.f32 %v2325, %v2409
    %v2411 = vpop.f32.mrb[0].mxu0
    %v2412 = vpop.f32.mrb[0].mxu0
    %v2413 = vpop.f32.mrb[0].mxu0
    %2414 = vdwg.mxu0
    %v2415 = vld [vmem:[%s2] sm:$0xff]
    %v2416 = vadd.f32 %v2410, %v2415
    %2417 = vmax.xlane.f32.xlu0 %v2416
    %v2418 = vpop.xlane.xlu0 %2417
    %vm2419 = vcmp.ge.f32.partialorder %v2416, %v2418
    %v2420 = vsel %vm2419, 1, 0
    %v2421 = vcvt.s32.f32 %v2420
    %v2422 = vsel %vm2419, %v100, 128
    %v2423 = vand.u32 %v2422, 65535
    %v2424 = vshra.s32 %v2422, 16
    %v2425 = vcvt.s32.f32 %v2423
    %v2426 = vcvt.s32.f32 %v2424
    %2427 = vmin.xlane.f32.xlu0 %v2426
    %v2428 = vpop.xlane.xlu0 %2427
    %vm2429 = vcmp.eq.f32.partialorder %v2426, %v2428
    %v2430 = vsel %vm2429, %v2425, inf
    %2431 = vmin.xlane.f32.xlu0 %v2430
    %v2432 = vpop.xlane.xlu0 %2431
    %v2433 = vcvt.f32.s32 %v2432
    %v2434 = vcvt.f32.s32 %v2428
    %v2435 = vshll.u32 %v2434, 16
    %v2436 = vadd.s32 %v2435, %v2433
    %vm2437 = vcmp.eq.s32.totalorder %v100, 0
    %v2438 = vsel %vm2437, 1, 0
    %vm2439 = vcmp.eq.s32.totalorder %v2438, 1
    %v2440 = vsel %vm2439, %v2436, 0
    %v2441 = vld [vmem:[%s1 + $0x8] sm:$0xff]
    %v2442 = vld [vmem:[%s0 + $0x8] sm:$0xff]
    %vm2443 = vcmp.gt.f32.partialorder %v2441, 0.5
    %v2444 = vsel %vm2443, 1, 0
    %2445 = vset.pattern.permute.xlu0 0
    %2446 = vperm.xlu0 %2445, %v2444
    %v2447 = vpop.permute.xlu0 %2446
    %vm2448 = vcmp.eq.s32.totalorder %v2447, 1
    %v2449 = vsel %vm2448, %v2421, %v2442
    %v2450 = vpack.c.bf16 %v2449, %v2449
    %2451 = vmatprep.subr.bf16.mxu0 %v1857
    %2452 = vmatpush1.bf16.msra.mxu0 %v1856
    %2453 = vmatprep.subr.bf16.mxu0 %v1861
    %2454 = vmatpush1.bf16.msra.mxu0 %v1860
    %2455 = vmatprep.subr.bf16.mxu0 %v1865
    %2456 = vmatpush1.bf16.msra.mxu0 %v1864
    %2457 = vmatprep.subr.bf16.mxu0 %v1869
    %2458 = vmatpush1.bf16.msra.mxu0 %v1868
    %2459 = vmatprep.subr.bf16.mxu0 %v1873
    %2460 = vmatpush1.bf16.msra.mxu0 %v1872
    %2461 = vmatprep.subr.bf16.mxu0 %v1877
    %2462 = vmatpush1.bf16.msra.mxu0 %v1876
    %2463 = vmatprep.subr.bf16.mxu0 %v1881
    %2464 = vmatpush1.bf16.msra.mxu0 %v1880
    %2465 = vmatprep.subr.bf16.mxu0 %v1885
    %2466 = vmatpush1.bf16.msra.mxu0 %v1884
    %2467 = vmatprep.subr.bf16.mxu0 0
    %2468 = vmatpush1.bf16.msra.mxu0 0
    %2469 = vmatprep.subr.bf16.mxu0 0
    %2470 = vmatpush1.bf16.msra.mxu0 0
    %2471 = vmatprep.subr.bf16.mxu0 0
    %2472 = vmatpush1.bf16.msra.mxu0 0
    %2473 = vmatprep.subr.bf16.mxu0 0
    %2474 = vmatpush1.bf16.msra.mxu0 0
    %2475 = vmatprep.subr.bf16.mxu0 0
    %2476 = vmatpush1.bf16.msra.mxu0 0
    %2477 = vmatprep.subr.bf16.mxu0 0
    %2478 = vmatpush1.bf16.msra.mxu0 0
    %2479 = vmatprep.subr.bf16.mxu0 0
    %2480 = vmatpush1.bf16.msra.mxu0 0
    %2481 = vmatprep.subr.bf16.mxu0 0
    %2482 = vmatpush1.bf16.msra.mxu0 0
    %2483 = vmatprep.mubr.bf16.mxu0 0
    %2484 = vmatmul.mubr.bf16.gmra.mrb[0].mxu0 %v2304
    %v2485 = vpop.f32.mrb[0].mxu0
    %v2486 = vadd.f32 0.0, %v2485
    %v2487 = vpop.f32.mrb[0].mxu0
    %v2488 = vadd.f32 0.0, %v2487
    %v2489 = vpop.f32.mrb[0].mxu0
    %v2490 = vpop.f32.mrb[0].mxu0
    %2491 = vdwg.mxu0
    %2492 = vmatprep.subr.bf16.mxu0 %v1859
    %2493 = vmatpush1.bf16.msra.mxu0 %v1858
    %2494 = vmatprep.subr.bf16.mxu0 %v1863
    %2495 = vmatpush1.bf16.msra.mxu0 %v1862
    %2496 = vmatprep.subr.bf16.mxu0 %v1867
    %2497 = vmatpush1.bf16.msra.mxu0 %v1866
    %2498 = vmatprep.subr.bf16.mxu0 %v1871
    %2499 = vmatpush1.bf16.msra.mxu0 %v1870
    %2500 = vmatprep.subr.bf16.mxu0 %v1875
    %2501 = vmatpush1.bf16.msra.mxu0 %v1874
    %2502 = vmatprep.subr.bf16.mxu0 %v1879
    %2503 = vmatpush1.bf16.msra.mxu0 %v1878
    %2504 = vmatprep.subr.bf16.mxu0 %v1883
    %2505 = vmatpush1.bf16.msra.mxu0 %v1882
    %2506 = vmatprep.subr.bf16.mxu0 %v1887
    %2507 = vmatpush1.bf16.msra.mxu0 %v1886
    %2508 = vmatprep.subr.bf16.mxu0 0
    %2509 = vmatpush1.bf16.msra.mxu0 0
    %2510 = vmatprep.subr.bf16.mxu0 0
    %2511 = vmatpush1.bf16.msra.mxu0 0
    %2512 = vmatprep.subr.bf16.mxu0 0
    %2513 = vmatpush1.bf16.msra.mxu0 0
    %2514 = vmatprep.subr.bf16.mxu0 0
    %2515 = vmatpush1.bf16.msra.mxu0 0
    %2516 = vmatprep.subr.bf16.mxu0 0
    %2517 = vmatpush1.bf16.msra.mxu0 0
    %2518 = vmatprep.subr.bf16.mxu0 0
    %2519 = vmatpush1.bf16.msra.mxu0 0
    %2520 = vmatprep.subr.bf16.mxu0 0
    %2521 = vmatpush1.bf16.msra.mxu0 0
    %2522 = vmatprep.subr.bf16.mxu0 0
    %2523 = vmatpush1.bf16.msra.mxu0 0
    %2524 = vmatprep.mubr.bf16.mxu0 0
    %2525 = vmatmul.mubr.bf16.gmra.mrb[0].mxu0 %v2304
    %v2526 = vpop.f32.mrb[0].mxu0
    %v2527 = vadd.f32 0.0, %v2526
    %v2528 = vpop.f32.mrb[0].mxu0
    %v2529 = vadd.f32 0.0, %v2528
    %v2530 = vpop.f32.mrb[0].mxu0
    %v2531 = vpop.f32.mrb[0].mxu0
    %2532 = vdwg.mxu0
    %2533 = vmatprep.subr.bf16.mxu0 %v2099
    %2534 = vmatpush1.bf16.msra.mxu0 %v2098
    %2535 = vmatprep.subr.bf16.mxu0 %v2103
    %2536 = vmatpush1.bf16.msra.mxu0 %v2102
    %2537 = vmatprep.subr.bf16.mxu0 %v2107
    %2538 = vmatpush1.bf16.msra.mxu0 %v2106
    %2539 = vmatprep.subr.bf16.mxu0 %v2111
    %2540 = vmatpush1.bf16.msra.mxu0 %v2110
    %2541 = vmatprep.subr.bf16.mxu0 %v2115
    %2542 = vmatpush1.bf16.msra.mxu0 %v2114
    %2543 = vmatprep.subr.bf16.mxu0 %v2119
    %2544 = vmatpush1.bf16.msra.mxu0 %v2118
    %2545 = vmatprep.subr.bf16.mxu0 %v2123
    %2546 = vmatpush1.bf16.msra.mxu0 %v2122
    %2547 = vmatprep.subr.bf16.mxu0 %v2127
    %2548 = vmatpush1.bf16.msra.mxu0 %v2126
    %2549 = vmatprep.subr.bf16.mxu0 0
    %2550 = vmatpush1.bf16.msra.mxu0 0
    %2551 = vmatprep.subr.bf16.mxu0 0
    %2552 = vmatpush1.bf16.msra.mxu0 0
    %2553 = vmatprep.subr.bf16.mxu0 0
    %2554 = vmatpush1.bf16.msra.mxu0 0
    %2555 = vmatprep.subr.bf16.mxu0 0
    %2556 = vmatpush1.bf16.msra.mxu0 0
    %2557 = vmatprep.subr.bf16.mxu0 0
    %2558 = vmatpush1.bf16.msra.mxu0 0
    %2559 = vmatprep.subr.bf16.mxu0 0
    %2560 = vmatpush1.bf16.msra.mxu0 0
    %2561 = vmatprep.subr.bf16.mxu0 0
    %2562 = vmatpush1.bf16.msra.mxu0 0
    %2563 = vmatprep.subr.bf16.mxu0 0
    %2564 = vmatpush1.bf16.msra.mxu0 0
    %2565 = vmatprep.mubr.bf16.mxu0 0
    %2566 = vmatmul.mubr.bf16.gmra.mrb[0].mxu0 %v2450
    %v2567 = vpop.f32.mrb[0].mxu0
    %v2568 = vadd.f32 %v2486, %v2567
    %v2569 = vpop.f32.mrb[0].mxu0
    %v2570 = vadd.f32 %v2488, %v2569
    %v2571 = vpop.f32.mrb[0].mxu0
    %v2572 = vpop.f32.mrb[0].mxu0
    %2573 = vdwg.mxu0
    %2574 = vmatprep.subr.bf16.mxu0 %v2101
    %2575 = vmatpush1.bf16.msra.mxu0 %v2100
    %2576 = vmatprep.subr.bf16.mxu0 %v2105
    %2577 = vmatpush1.bf16.msra.mxu0 %v2104
    %2578 = vmatprep.subr.bf16.mxu0 %v2109
    %2579 = vmatpush1.bf16.msra.mxu0 %v2108
    %2580 = vmatprep.subr.bf16.mxu0 %v2113
    %2581 = vmatpush1.bf16.msra.mxu0 %v2112
    %2582 = vmatprep.subr.bf16.mxu0 %v2117
    %2583 = vmatpush1.bf16.msra.mxu0 %v2116
    %2584 = vmatprep.subr.bf16.mxu0 %v2121
    %2585 = vmatpush1.bf16.msra.mxu0 %v2120
    %2586 = vmatprep.subr.bf16.mxu0 %v2125
    %2587 = vmatpush1.bf16.msra.mxu0 %v2124
    %2588 = vmatprep.subr.bf16.mxu0 %v2129
    %2589 = vmatpush1.bf16.msra.mxu0 %v2128
    %2590 = vmatprep.subr.bf16.mxu0 0
    %2591 = vmatpush1.bf16.msra.mxu0 0
    %2592 = vmatprep.subr.bf16.mxu0 0
    %2593 = vmatpush1.bf16.msra.mxu0 0
    %2594 = vmatprep.subr.bf16.mxu0 0
    %2595 = vmatpush1.bf16.msra.mxu0 0
    %2596 = vmatprep.subr.bf16.mxu0 0
    %2597 = vmatpush1.bf16.msra.mxu0 0
    %2598 = vmatprep.subr.bf16.mxu0 0
    %2599 = vmatpush1.bf16.msra.mxu0 0
    %2600 = vmatprep.subr.bf16.mxu0 0
    %2601 = vmatpush1.bf16.msra.mxu0 0
    %2602 = vmatprep.subr.bf16.mxu0 0
    %2603 = vmatpush1.bf16.msra.mxu0 0
    %2604 = vmatprep.subr.bf16.mxu0 0
    %2605 = vmatpush1.bf16.msra.mxu0 0
    %2606 = vmatprep.mubr.bf16.mxu0 0
    %2607 = vmatmul.mubr.bf16.gmra.mrb[0].mxu0 %v2450
    %v2608 = vpop.f32.mrb[0].mxu0
    %v2609 = vadd.f32 %v2527, %v2608
    %v2610 = vpop.f32.mrb[0].mxu0
    %v2611 = vadd.f32 %v2529, %v2610
    %v2612 = vpop.f32.mrb[0].mxu0
    %v2613 = vpop.f32.mrb[0].mxu0
    %2614 = vdwg.mxu0
    %v2615 = vadd.f32 %v2568, %v2248
    %v2616 = vadd.f32 %v2570, %v2252
    %v2617 = vadd.f32 %v2609, %v2256
    %v2618 = vadd.f32 %v2611, %v2260
    %v2619 = vmul.f32 %v2615, %v116
    %v2620 = vmul.f32 %v2616, %v117
    %v2621 = vmul.f32 %v2617, %v118
    %v2622 = vmul.f32 %v2618, %v119
    %v2623 = vxor.u32 %v2619, 2147483648
    %v2624 = vxor.u32 %v2620, 2147483648
    %v2625 = vxor.u32 %v2621, 2147483648
    %v2626 = vxor.u32 %v2622, 2147483648
    %v2627 = vmul.f32 %v2623, 1.442695
    %v2628 = vpow.pop %v2627
    %v2629 = vmul.f32 %v2624, 1.442695
    %v2630 = vpow.pop %v2629
    %v2631 = vmul.f32 %v2625, 1.442695
    %v2632 = vpow.pop %v2631
    %v2633 = vmul.f32 %v2626, 1.442695
    %v2634 = vpow.pop %v2633
    %v2635 = vadd.f32 %v2628, 1.0
    %v2636 = vadd.f32 %v2630, 1.0
    %v2637 = vadd.f32 %v2632, 1.0
    %v2638 = vadd.f32 %v2634, 1.0
    %v2639 = vrcp.pop %v2635
    %v2640 = vmul.f32 1.0, %v2639
    %v2641 = vrcp.pop %v2636
    %v2642 = vmul.f32 1.0, %v2641
    %v2643 = vrcp.pop %v2637
    %v2644 = vmul.f32 1.0, %v2643
    %v2645 = vrcp.pop %v2638
    %v2646 = vmul.f32 1.0, %v2645
    %v2647 = vmul.f32 %v2644, 2.0
    %v2648 = vsub.f32 %v2647, 1.0
    %v2649 = vmul.f32 %v2642, %v2301
    %v2650 = vmul.f32 %v2640, %v2648
    %v2651 = vadd.f32 %v2649, %v2650
    %v2652 = vtanh.pop %v2651
    %v2653 = vmul.f32 %v2646, %v2652
    %v2654 = vpack.c.bf16 %v2653, %v2653
    %2655 = vmatprep.subr.bf16.mxu0 0
    %2656 = vmatpush1.bf16.msra.mxu0 %v2359
    %2657 = vmatprep.subr.bf16.mxu0 0
    %2658 = vmatpush1.bf16.msra.mxu0 %v2360
    %2659 = vmatprep.subr.bf16.mxu0 0
    %2660 = vmatpush1.bf16.msra.mxu0 %v2361
    %2661 = vmatprep.subr.bf16.mxu0 0
    %2662 = vmatpush1.bf16.msra.mxu0 %v2362
    %2663 = vmatprep.subr.bf16.mxu0 0
    %2664 = vmatpush1.bf16.msra.mxu0 %v2363
    %2665 = vmatprep.subr.bf16.mxu0 0
    %2666 = vmatpush1.bf16.msra.mxu0 %v2364
    %2667 = vmatprep.subr.bf16.mxu0 0
    %2668 = vmatpush1.bf16.msra.mxu0 %v2365
    %2669 = vmatprep.subr.bf16.mxu0 0
    %2670 = vmatpush1.bf16.msra.mxu0 %v2366
    %2671 = vmatprep.subr.bf16.mxu0 0
    %2672 = vmatpush1.bf16.msra.mxu0 0
    %2673 = vmatprep.subr.bf16.mxu0 0
    %2674 = vmatpush1.bf16.msra.mxu0 0
    %2675 = vmatprep.subr.bf16.mxu0 0
    %2676 = vmatpush1.bf16.msra.mxu0 0
    %2677 = vmatprep.subr.bf16.mxu0 0
    %2678 = vmatpush1.bf16.msra.mxu0 0
    %2679 = vmatprep.subr.bf16.mxu0 0
    %2680 = vmatpush1.bf16.msra.mxu0 0
    %2681 = vmatprep.subr.bf16.mxu0 0
    %2682 = vmatpush1.bf16.msra.mxu0 0
    %2683 = vmatprep.subr.bf16.mxu0 0
    %2684 = vmatpush1.bf16.msra.mxu0 0
    %2685 = vmatprep.subr.bf16.mxu0 0
    %2686 = vmatpush1.bf16.msra.mxu0 0
    %2687 = vmatprep.mubr.bf16.mxu0 0
    %2688 = vmatmul.mubr.bf16.gmra.mrb[0].mxu0 %v2654
    %v2689 = vpop.f32.mrb[0].mxu0
    %v2690 = vadd.f32 %v2325, %v2689
    %v2691 = vpop.f32.mrb[0].mxu0
    %v2692 = vpop.f32.mrb[0].mxu0
    %v2693 = vpop.f32.mrb[0].mxu0
    %2694 = vdwg.mxu0
    %v2695 = vld [vmem:[%s2 + $0x8] sm:$0xff]
    %v2696 = vadd.f32 %v2690, %v2695
    %2697 = vmax.xlane.f32.xlu0 %v2696
    %v2698 = vpop.xlane.xlu0 %2697
    %vm2699 = vcmp.ge.f32.partialorder %v2696, %v2698
    %v2700 = vsel %vm2699, 1, 0
    %v2701 = vcvt.s32.f32 %v2700
    %v2702 = vsel %vm2699, %v100, 128
    %v2703 = vand.u32 %v2702, 65535
    %v2704 = vshra.s32 %v2702, 16
    %v2705 = vcvt.s32.f32 %v2703
    %v2706 = vcvt.s32.f32 %v2704
    %2707 = vmin.xlane.f32.xlu0 %v2706
    %v2708 = vpop.xlane.xlu0 %2707
    %vm2709 = vcmp.eq.f32.partialorder %v2706, %v2708
    %v2710 = vsel %vm2709, %v2705, inf
    %2711 = vmin.xlane.f32.xlu0 %v2710
    %v2712 = vpop.xlane.xlu0 %2711
    %v2713 = vcvt.f32.s32 %v2712
    %v2714 = vcvt.f32.s32 %v2708
    %v2715 = vshll.u32 %v2714, 16
    %v2716 = vadd.s32 %v2715, %v2713
    %vm2717 = vcmp.eq.s32.totalorder %v100, 1
    %v2718 = vsel %vm2717, 1, 0
    %vm2719 = vcmp.eq.s32.totalorder %v2718, 1
    %v2720 = vsel %vm2719, %v2716, %v2440
    %v2721 = vld [vmem:[%s1 + $0x10] sm:$0xff]
    %v2722 = vld [vmem:[%s0 + $0x10] sm:$0xff]
    %vm2723 = vcmp.gt.f32.partialorder %v2721, 0.5
    %v2724 = vsel %vm2723, 1, 0
    %2725 = vset.pattern.permute.xlu0 0
    %2726 = vperm.xlu0 %2725, %v2724
    %v2727 = vpop.permute.xlu0 %2726
    %vm2728 = vcmp.eq.s32.totalorder %v2727, 1
    %v2729 = vsel %vm2728, %v2701, %v2722
    %v2730 = vpack.c.bf16 %v2729, %v2729
    %2731 = vmatprep.subr.bf16.mxu0 %v1857
    %2732 = vmatpush1.bf16.msra.mxu0 %v1856
    %2733 = vmatprep.subr.bf16.mxu0 %v1861
    %2734 = vmatpush1.bf16.msra.mxu0 %v1860
    %2735 = vmatprep.subr.bf16.mxu0 %v1865
    %2736 = vmatpush1.bf16.msra.mxu0 %v1864
    %2737 = vmatprep.subr.bf16.mxu0 %v1869
    %2738 = vmatpush1.bf16.msra.mxu0 %v1868
    %2739 = vmatprep.subr.bf16.mxu0 %v1873
    %2740 = vmatpush1.bf16.msra.mxu0 %v1872
    %2741 = vmatprep.subr.bf16.mxu0 %v1877
    %2742 = vmatpush1.bf16.msra.mxu0 %v1876
    %2743 = vmatprep.subr.bf16.mxu0 %v1881
    %2744 = vmatpush1.bf16.msra.mxu0 %v1880
    %2745 = vmatprep.subr.bf16.mxu0 %v1885
    %2746 = vmatpush1.bf16.msra.mxu0 %v1884
    %2747 = vmatprep.subr.bf16.mxu0 0
    %2748 = vmatpush1.bf16.msra.mxu0 0
    %2749 = vmatprep.subr.bf16.mxu0 0
    %2750 = vmatpush1.bf16.msra.mxu0 0
    %2751 = vmatprep.subr.bf16.mxu0 0
    %2752 = vmatpush1.bf16.msra.mxu0 0
    %2753 = vmatprep.subr.bf16.mxu0 0
    %2754 = vmatpush1.bf16.msra.mxu0 0
    %2755 = vmatprep.subr.bf16.mxu0 0
    %2756 = vmatpush1.bf16.msra.mxu0 0
    %2757 = vmatprep.subr.bf16.mxu0 0
    %2758 = vmatpush1.bf16.msra.mxu0 0
    %2759 = vmatprep.subr.bf16.mxu0 0
    %2760 = vmatpush1.bf16.msra.mxu0 0
    %2761 = vmatprep.subr.bf16.mxu0 0
    %2762 = vmatpush1.bf16.msra.mxu0 0
    %2763 = vmatprep.mubr.bf16.mxu0 0
    %2764 = vmatmul.mubr.bf16.gmra.mrb[0].mxu0 %v2654
    %v2765 = vpop.f32.mrb[0].mxu0
    %v2766 = vadd.f32 0.0, %v2765
    %v2767 = vpop.f32.mrb[0].mxu0
    %v2768 = vadd.f32 0.0, %v2767
    %v2769 = vpop.f32.mrb[0].mxu0
    %v2770 = vpop.f32.mrb[0].mxu0
    %2771 = vdwg.mxu0
    %2772 = vmatprep.subr.bf16.mxu0 %v1859
    %2773 = vmatpush1.bf16.msra.mxu0 %v1858
    %2774 = vmatprep.subr.bf16.mxu0 %v1863
    %2775 = vmatpush1.bf16.msra.mxu0 %v1862
    %2776 = vmatprep.subr.bf16.mxu0 %v1867
    %2777 = vmatpush1.bf16.msra.mxu0 %v1866
    %2778 = vmatprep.subr.bf16.mxu0 %v1871
    %2779 = vmatpush1.bf16.msra.mxu0 %v1870
    %2780 = vmatprep.subr.bf16.mxu0 %v1875
    %2781 = vmatpush1.bf16.msra.mxu0 %v1874
    %2782 = vmatprep.subr.bf16.mxu0 %v1879
    %2783 = vmatpush1.bf16.msra.mxu0 %v1878
    %2784 = vmatprep.subr.bf16.mxu0 %v1883
    %2785 = vmatpush1.bf16.msra.mxu0 %v1882
    %2786 = vmatprep.subr.bf16.mxu0 %v1887
    %2787 = vmatpush1.bf16.msra.mxu0 %v1886
    %2788 = vmatprep.subr.bf16.mxu0 0
    %2789 = vmatpush1.bf16.msra.mxu0 0
    %2790 = vmatprep.subr.bf16.mxu0 0
    %2791 = vmatpush1.bf16.msra.mxu0 0
    %2792 = vmatprep.subr.bf16.mxu0 0
    %2793 = vmatpush1.bf16.msra.mxu0 0
    %2794 = vmatprep.subr.bf16.mxu0 0
    %2795 = vmatpush1.bf16.msra.mxu0 0
    %2796 = vmatprep.subr.bf16.mxu0 0
    %2797 = vmatpush1.bf16.msra.mxu0 0
    %2798 = vmatprep.subr.bf16.mxu0 0
    %2799 = vmatpush1.bf16.msra.mxu0 0
    %2800 = vmatprep.subr.bf16.mxu0 0
    %2801 = vmatpush1.bf16.msra.mxu0 0
    %2802 = vmatprep.subr.bf16.mxu0 0
    %2803 = vmatpush1.bf16.msra.mxu0 0
    %2804 = vmatprep.mubr.bf16.mxu0 0
    %2805 = vmatmul.mubr.bf16.gmra.mrb[0].mxu0 %v2654
    %v2806 = vpop.f32.mrb[0].mxu0
    %v2807 = vadd.f32 0.0, %v2806
    %v2808 = vpop.f32.mrb[0].mxu0
    %v2809 = vadd.f32 0.0, %v2808
    %v2810 = vpop.f32.mrb[0].mxu0
    %v2811 = vpop.f32.mrb[0].mxu0
    %2812 = vdwg.mxu0
    %2813 = vmatprep.subr.bf16.mxu0 %v2099
    %2814 = vmatpush1.bf16.msra.mxu0 %v2098
    %2815 = vmatprep.subr.bf16.mxu0 %v2103
    %2816 = vmatpush1.bf16.msra.mxu0 %v2102
    %2817 = vmatprep.subr.bf16.mxu0 %v2107
    %2818 = vmatpush1.bf16.msra.mxu0 %v2106
    %2819 = vmatprep.subr.bf16.mxu0 %v2111
    %2820 = vmatpush1.bf16.msra.mxu0 %v2110
    %2821 = vmatprep.subr.bf16.mxu0 %v2115
    %2822 = vmatpush1.bf16.msra.mxu0 %v2114
    %2823 = vmatprep.subr.bf16.mxu0 %v2119
    %2824 = vmatpush1.bf16.msra.mxu0 %v2118
    %2825 = vmatprep.subr.bf16.mxu0 %v2123
    %2826 = vmatpush1.bf16.msra.mxu0 %v2122
    %2827 = vmatprep.subr.bf16.mxu0 %v2127
    %2828 = vmatpush1.bf16.msra.mxu0 %v2126
    %2829 = vmatprep.subr.bf16.mxu0 0
    %2830 = vmatpush1.bf16.msra.mxu0 0
    %2831 = vmatprep.subr.bf16.mxu0 0
    %2832 = vmatpush1.bf16.msra.mxu0 0
    %2833 = vmatprep.subr.bf16.mxu0 0
    %2834 = vmatpush1.bf16.msra.mxu0 0
    %2835 = vmatprep.subr.bf16.mxu0 0
    %2836 = vmatpush1.bf16.msra.mxu0 0
    %2837 = vmatprep.subr.bf16.mxu0 0
    %2838 = vmatpush1.bf16.msra.mxu0 0
    %2839 = vmatprep.subr.bf16.mxu0 0
    %2840 = vmatpush1.bf16.msra.mxu0 0
    %2841 = vmatprep.subr.bf16.mxu0 0
    %2842 = vmatpush1.bf16.msra.mxu0 0
    %2843 = vmatprep.subr.bf16.mxu0 0
    %2844 = vmatpush1.bf16.msra.mxu0 0
    %2845 = vmatprep.mubr.bf16.mxu0 0
    %2846 = vmatmul.mubr.bf16.gmra.mrb[0].mxu0 %v2730
    %v2847 = vpop.f32.mrb[0].mxu0
    %v2848 = vadd.f32 %v2766, %v2847
    %v2849 = vpop.f32.mrb[0].mxu0
    %v2850 = vadd.f32 %v2768, %v2849
    %v2851 = vpop.f32.mrb[0].mxu0
    %v2852 = vpop.f32.mrb[0].mxu0
    %2853 = vdwg.mxu0
    %2854 = vmatprep.subr.bf16.mxu0 %v2101
    %2855 = vmatpush1.bf16.msra.mxu0 %v2100
    %2856 = vmatprep.subr.bf16.mxu0 %v2105
    %2857 = vmatpush1.bf16.msra.mxu0 %v2104
    %2858 = vmatprep.subr.bf16.mxu0 %v2109
    %2859 = vmatpush1.bf16.msra.mxu0 %v2108
    %2860 = vmatprep.subr.bf16.mxu0 %v2113
    %2861 = vmatpush1.bf16.msra.mxu0 %v2112
    %2862 = vmatprep.subr.bf16.mxu0 %v2117
    %2863 = vmatpush1.bf16.msra.mxu0 %v2116
    %2864 = vmatprep.subr.bf16.mxu0 %v2121
    %2865 = vmatpush1.bf16.msra.mxu0 %v2120
    %2866 = vmatprep.subr.bf16.mxu0 %v2125
    %2867 = vmatpush1.bf16.msra.mxu0 %v2124
    %2868 = vmatprep.subr.bf16.mxu0 %v2129
    %2869 = vmatpush1.bf16.msra.mxu0 %v2128
    %2870 = vmatprep.subr.bf16.mxu0 0
    %2871 = vmatpush1.bf16.msra.mxu0 0
    %2872 = vmatprep.subr.bf16.mxu0 0
    %2873 = vmatpush1.bf16.msra.mxu0 0
    %2874 = vmatprep.subr.bf16.mxu0 0
    %2875 = vmatpush1.bf16.msra.mxu0 0
    %2876 = vmatprep.subr.bf16.mxu0 0
    %2877 = vmatpush1.bf16.msra.mxu0 0
    %2878 = vmatprep.subr.bf16.mxu0 0
    %2879 = vmatpush1.bf16.msra.mxu0 0
    %2880 = vmatprep.subr.bf16.mxu0 0
    %2881 = vmatpush1.bf16.msra.mxu0 0
    %2882 = vmatprep.subr.bf16.mxu0 0
    %2883 = vmatpush1.bf16.msra.mxu0 0
    %2884 = vmatprep.subr.bf16.mxu0 0
    %2885 = vmatpush1.bf16.msra.mxu0 0
    %2886 = vmatprep.mubr.bf16.mxu0 0
    %2887 = vmatmul.mubr.bf16.gmra.mrb[0].mxu0 %v2730
    %v2888 = vpop.f32.mrb[0].mxu0
    %v2889 = vadd.f32 %v2807, %v2888
    %v2890 = vpop.f32.mrb[0].mxu0
    %v2891 = vadd.f32 %v2809, %v2890
    %v2892 = vpop.f32.mrb[0].mxu0
    %v2893 = vpop.f32.mrb[0].mxu0
    %2894 = vdwg.mxu0
    %v2895 = vadd.f32 %v2848, %v2248
    %v2896 = vadd.f32 %v2850, %v2252
    %v2897 = vadd.f32 %v2889, %v2256
    %v2898 = vadd.f32 %v2891, %v2260
    %v2899 = vmul.f32 %v2895, %v116
    %v2900 = vmul.f32 %v2896, %v117
    %v2901 = vmul.f32 %v2897, %v118
    %v2902 = vmul.f32 %v2898, %v119
    %v2903 = vxor.u32 %v2899, 2147483648
    %v2904 = vxor.u32 %v2900, 2147483648
    %v2905 = vxor.u32 %v2901, 2147483648
    %v2906 = vxor.u32 %v2902, 2147483648
    %v2907 = vmul.f32 %v2903, 1.442695
    %v2908 = vpow.pop %v2907
    %v2909 = vmul.f32 %v2904, 1.442695
    %v2910 = vpow.pop %v2909
    %v2911 = vmul.f32 %v2905, 1.442695
    %v2912 = vpow.pop %v2911
    %v2913 = vmul.f32 %v2906, 1.442695
    %v2914 = vpow.pop %v2913
    %v2915 = vadd.f32 %v2908, 1.0
    %v2916 = vadd.f32 %v2910, 1.0
    %v2917 = vadd.f32 %v2912, 1.0
    %v2918 = vadd.f32 %v2914, 1.0
    %v2919 = vrcp.pop %v2915
    %v2920 = vmul.f32 1.0, %v2919
    %v2921 = vrcp.pop %v2916
    %v2922 = vmul.f32 1.0, %v2921
    %v2923 = vrcp.pop %v2917
    %v2924 = vmul.f32 1.0, %v2923
    %v2925 = vrcp.pop %v2918
    %v2926 = vmul.f32 1.0, %v2925
    %v2927 = vmul.f32 %v2924, 2.0
    %v2928 = vsub.f32 %v2927, 1.0
    %v2929 = vmul.f32 %v2922, %v2651
    %v2930 = vmul.f32 %v2920, %v2928
    %v2931 = vadd.f32 %v2929, %v2930
    %v2932 = vtanh.pop %v2931
    %v2933 = vmul.f32 %v2926, %v2932
    %v2934 = vpack.c.bf16 %v2933, %v2933
    %2935 = vmatprep.subr.bf16.mxu0 0
    %2936 = vmatpush1.bf16.msra.mxu0 %v2359
    %2937 = vmatprep.subr.bf16.mxu0 0
    %2938 = vmatpush1.bf16.msra.mxu0 %v2360
    %2939 = vmatprep.subr.bf16.mxu0 0
    %2940 = vmatpush1.bf16.msra.mxu0 %v2361
    %2941 = vmatprep.subr.bf16.mxu0 0
    %2942 = vmatpush1.bf16.msra.mxu0 %v2362
    %2943 = vmatprep.subr.bf16.mxu0 0
    %2944 = vmatpush1.bf16.msra.mxu0 %v2363
    %2945 = vmatprep.subr.bf16.mxu0 0
    %2946 = vmatpush1.bf16.msra.mxu0 %v2364
    %2947 = vmatprep.subr.bf16.mxu0 0
    %2948 = vmatpush1.bf16.msra.mxu0 %v2365
    %2949 = vmatprep.subr.bf16.mxu0 0
    %2950 = vmatpush1.bf16.msra.mxu0 %v2366
    %2951 = vmatprep.subr.bf16.mxu0 0
    %2952 = vmatpush1.bf16.msra.mxu0 0
    %2953 = vmatprep.subr.bf16.mxu0 0
    %2954 = vmatpush1.bf16.msra.mxu0 0
    %2955 = vmatprep.subr.bf16.mxu0 0
    %2956 = vmatpush1.bf16.msra.mxu0 0
    %2957 = vmatprep.subr.bf16.mxu0 0
    %2958 = vmatpush1.bf16.msra.mxu0 0
    %2959 = vmatprep.subr.bf16.mxu0 0
    %2960 = vmatpush1.bf16.msra.mxu0 0
    %2961 = vmatprep.subr.bf16.mxu0 0
    %2962 = vmatpush1.bf16.msra.mxu0 0
    %2963 = vmatprep.subr.bf16.mxu0 0
    %2964 = vmatpush1.bf16.msra.mxu0 0
    %2965 = vmatprep.subr.bf16.mxu0 0
    %2966 = vmatpush1.bf16.msra.mxu0 0
    %2967 = vmatprep.mubr.bf16.mxu0 0
    %2968 = vmatmul.mubr.bf16.gmra.mrb[0].mxu0 %v2934
    %v2969 = vpop.f32.mrb[0].mxu0
    %v2970 = vadd.f32 %v2325, %v2969
    %v2971 = vpop.f32.mrb[0].mxu0
    %v2972 = vpop.f32.mrb[0].mxu0
    %v2973 = vpop.f32.mrb[0].mxu0
    %2974 = vdwg.mxu0
    %v2975 = vld [vmem:[%s2 + $0x10] sm:$0xff]
    %v2976 = vadd.f32 %v2970, %v2975
    %2977 = vmax.xlane.f32.xlu0 %v2976
    %v2978 = vpop.xlane.xlu0 %2977
    %vm2979 = vcmp.ge.f32.partialorder %v2976, %v2978
    %v2980 = vsel %vm2979, 1, 0
    %v2981 = vcvt.s32.f32 %v2980
    %v2982 = vsel %vm2979, %v100, 128
    %v2983 = vand.u32 %v2982, 65535
    %v2984 = vshra.s32 %v2982, 16
    %v2985 = vcvt.s32.f32 %v2983
    %v2986 = vcvt.s32.f32 %v2984
    %2987 = vmin.xlane.f32.xlu0 %v2986
    %v2988 = vpop.xlane.xlu0 %2987
    %vm2989 = vcmp.eq.f32.partialorder %v2986, %v2988
    %v2990 = vsel %vm2989, %v2985, inf
    %2991 = vmin.xlane.f32.xlu0 %v2990
    %v2992 = vpop.xlane.xlu0 %2991
    %v2993 = vcvt.f32.s32 %v2992
    %v2994 = vcvt.f32.s32 %v2988
    %v2995 = vshll.u32 %v2994, 16
    %v2996 = vadd.s32 %v2995, %v2993
    %vm2997 = vcmp.eq.s32.totalorder %v100, 2
    %v2998 = vsel %vm2997, 1, 0
    %vm2999 = vcmp.eq.s32.totalorder %v2998, 1
    %v3000 = vsel %vm2999, %v2996, %v2720
    %v3001 = vld [vmem:[%s1 + $0x18] sm:$0xff]
    %v3002 = vld [vmem:[%s0 + $0x18] sm:$0xff]
    %vm3003 = vcmp.gt.f32.partialorder %v3001, 0.5
    %v3004 = vsel %vm3003, 1, 0
    %3005 = vset.pattern.permute.xlu0 0
    %3006 = vperm.xlu0 %3005, %v3004
    %v3007 = vpop.permute.xlu0 %3006
    %vm3008 = vcmp.eq.s32.totalorder %v3007, 1
    %v3009 = vsel %vm3008, %v2981, %v3002
    %v3010 = vpack.c.bf16 %v3009, %v3009
    %3011 = vmatprep.subr.bf16.mxu0 %v1857
    %3012 = vmatpush1.bf16.msra.mxu0 %v1856
    %3013 = vmatprep.subr.bf16.mxu0 %v1861
    %3014 = vmatpush1.bf16.msra.mxu0 %v1860
    %3015 = vmatprep.subr.bf16.mxu0 %v1865
    %3016 = vmatpush1.bf16.msra.mxu0 %v1864
    %3017 = vmatprep.subr.bf16.mxu0 %v1869
    %3018 = vmatpush1.bf16.msra.mxu0 %v1868
    %3019 = vmatprep.subr.bf16.mxu0 %v1873
    %3020 = vmatpush1.bf16.msra.mxu0 %v1872
    %3021 = vmatprep.subr.bf16.mxu0 %v1877
    %3022 = vmatpush1.bf16.msra.mxu0 %v1876
    %3023 = vmatprep.subr.bf16.mxu0 %v1881
    %3024 = vmatpush1.bf16.msra.mxu0 %v1880
    %3025 = vmatprep.subr.bf16.mxu0 %v1885
    %3026 = vmatpush1.bf16.msra.mxu0 %v1884
    %3027 = vmatprep.subr.bf16.mxu0 0
    %3028 = vmatpush1.bf16.msra.mxu0 0
    %3029 = vmatprep.subr.bf16.mxu0 0
    %3030 = vmatpush1.bf16.msra.mxu0 0
    %3031 = vmatprep.subr.bf16.mxu0 0
    %3032 = vmatpush1.bf16.msra.mxu0 0
    %3033 = vmatprep.subr.bf16.mxu0 0
    %3034 = vmatpush1.bf16.msra.mxu0 0
    %3035 = vmatprep.subr.bf16.mxu0 0
    %3036 = vmatpush1.bf16.msra.mxu0 0
    %3037 = vmatprep.subr.bf16.mxu0 0
    %3038 = vmatpush1.bf16.msra.mxu0 0
    %3039 = vmatprep.subr.bf16.mxu0 0
    %3040 = vmatpush1.bf16.msra.mxu0 0
    %3041 = vmatprep.subr.bf16.mxu0 0
    %3042 = vmatpush1.bf16.msra.mxu0 0
    %3043 = vmatprep.mubr.bf16.mxu0 0
    %3044 = vmatmul.mubr.bf16.gmra.mrb[0].mxu0 %v2934
    %v3045 = vpop.f32.mrb[0].mxu0
    %v3046 = vadd.f32 0.0, %v3045
    %v3047 = vpop.f32.mrb[0].mxu0
    %v3048 = vadd.f32 0.0, %v3047
    %v3049 = vpop.f32.mrb[0].mxu0
    %v3050 = vpop.f32.mrb[0].mxu0
    %3051 = vdwg.mxu0
    %3052 = vmatprep.subr.bf16.mxu0 %v1859
    %3053 = vmatpush1.bf16.msra.mxu0 %v1858
    %3054 = vmatprep.subr.bf16.mxu0 %v1863
    %3055 = vmatpush1.bf16.msra.mxu0 %v1862
    %3056 = vmatprep.subr.bf16.mxu0 %v1867
    %3057 = vmatpush1.bf16.msra.mxu0 %v1866
    %3058 = vmatprep.subr.bf16.mxu0 %v1871
    %3059 = vmatpush1.bf16.msra.mxu0 %v1870
    %3060 = vmatprep.subr.bf16.mxu0 %v1875
    %3061 = vmatpush1.bf16.msra.mxu0 %v1874
    %3062 = vmatprep.subr.bf16.mxu0 %v1879
    %3063 = vmatpush1.bf16.msra.mxu0 %v1878
    %3064 = vmatprep.subr.bf16.mxu0 %v1883
    %3065 = vmatpush1.bf16.msra.mxu0 %v1882
    %3066 = vmatprep.subr.bf16.mxu0 %v1887
    %3067 = vmatpush1.bf16.msra.mxu0 %v1886
    %3068 = vmatprep.subr.bf16.mxu0 0
    %3069 = vmatpush1.bf16.msra.mxu0 0
    %3070 = vmatprep.subr.bf16.mxu0 0
    %3071 = vmatpush1.bf16.msra.mxu0 0
    %3072 = vmatprep.subr.bf16.mxu0 0
    %3073 = vmatpush1.bf16.msra.mxu0 0
    %3074 = vmatprep.subr.bf16.mxu0 0
    %3075 = vmatpush1.bf16.msra.mxu0 0
    %3076 = vmatprep.subr.bf16.mxu0 0
    %3077 = vmatpush1.bf16.msra.mxu0 0
    %3078 = vmatprep.subr.bf16.mxu0 0
    %3079 = vmatpush1.bf16.msra.mxu0 0
    %3080 = vmatprep.subr.bf16.mxu0 0
    %3081 = vmatpush1.bf16.msra.mxu0 0
    %3082 = vmatprep.subr.bf16.mxu0 0
    %3083 = vmatpush1.bf16.msra.mxu0 0
    %3084 = vmatprep.mubr.bf16.mxu0 0
    %3085 = vmatmul.mubr.bf16.gmra.mrb[0].mxu0 %v2934
    %v3086 = vpop.f32.mrb[0].mxu0
    %v3087 = vadd.f32 0.0, %v3086
    %v3088 = vpop.f32.mrb[0].mxu0
    %v3089 = vadd.f32 0.0, %v3088
    %v3090 = vpop.f32.mrb[0].mxu0
    %v3091 = vpop.f32.mrb[0].mxu0
    %3092 = vdwg.mxu0
    %3093 = vmatprep.subr.bf16.mxu0 %v2099
    %3094 = vmatpush1.bf16.msra.mxu0 %v2098
    %3095 = vmatprep.subr.bf16.mxu0 %v2103
    %3096 = vmatpush1.bf16.msra.mxu0 %v2102
    %3097 = vmatprep.subr.bf16.mxu0 %v2107
    %3098 = vmatpush1.bf16.msra.mxu0 %v2106
    %3099 = vmatprep.subr.bf16.mxu0 %v2111
    %3100 = vmatpush1.bf16.msra.mxu0 %v2110
    %3101 = vmatprep.subr.bf16.mxu0 %v2115
    %3102 = vmatpush1.bf16.msra.mxu0 %v2114
    %3103 = vmatprep.subr.bf16.mxu0 %v2119
    %3104 = vmatpush1.bf16.msra.mxu0 %v2118
    %3105 = vmatprep.subr.bf16.mxu0 %v2123
    %3106 = vmatpush1.bf16.msra.mxu0 %v2122
    %3107 = vmatprep.subr.bf16.mxu0 %v2127
    %3108 = vmatpush1.bf16.msra.mxu0 %v2126
    %3109 = vmatprep.subr.bf16.mxu0 0
    %3110 = vmatpush1.bf16.msra.mxu0 0
    %3111 = vmatprep.subr.bf16.mxu0 0
    %3112 = vmatpush1.bf16.msra.mxu0 0
    %3113 = vmatprep.subr.bf16.mxu0 0
    %3114 = vmatpush1.bf16.msra.mxu0 0
    %3115 = vmatprep.subr.bf16.mxu0 0
    %3116 = vmatpush1.bf16.msra.mxu0 0
    %3117 = vmatprep.subr.bf16.mxu0 0
    %3118 = vmatpush1.bf16.msra.mxu0 0
    %3119 = vmatprep.subr.bf16.mxu0 0
    %3120 = vmatpush1.bf16.msra.mxu0 0
    %3121 = vmatprep.subr.bf16.mxu0 0
    %3122 = vmatpush1.bf16.msra.mxu0 0
    %3123 = vmatprep.subr.bf16.mxu0 0
    %3124 = vmatpush1.bf16.msra.mxu0 0
    %3125 = vmatprep.mubr.bf16.mxu0 0
    %3126 = vmatmul.mubr.bf16.gmra.mrb[0].mxu0 %v3010
    %v3127 = vpop.f32.mrb[0].mxu0
    %v3128 = vadd.f32 %v3046, %v3127
    %v3129 = vpop.f32.mrb[0].mxu0
    %v3130 = vadd.f32 %v3048, %v3129
    %v3131 = vpop.f32.mrb[0].mxu0
    %v3132 = vpop.f32.mrb[0].mxu0
    %3133 = vdwg.mxu0
    %3134 = vmatprep.subr.bf16.mxu0 %v2101
    %3135 = vmatpush1.bf16.msra.mxu0 %v2100
    %3136 = vmatprep.subr.bf16.mxu0 %v2105
    %3137 = vmatpush1.bf16.msra.mxu0 %v2104
    %3138 = vmatprep.subr.bf16.mxu0 %v2109
    %3139 = vmatpush1.bf16.msra.mxu0 %v2108
    %3140 = vmatprep.subr.bf16.mxu0 %v2113
    %3141 = vmatpush1.bf16.msra.mxu0 %v2112
    %3142 = vmatprep.subr.bf16.mxu0 %v2117
    %3143 = vmatpush1.bf16.msra.mxu0 %v2116
    %3144 = vmatprep.subr.bf16.mxu0 %v2121
    %3145 = vmatpush1.bf16.msra.mxu0 %v2120
    %3146 = vmatprep.subr.bf16.mxu0 %v2125
    %3147 = vmatpush1.bf16.msra.mxu0 %v2124
    %3148 = vmatprep.subr.bf16.mxu0 %v2129
    %3149 = vmatpush1.bf16.msra.mxu0 %v2128
    %3150 = vmatprep.subr.bf16.mxu0 0
    %3151 = vmatpush1.bf16.msra.mxu0 0
    %3152 = vmatprep.subr.bf16.mxu0 0
    %3153 = vmatpush1.bf16.msra.mxu0 0
    %3154 = vmatprep.subr.bf16.mxu0 0
    %3155 = vmatpush1.bf16.msra.mxu0 0
    %3156 = vmatprep.subr.bf16.mxu0 0
    %3157 = vmatpush1.bf16.msra.mxu0 0
    %3158 = vmatprep.subr.bf16.mxu0 0
    %3159 = vmatpush1.bf16.msra.mxu0 0
    %3160 = vmatprep.subr.bf16.mxu0 0
    %3161 = vmatpush1.bf16.msra.mxu0 0
    %3162 = vmatprep.subr.bf16.mxu0 0
    %3163 = vmatpush1.bf16.msra.mxu0 0
    %3164 = vmatprep.subr.bf16.mxu0 0
    %3165 = vmatpush1.bf16.msra.mxu0 0
    %3166 = vmatprep.mubr.bf16.mxu0 0
    %3167 = vmatmul.mubr.bf16.gmra.mrb[0].mxu0 %v3010
    %v3168 = vpop.f32.mrb[0].mxu0
    %v3169 = vadd.f32 %v3087, %v3168
    %v3170 = vpop.f32.mrb[0].mxu0
    %v3171 = vadd.f32 %v3089, %v3170
    %v3172 = vpop.f32.mrb[0].mxu0
    %v3173 = vpop.f32.mrb[0].mxu0
    %3174 = vdwg.mxu0
    %v3175 = vadd.f32 %v3128, %v2248
    %v3176 = vadd.f32 %v3130, %v2252
    %v3177 = vadd.f32 %v3169, %v2256
    %v3178 = vadd.f32 %v3171, %v2260
    %v3179 = vmul.f32 %v3175, %v116
    %v3180 = vmul.f32 %v3176, %v117
    %v3181 = vmul.f32 %v3177, %v118
    %v3182 = vmul.f32 %v3178, %v119
    %v3183 = vxor.u32 %v3179, 2147483648
    %v3184 = vxor.u32 %v3180, 2147483648
    %v3185 = vxor.u32 %v3181, 2147483648
    %v3186 = vxor.u32 %v3182, 2147483648
    %v3187 = vmul.f32 %v3183, 1.442695
    %v3188 = vpow.pop %v3187
    %v3189 = vmul.f32 %v3184, 1.442695
    %v3190 = vpow.pop %v3189
    %v3191 = vmul.f32 %v3185, 1.442695
    %v3192 = vpow.pop %v3191
    %v3193 = vmul.f32 %v3186, 1.442695
    %v3194 = vpow.pop %v3193
    %v3195 = vadd.f32 %v3188, 1.0
    %v3196 = vadd.f32 %v3190, 1.0
    %v3197 = vadd.f32 %v3192, 1.0
    %v3198 = vadd.f32 %v3194, 1.0
    %v3199 = vrcp.pop %v3195
    %v3200 = vmul.f32 1.0, %v3199
    %v3201 = vrcp.pop %v3196
    %v3202 = vmul.f32 1.0, %v3201
    %v3203 = vrcp.pop %v3197
    %v3204 = vmul.f32 1.0, %v3203
    %v3205 = vrcp.pop %v3198
    %v3206 = vmul.f32 1.0, %v3205
    %v3207 = vmul.f32 %v3204, 2.0
    %v3208 = vsub.f32 %v3207, 1.0
    %v3209 = vmul.f32 %v3202, %v2931
    %v3210 = vmul.f32 %v3200, %v3208
    %v3211 = vadd.f32 %v3209, %v3210
    %v3212 = vtanh.pop %v3211
    %v3213 = vmul.f32 %v3206, %v3212
    %v3214 = vpack.c.bf16 %v3213, %v3213
    %3215 = vmatprep.subr.bf16.mxu0 0
    %3216 = vmatpush1.bf16.msra.mxu0 %v2359
    %3217 = vmatprep.subr.bf16.mxu0 0
    %3218 = vmatpush1.bf16.msra.mxu0 %v2360
    %3219 = vmatprep.subr.bf16.mxu0 0
    %3220 = vmatpush1.bf16.msra.mxu0 %v2361
    %3221 = vmatprep.subr.bf16.mxu0 0
    %3222 = vmatpush1.bf16.msra.mxu0 %v2362
    %3223 = vmatprep.subr.bf16.mxu0 0
    %3224 = vmatpush1.bf16.msra.mxu0 %v2363
    %3225 = vmatprep.subr.bf16.mxu0 0
    %3226 = vmatpush1.bf16.msra.mxu0 %v2364
    %3227 = vmatprep.subr.bf16.mxu0 0
    %3228 = vmatpush1.bf16.msra.mxu0 %v2365
    %3229 = vmatprep.subr.bf16.mxu0 0
    %3230 = vmatpush1.bf16.msra.mxu0 %v2366
    %3231 = vmatprep.subr.bf16.mxu0 0
    %3232 = vmatpush1.bf16.msra.mxu0 0
    %3233 = vmatprep.subr.bf16.mxu0 0
    %3234 = vmatpush1.bf16.msra.mxu0 0
    %3235 = vmatprep.subr.bf16.mxu0 0
    %3236 = vmatpush1.bf16.msra.mxu0 0
    %3237 = vmatprep.subr.bf16.mxu0 0
    %3238 = vmatpush1.bf16.msra.mxu0 0
    %3239 = vmatprep.subr.bf16.mxu0 0
    %3240 = vmatpush1.bf16.msra.mxu0 0
    %3241 = vmatprep.subr.bf16.mxu0 0
    %3242 = vmatpush1.bf16.msra.mxu0 0
    %3243 = vmatprep.subr.bf16.mxu0 0
    %3244 = vmatpush1.bf16.msra.mxu0 0
    %3245 = vmatprep.subr.bf16.mxu0 0
    %3246 = vmatpush1.bf16.msra.mxu0 0
    %3247 = vmatprep.mubr.bf16.mxu0 0
    %3248 = vmatmul.mubr.bf16.gmra.mrb[0].mxu0 %v3214
    %v3249 = vpop.f32.mrb[0].mxu0
    %v3250 = vadd.f32 %v2325, %v3249
    %v3251 = vpop.f32.mrb[0].mxu0
    %v3252 = vpop.f32.mrb[0].mxu0
    %v3253 = vpop.f32.mrb[0].mxu0
    %3254 = vdwg.mxu0
    %v3255 = vld [vmem:[%s2 + $0x18] sm:$0xff]
    %v3256 = vadd.f32 %v3250, %v3255
    %3257 = vmax.xlane.f32.xlu0 %v3256
    %v3258 = vpop.xlane.xlu0 %3257
    %vm3259 = vcmp.ge.f32.partialorder %v3256, %v3258
    %v3260 = vsel %vm3259, 1, 0
    %v3261 = vcvt.s32.f32 %v3260
    %v3262 = vsel %vm3259, %v100, 128
    %v3263 = vand.u32 %v3262, 65535
    %v3264 = vshra.s32 %v3262, 16
    %v3265 = vcvt.s32.f32 %v3263
    %v3266 = vcvt.s32.f32 %v3264
    %3267 = vmin.xlane.f32.xlu0 %v3266
    %v3268 = vpop.xlane.xlu0 %3267
    %vm3269 = vcmp.eq.f32.partialorder %v3266, %v3268
    %v3270 = vsel %vm3269, %v3265, inf
    %3271 = vmin.xlane.f32.xlu0 %v3270
    %v3272 = vpop.xlane.xlu0 %3271
    %v3273 = vcvt.f32.s32 %v3272
    %v3274 = vcvt.f32.s32 %v3268
    %v3275 = vshll.u32 %v3274, 16
    %v3276 = vadd.s32 %v3275, %v3273
    %vm3277 = vcmp.eq.s32.totalorder %v100, 3
    %v3278 = vsel %vm3277, 1, 0
    %vm3279 = vcmp.eq.s32.totalorder %v3278, 1
    %v3280 = vsel %vm3279, %v3276, %v3000
    %v3281 = vld [vmem:[%s1 + $0x20] sm:$0xff]
    %v3282 = vld [vmem:[%s0 + $0x20] sm:$0xff]
    %vm3283 = vcmp.gt.f32.partialorder %v3281, 0.5
    %v3284 = vsel %vm3283, 1, 0
    %3285 = vset.pattern.permute.xlu0 0
    %3286 = vperm.xlu0 %3285, %v3284
    %v3287 = vpop.permute.xlu0 %3286
    %vm3288 = vcmp.eq.s32.totalorder %v3287, 1
    %v3289 = vsel %vm3288, %v3261, %v3282
    %v3290 = vpack.c.bf16 %v3289, %v3289
    %3291 = vmatprep.subr.bf16.mxu0 %v1857
    %3292 = vmatpush1.bf16.msra.mxu0 %v1856
    %3293 = vmatprep.subr.bf16.mxu0 %v1861
    %3294 = vmatpush1.bf16.msra.mxu0 %v1860
    %3295 = vmatprep.subr.bf16.mxu0 %v1865
    %3296 = vmatpush1.bf16.msra.mxu0 %v1864
    %3297 = vmatprep.subr.bf16.mxu0 %v1869
    %3298 = vmatpush1.bf16.msra.mxu0 %v1868
    %3299 = vmatprep.subr.bf16.mxu0 %v1873
    %3300 = vmatpush1.bf16.msra.mxu0 %v1872
    %3301 = vmatprep.subr.bf16.mxu0 %v1877
    %3302 = vmatpush1.bf16.msra.mxu0 %v1876
    %3303 = vmatprep.subr.bf16.mxu0 %v1881
    %3304 = vmatpush1.bf16.msra.mxu0 %v1880
    %3305 = vmatprep.subr.bf16.mxu0 %v1885
    %3306 = vmatpush1.bf16.msra.mxu0 %v1884
    %3307 = vmatprep.subr.bf16.mxu0 0
    %3308 = vmatpush1.bf16.msra.mxu0 0
    %3309 = vmatprep.subr.bf16.mxu0 0
    %3310 = vmatpush1.bf16.msra.mxu0 0
    %3311 = vmatprep.subr.bf16.mxu0 0
    %3312 = vmatpush1.bf16.msra.mxu0 0
    %3313 = vmatprep.subr.bf16.mxu0 0
    %3314 = vmatpush1.bf16.msra.mxu0 0
    %3315 = vmatprep.subr.bf16.mxu0 0
    %3316 = vmatpush1.bf16.msra.mxu0 0
    %3317 = vmatprep.subr.bf16.mxu0 0
    %3318 = vmatpush1.bf16.msra.mxu0 0
    %3319 = vmatprep.subr.bf16.mxu0 0
    %3320 = vmatpush1.bf16.msra.mxu0 0
    %3321 = vmatprep.subr.bf16.mxu0 0
    %3322 = vmatpush1.bf16.msra.mxu0 0
    %3323 = vmatprep.mubr.bf16.mxu0 0
    %3324 = vmatmul.mubr.bf16.gmra.mrb[0].mxu0 %v3214
    %v3325 = vpop.f32.mrb[0].mxu0
    %v3326 = vadd.f32 0.0, %v3325
    %v3327 = vpop.f32.mrb[0].mxu0
    %v3328 = vadd.f32 0.0, %v3327
    %v3329 = vpop.f32.mrb[0].mxu0
    %v3330 = vpop.f32.mrb[0].mxu0
    %3331 = vdwg.mxu0
    %3332 = vmatprep.subr.bf16.mxu0 %v1859
    %3333 = vmatpush1.bf16.msra.mxu0 %v1858
    %3334 = vmatprep.subr.bf16.mxu0 %v1863
    %3335 = vmatpush1.bf16.msra.mxu0 %v1862
    %3336 = vmatprep.subr.bf16.mxu0 %v1867
    %3337 = vmatpush1.bf16.msra.mxu0 %v1866
    %3338 = vmatprep.subr.bf16.mxu0 %v1871
    %3339 = vmatpush1.bf16.msra.mxu0 %v1870
    %3340 = vmatprep.subr.bf16.mxu0 %v1875
    %3341 = vmatpush1.bf16.msra.mxu0 %v1874
    %3342 = vmatprep.subr.bf16.mxu0 %v1879
    %3343 = vmatpush1.bf16.msra.mxu0 %v1878
    %3344 = vmatprep.subr.bf16.mxu0 %v1883
    %3345 = vmatpush1.bf16.msra.mxu0 %v1882
    %3346 = vmatprep.subr.bf16.mxu0 %v1887
    %3347 = vmatpush1.bf16.msra.mxu0 %v1886
    %3348 = vmatprep.subr.bf16.mxu0 0
    %3349 = vmatpush1.bf16.msra.mxu0 0
    %3350 = vmatprep.subr.bf16.mxu0 0
    %3351 = vmatpush1.bf16.msra.mxu0 0
    %3352 = vmatprep.subr.bf16.mxu0 0
    %3353 = vmatpush1.bf16.msra.mxu0 0
    %3354 = vmatprep.subr.bf16.mxu0 0
    %3355 = vmatpush1.bf16.msra.mxu0 0
    %3356 = vmatprep.subr.bf16.mxu0 0
    %3357 = vmatpush1.bf16.msra.mxu0 0
    %3358 = vmatprep.subr.bf16.mxu0 0
    %3359 = vmatpush1.bf16.msra.mxu0 0
    %3360 = vmatprep.subr.bf16.mxu0 0
    %3361 = vmatpush1.bf16.msra.mxu0 0
    %3362 = vmatprep.subr.bf16.mxu0 0
    %3363 = vmatpush1.bf16.msra.mxu0 0
    %3364 = vmatprep.mubr.bf16.mxu0 0
    %3365 = vmatmul.mubr.bf16.gmra.mrb[0].mxu0 %v3214
    %v3366 = vpop.f32.mrb[0].mxu0
    %v3367 = vadd.f32 0.0, %v3366
    %v3368 = vpop.f32.mrb[0].mxu0
    %v3369 = vadd.f32 0.0, %v3368
    %v3370 = vpop.f32.mrb[0].mxu0
    %v3371 = vpop.f32.mrb[0].mxu0
    %3372 = vdwg.mxu0
    %3373 = vmatprep.subr.bf16.mxu0 %v2099
    %3374 = vmatpush1.bf16.msra.mxu0 %v2098
    %3375 = vmatprep.subr.bf16.mxu0 %v2103
    %3376 = vmatpush1.bf16.msra.mxu0 %v2102
    %3377 = vmatprep.subr.bf16.mxu0 %v2107
    %3378 = vmatpush1.bf16.msra.mxu0 %v2106
    %3379 = vmatprep.subr.bf16.mxu0 %v2111
    %3380 = vmatpush1.bf16.msra.mxu0 %v2110
    %3381 = vmatprep.subr.bf16.mxu0 %v2115
    %3382 = vmatpush1.bf16.msra.mxu0 %v2114
    %3383 = vmatprep.subr.bf16.mxu0 %v2119
    %3384 = vmatpush1.bf16.msra.mxu0 %v2118
    %3385 = vmatprep.subr.bf16.mxu0 %v2123
    %3386 = vmatpush1.bf16.msra.mxu0 %v2122
    %3387 = vmatprep.subr.bf16.mxu0 %v2127
    %3388 = vmatpush1.bf16.msra.mxu0 %v2126
    %3389 = vmatprep.subr.bf16.mxu0 0
    %3390 = vmatpush1.bf16.msra.mxu0 0
    %3391 = vmatprep.subr.bf16.mxu0 0
    %3392 = vmatpush1.bf16.msra.mxu0 0
    %3393 = vmatprep.subr.bf16.mxu0 0
    %3394 = vmatpush1.bf16.msra.mxu0 0
    %3395 = vmatprep.subr.bf16.mxu0 0
    %3396 = vmatpush1.bf16.msra.mxu0 0
    %3397 = vmatprep.subr.bf16.mxu0 0
    %3398 = vmatpush1.bf16.msra.mxu0 0
    %3399 = vmatprep.subr.bf16.mxu0 0
    %3400 = vmatpush1.bf16.msra.mxu0 0
    %3401 = vmatprep.subr.bf16.mxu0 0
    %3402 = vmatpush1.bf16.msra.mxu0 0
    %3403 = vmatprep.subr.bf16.mxu0 0
    %3404 = vmatpush1.bf16.msra.mxu0 0
    %3405 = vmatprep.mubr.bf16.mxu0 0
    %3406 = vmatmul.mubr.bf16.gmra.mrb[0].mxu0 %v3290
    %v3407 = vpop.f32.mrb[0].mxu0
    %v3408 = vadd.f32 %v3326, %v3407
    %v3409 = vpop.f32.mrb[0].mxu0
    %v3410 = vadd.f32 %v3328, %v3409
    %v3411 = vpop.f32.mrb[0].mxu0
    %v3412 = vpop.f32.mrb[0].mxu0
    %3413 = vdwg.mxu0
    %3414 = vmatprep.subr.bf16.mxu0 %v2101
    %3415 = vmatpush1.bf16.msra.mxu0 %v2100
    %3416 = vmatprep.subr.bf16.mxu0 %v2105
    %3417 = vmatpush1.bf16.msra.mxu0 %v2104
    %3418 = vmatprep.subr.bf16.mxu0 %v2109
    %3419 = vmatpush1.bf16.msra.mxu0 %v2108
    %3420 = vmatprep.subr.bf16.mxu0 %v2113
    %3421 = vmatpush1.bf16.msra.mxu0 %v2112
    %3422 = vmatprep.subr.bf16.mxu0 %v2117
    %3423 = vmatpush1.bf16.msra.mxu0 %v2116
    %3424 = vmatprep.subr.bf16.mxu0 %v2121
    %3425 = vmatpush1.bf16.msra.mxu0 %v2120
    %3426 = vmatprep.subr.bf16.mxu0 %v2125
    %3427 = vmatpush1.bf16.msra.mxu0 %v2124
    %3428 = vmatprep.subr.bf16.mxu0 %v2129
    %3429 = vmatpush1.bf16.msra.mxu0 %v2128
    %3430 = vmatprep.subr.bf16.mxu0 0
    %3431 = vmatpush1.bf16.msra.mxu0 0
    %3432 = vmatprep.subr.bf16.mxu0 0
    %3433 = vmatpush1.bf16.msra.mxu0 0
    %3434 = vmatprep.subr.bf16.mxu0 0
    %3435 = vmatpush1.bf16.msra.mxu0 0
    %3436 = vmatprep.subr.bf16.mxu0 0
    %3437 = vmatpush1.bf16.msra.mxu0 0
    %3438 = vmatprep.subr.bf16.mxu0 0
    %3439 = vmatpush1.bf16.msra.mxu0 0
    %3440 = vmatprep.subr.bf16.mxu0 0
    %3441 = vmatpush1.bf16.msra.mxu0 0
    %3442 = vmatprep.subr.bf16.mxu0 0
    %3443 = vmatpush1.bf16.msra.mxu0 0
    %3444 = vmatprep.subr.bf16.mxu0 0
    %3445 = vmatpush1.bf16.msra.mxu0 0
    %3446 = vmatprep.mubr.bf16.mxu0 0
    %3447 = vmatmul.mubr.bf16.gmra.mrb[0].mxu0 %v3290
    %v3448 = vpop.f32.mrb[0].mxu0
    %v3449 = vadd.f32 %v3367, %v3448
    %v3450 = vpop.f32.mrb[0].mxu0
    %v3451 = vadd.f32 %v3369, %v3450
    %v3452 = vpop.f32.mrb[0].mxu0
    %v3453 = vpop.f32.mrb[0].mxu0
    %3454 = vdwg.mxu0
    %v3455 = vadd.f32 %v3408, %v2248
    %v3456 = vadd.f32 %v3410, %v2252
    %v3457 = vadd.f32 %v3449, %v2256
    %v3458 = vadd.f32 %v3451, %v2260
    %v3459 = vmul.f32 %v3455, %v116
    %v3460 = vmul.f32 %v3456, %v117
    %v3461 = vmul.f32 %v3457, %v118
    %v3462 = vmul.f32 %v3458, %v119
    %v3463 = vxor.u32 %v3459, 2147483648
    %v3464 = vxor.u32 %v3460, 2147483648
    %v3465 = vxor.u32 %v3461, 2147483648
    %v3466 = vxor.u32 %v3462, 2147483648
    %v3467 = vmul.f32 %v3463, 1.442695
    %v3468 = vpow.pop %v3467
    %v3469 = vmul.f32 %v3464, 1.442695
    %v3470 = vpow.pop %v3469
    %v3471 = vmul.f32 %v3465, 1.442695
    %v3472 = vpow.pop %v3471
    %v3473 = vmul.f32 %v3466, 1.442695
    %v3474 = vpow.pop %v3473
    %v3475 = vadd.f32 %v3468, 1.0
    %v3476 = vadd.f32 %v3470, 1.0
    %v3477 = vadd.f32 %v3472, 1.0
    %v3478 = vadd.f32 %v3474, 1.0
    %v3479 = vrcp.pop %v3475
    %v3480 = vmul.f32 1.0, %v3479
    %v3481 = vrcp.pop %v3476
    %v3482 = vmul.f32 1.0, %v3481
    %v3483 = vrcp.pop %v3477
    %v3484 = vmul.f32 1.0, %v3483
    %v3485 = vrcp.pop %v3478
    %v3486 = vmul.f32 1.0, %v3485
    %v3487 = vmul.f32 %v3484, 2.0
    %v3488 = vsub.f32 %v3487, 1.0
    %v3489 = vmul.f32 %v3482, %v3211
    %v3490 = vmul.f32 %v3480, %v3488
    %v3491 = vadd.f32 %v3489, %v3490
    %v3492 = vtanh.pop %v3491
    %v3493 = vmul.f32 %v3486, %v3492
    %v3494 = vpack.c.bf16 %v3493, %v3493
    %3495 = vmatprep.subr.bf16.mxu0 0
    %3496 = vmatpush1.bf16.msra.mxu0 %v2359
    %3497 = vmatprep.subr.bf16.mxu0 0
    %3498 = vmatpush1.bf16.msra.mxu0 %v2360
    %3499 = vmatprep.subr.bf16.mxu0 0
    %3500 = vmatpush1.bf16.msra.mxu0 %v2361
    %3501 = vmatprep.subr.bf16.mxu0 0
    %3502 = vmatpush1.bf16.msra.mxu0 %v2362
    %3503 = vmatprep.subr.bf16.mxu0 0
    %3504 = vmatpush1.bf16.msra.mxu0 %v2363
    %3505 = vmatprep.subr.bf16.mxu0 0
    %3506 = vmatpush1.bf16.msra.mxu0 %v2364
    %3507 = vmatprep.subr.bf16.mxu0 0
    %3508 = vmatpush1.bf16.msra.mxu0 %v2365
    %3509 = vmatprep.subr.bf16.mxu0 0
    %3510 = vmatpush1.bf16.msra.mxu0 %v2366
    %3511 = vmatprep.subr.bf16.mxu0 0
    %3512 = vmatpush1.bf16.msra.mxu0 0
    %3513 = vmatprep.subr.bf16.mxu0 0
    %3514 = vmatpush1.bf16.msra.mxu0 0
    %3515 = vmatprep.subr.bf16.mxu0 0
    %3516 = vmatpush1.bf16.msra.mxu0 0
    %3517 = vmatprep.subr.bf16.mxu0 0
    %3518 = vmatpush1.bf16.msra.mxu0 0
    %3519 = vmatprep.subr.bf16.mxu0 0
    %3520 = vmatpush1.bf16.msra.mxu0 0
    %3521 = vmatprep.subr.bf16.mxu0 0
    %3522 = vmatpush1.bf16.msra.mxu0 0
    %3523 = vmatprep.subr.bf16.mxu0 0
    %3524 = vmatpush1.bf16.msra.mxu0 0
    %3525 = vmatprep.subr.bf16.mxu0 0
    %3526 = vmatpush1.bf16.msra.mxu0 0
    %3527 = vmatprep.mubr.bf16.mxu0 0
    %3528 = vmatmul.mubr.bf16.gmra.mrb[0].mxu0 %v3494
    %v3529 = vpop.f32.mrb[0].mxu0
    %v3530 = vadd.f32 %v2325, %v3529
    %v3531 = vpop.f32.mrb[0].mxu0
    %v3532 = vpop.f32.mrb[0].mxu0
    %v3533 = vpop.f32.mrb[0].mxu0
    %3534 = vdwg.mxu0
    %v3535 = vld [vmem:[%s2 + $0x20] sm:$0xff]
    %v3536 = vadd.f32 %v3530, %v3535
    %3537 = vmax.xlane.f32.xlu0 %v3536
    %v3538 = vpop.xlane.xlu0 %3537
    %vm3539 = vcmp.ge.f32.partialorder %v3536, %v3538
    %v3540 = vsel %vm3539, 1, 0
    %v3541 = vcvt.s32.f32 %v3540
    %v3542 = vsel %vm3539, %v100, 128
    %v3543 = vand.u32 %v3542, 65535
    %v3544 = vshra.s32 %v3542, 16
    %v3545 = vcvt.s32.f32 %v3543
    %v3546 = vcvt.s32.f32 %v3544
    %3547 = vmin.xlane.f32.xlu0 %v3546
    %v3548 = vpop.xlane.xlu0 %3547
    %vm3549 = vcmp.eq.f32.partialorder %v3546, %v3548
    %v3550 = vsel %vm3549, %v3545, inf
    %3551 = vmin.xlane.f32.xlu0 %v3550
    %v3552 = vpop.xlane.xlu0 %3551
    %v3553 = vcvt.f32.s32 %v3552
    %v3554 = vcvt.f32.s32 %v3548
    %v3555 = vshll.u32 %v3554, 16
    %v3556 = vadd.s32 %v3555, %v3553
    %vm3557 = vcmp.eq.s32.totalorder %v100, 4
    %v3558 = vsel %vm3557, 1, 0
    %vm3559 = vcmp.eq.s32.totalorder %v3558, 1
    %v3560 = vsel %vm3559, %v3556, %v3280
    %v3561 = vld [vmem:[%s1 + $0x28] sm:$0xff]
    %v3562 = vld [vmem:[%s0 + $0x28] sm:$0xff]
    %vm3563 = vcmp.gt.f32.partialorder %v3561, 0.5
    %v3564 = vsel %vm3563, 1, 0
    %3565 = vset.pattern.permute.xlu0 0
    %3566 = vperm.xlu0 %3565, %v3564
    %v3567 = vpop.permute.xlu0 %3566
    %vm3568 = vcmp.eq.s32.totalorder %v3567, 1
    %v3569 = vsel %vm3568, %v3541, %v3562
    %v3570 = vpack.c.bf16 %v3569, %v3569
    %3571 = vmatprep.subr.bf16.mxu0 %v1857
    %3572 = vmatpush1.bf16.msra.mxu0 %v1856
    %3573 = vmatprep.subr.bf16.mxu0 %v1861
    %3574 = vmatpush1.bf16.msra.mxu0 %v1860
    %3575 = vmatprep.subr.bf16.mxu0 %v1865
    %3576 = vmatpush1.bf16.msra.mxu0 %v1864
    %3577 = vmatprep.subr.bf16.mxu0 %v1869
    %3578 = vmatpush1.bf16.msra.mxu0 %v1868
    %3579 = vmatprep.subr.bf16.mxu0 %v1873
    %3580 = vmatpush1.bf16.msra.mxu0 %v1872
    %3581 = vmatprep.subr.bf16.mxu0 %v1877
    %3582 = vmatpush1.bf16.msra.mxu0 %v1876
    %3583 = vmatprep.subr.bf16.mxu0 %v1881
    %3584 = vmatpush1.bf16.msra.mxu0 %v1880
    %3585 = vmatprep.subr.bf16.mxu0 %v1885
    %3586 = vmatpush1.bf16.msra.mxu0 %v1884
    %3587 = vmatprep.subr.bf16.mxu0 0
    %3588 = vmatpush1.bf16.msra.mxu0 0
    %3589 = vmatprep.subr.bf16.mxu0 0
    %3590 = vmatpush1.bf16.msra.mxu0 0
    %3591 = vmatprep.subr.bf16.mxu0 0
    %3592 = vmatpush1.bf16.msra.mxu0 0
    %3593 = vmatprep.subr.bf16.mxu0 0
    %3594 = vmatpush1.bf16.msra.mxu0 0
    %3595 = vmatprep.subr.bf16.mxu0 0
    %3596 = vmatpush1.bf16.msra.mxu0 0
    %3597 = vmatprep.subr.bf16.mxu0 0
    %3598 = vmatpush1.bf16.msra.mxu0 0
    %3599 = vmatprep.subr.bf16.mxu0 0
    %3600 = vmatpush1.bf16.msra.mxu0 0
    %3601 = vmatprep.subr.bf16.mxu0 0
    %3602 = vmatpush1.bf16.msra.mxu0 0
    %3603 = vmatprep.mubr.bf16.mxu0 0
    %3604 = vmatmul.mubr.bf16.gmra.mrb[0].mxu0 %v3494
    %v3605 = vpop.f32.mrb[0].mxu0
    %v3606 = vadd.f32 0.0, %v3605
    %v3607 = vpop.f32.mrb[0].mxu0
    %v3608 = vadd.f32 0.0, %v3607
    %v3609 = vpop.f32.mrb[0].mxu0
    %v3610 = vpop.f32.mrb[0].mxu0
    %3611 = vdwg.mxu0
    %3612 = vmatprep.subr.bf16.mxu0 %v1859
    %3613 = vmatpush1.bf16.msra.mxu0 %v1858
    %3614 = vmatprep.subr.bf16.mxu0 %v1863
    %3615 = vmatpush1.bf16.msra.mxu0 %v1862
    %3616 = vmatprep.subr.bf16.mxu0 %v1867
    %3617 = vmatpush1.bf16.msra.mxu0 %v1866
    %3618 = vmatprep.subr.bf16.mxu0 %v1871
    %3619 = vmatpush1.bf16.msra.mxu0 %v1870
    %3620 = vmatprep.subr.bf16.mxu0 %v1875
    %3621 = vmatpush1.bf16.msra.mxu0 %v1874
    %3622 = vmatprep.subr.bf16.mxu0 %v1879
    %3623 = vmatpush1.bf16.msra.mxu0 %v1878
    %3624 = vmatprep.subr.bf16.mxu0 %v1883
    %3625 = vmatpush1.bf16.msra.mxu0 %v1882
    %3626 = vmatprep.subr.bf16.mxu0 %v1887
    %3627 = vmatpush1.bf16.msra.mxu0 %v1886
    %3628 = vmatprep.subr.bf16.mxu0 0
    %3629 = vmatpush1.bf16.msra.mxu0 0
    %3630 = vmatprep.subr.bf16.mxu0 0
    %3631 = vmatpush1.bf16.msra.mxu0 0
    %3632 = vmatprep.subr.bf16.mxu0 0
    %3633 = vmatpush1.bf16.msra.mxu0 0
    %3634 = vmatprep.subr.bf16.mxu0 0
    %3635 = vmatpush1.bf16.msra.mxu0 0
    %3636 = vmatprep.subr.bf16.mxu0 0
    %3637 = vmatpush1.bf16.msra.mxu0 0
    %3638 = vmatprep.subr.bf16.mxu0 0
    %3639 = vmatpush1.bf16.msra.mxu0 0
    %3640 = vmatprep.subr.bf16.mxu0 0
    %3641 = vmatpush1.bf16.msra.mxu0 0
    %3642 = vmatprep.subr.bf16.mxu0 0
    %3643 = vmatpush1.bf16.msra.mxu0 0
    %3644 = vmatprep.mubr.bf16.mxu0 0
    %3645 = vmatmul.mubr.bf16.gmra.mrb[0].mxu0 %v3494
    %v3646 = vpop.f32.mrb[0].mxu0
    %v3647 = vadd.f32 0.0, %v3646
    %v3648 = vpop.f32.mrb[0].mxu0
    %v3649 = vadd.f32 0.0, %v3648
    %v3650 = vpop.f32.mrb[0].mxu0
    %v3651 = vpop.f32.mrb[0].mxu0
    %3652 = vdwg.mxu0
    %3653 = vmatprep.subr.bf16.mxu0 %v2099
    %3654 = vmatpush1.bf16.msra.mxu0 %v2098
    %3655 = vmatprep.subr.bf16.mxu0 %v2103
    %3656 = vmatpush1.bf16.msra.mxu0 %v2102
    %3657 = vmatprep.subr.bf16.mxu0 %v2107
    %3658 = vmatpush1.bf16.msra.mxu0 %v2106
    %3659 = vmatprep.subr.bf16.mxu0 %v2111
    %3660 = vmatpush1.bf16.msra.mxu0 %v2110
    %3661 = vmatprep.subr.bf16.mxu0 %v2115
    %3662 = vmatpush1.bf16.msra.mxu0 %v2114
    %3663 = vmatprep.subr.bf16.mxu0 %v2119
    %3664 = vmatpush1.bf16.msra.mxu0 %v2118
    %3665 = vmatprep.subr.bf16.mxu0 %v2123
    %3666 = vmatpush1.bf16.msra.mxu0 %v2122
    %3667 = vmatprep.subr.bf16.mxu0 %v2127
    %3668 = vmatpush1.bf16.msra.mxu0 %v2126
    %3669 = vmatprep.subr.bf16.mxu0 0
    %3670 = vmatpush1.bf16.msra.mxu0 0
    %3671 = vmatprep.subr.bf16.mxu0 0
    %3672 = vmatpush1.bf16.msra.mxu0 0
    %3673 = vmatprep.subr.bf16.mxu0 0
    %3674 = vmatpush1.bf16.msra.mxu0 0
    %3675 = vmatprep.subr.bf16.mxu0 0
    %3676 = vmatpush1.bf16.msra.mxu0 0
    %3677 = vmatprep.subr.bf16.mxu0 0
    %3678 = vmatpush1.bf16.msra.mxu0 0
    %3679 = vmatprep.subr.bf16.mxu0 0
    %3680 = vmatpush1.bf16.msra.mxu0 0
    %3681 = vmatprep.subr.bf16.mxu0 0
    %3682 = vmatpush1.bf16.msra.mxu0 0
    %3683 = vmatprep.subr.bf16.mxu0 0
    %3684 = vmatpush1.bf16.msra.mxu0 0
    %3685 = vmatprep.mubr.bf16.mxu0 0
    %3686 = vmatmul.mubr.bf16.gmra.mrb[0].mxu0 %v3570
    %v3687 = vpop.f32.mrb[0].mxu0
    %v3688 = vadd.f32 %v3606, %v3687
    %v3689 = vpop.f32.mrb[0].mxu0
    %v3690 = vadd.f32 %v3608, %v3689
    %v3691 = vpop.f32.mrb[0].mxu0
    %v3692 = vpop.f32.mrb[0].mxu0
    %3693 = vdwg.mxu0
    %3694 = vmatprep.subr.bf16.mxu0 %v2101
    %3695 = vmatpush1.bf16.msra.mxu0 %v2100
    %3696 = vmatprep.subr.bf16.mxu0 %v2105
    %3697 = vmatpush1.bf16.msra.mxu0 %v2104
    %3698 = vmatprep.subr.bf16.mxu0 %v2109
    %3699 = vmatpush1.bf16.msra.mxu0 %v2108
    %3700 = vmatprep.subr.bf16.mxu0 %v2113
    %3701 = vmatpush1.bf16.msra.mxu0 %v2112
    %3702 = vmatprep.subr.bf16.mxu0 %v2117
    %3703 = vmatpush1.bf16.msra.mxu0 %v2116
    %3704 = vmatprep.subr.bf16.mxu0 %v2121
    %3705 = vmatpush1.bf16.msra.mxu0 %v2120
    %3706 = vmatprep.subr.bf16.mxu0 %v2125
    %3707 = vmatpush1.bf16.msra.mxu0 %v2124
    %3708 = vmatprep.subr.bf16.mxu0 %v2129
    %3709 = vmatpush1.bf16.msra.mxu0 %v2128
    %3710 = vmatprep.subr.bf16.mxu0 0
    %3711 = vmatpush1.bf16.msra.mxu0 0
    %3712 = vmatprep.subr.bf16.mxu0 0
    %3713 = vmatpush1.bf16.msra.mxu0 0
    %3714 = vmatprep.subr.bf16.mxu0 0
    %3715 = vmatpush1.bf16.msra.mxu0 0
    %3716 = vmatprep.subr.bf16.mxu0 0
    %3717 = vmatpush1.bf16.msra.mxu0 0
    %3718 = vmatprep.subr.bf16.mxu0 0
    %3719 = vmatpush1.bf16.msra.mxu0 0
    %3720 = vmatprep.subr.bf16.mxu0 0
    %3721 = vmatpush1.bf16.msra.mxu0 0
    %3722 = vmatprep.subr.bf16.mxu0 0
    %3723 = vmatpush1.bf16.msra.mxu0 0
    %3724 = vmatprep.subr.bf16.mxu0 0
    %3725 = vmatpush1.bf16.msra.mxu0 0
    %3726 = vmatprep.mubr.bf16.mxu0 0
    %3727 = vmatmul.mubr.bf16.gmra.mrb[0].mxu0 %v3570
    %v3728 = vpop.f32.mrb[0].mxu0
    %v3729 = vadd.f32 %v3647, %v3728
    %v3730 = vpop.f32.mrb[0].mxu0
    %v3731 = vadd.f32 %v3649, %v3730
    %v3732 = vpop.f32.mrb[0].mxu0
    %v3733 = vpop.f32.mrb[0].mxu0
    %3734 = vdwg.mxu0
    %v3735 = vadd.f32 %v3688, %v2248
    %v3736 = vadd.f32 %v3690, %v2252
    %v3737 = vadd.f32 %v3729, %v2256
    %v3738 = vadd.f32 %v3731, %v2260
    %v3739 = vmul.f32 %v3735, %v116
    %v3740 = vmul.f32 %v3736, %v117
    %v3741 = vmul.f32 %v3737, %v118
    %v3742 = vmul.f32 %v3738, %v119
    %v3743 = vxor.u32 %v3739, 2147483648
    %v3744 = vxor.u32 %v3740, 2147483648
    %v3745 = vxor.u32 %v3741, 2147483648
    %v3746 = vxor.u32 %v3742, 2147483648
    %v3747 = vmul.f32 %v3743, 1.442695
    %v3748 = vpow.pop %v3747
    %v3749 = vmul.f32 %v3744, 1.442695
    %v3750 = vpow.pop %v3749
    %v3751 = vmul.f32 %v3745, 1.442695
    %v3752 = vpow.pop %v3751
    %v3753 = vmul.f32 %v3746, 1.442695
    %v3754 = vpow.pop %v3753
    %v3755 = vadd.f32 %v3748, 1.0
    %v3756 = vadd.f32 %v3750, 1.0
    %v3757 = vadd.f32 %v3752, 1.0
    %v3758 = vadd.f32 %v3754, 1.0
    %v3759 = vrcp.pop %v3755
    %v3760 = vmul.f32 1.0, %v3759
    %v3761 = vrcp.pop %v3756
    %v3762 = vmul.f32 1.0, %v3761
    %v3763 = vrcp.pop %v3757
    %v3764 = vmul.f32 1.0, %v3763
    %v3765 = vrcp.pop %v3758
    %v3766 = vmul.f32 1.0, %v3765
    %v3767 = vmul.f32 %v3764, 2.0
    %v3768 = vsub.f32 %v3767, 1.0
    %v3769 = vmul.f32 %v3762, %v3491
    %v3770 = vmul.f32 %v3760, %v3768
    %v3771 = vadd.f32 %v3769, %v3770
    %v3772 = vtanh.pop %v3771
    %v3773 = vmul.f32 %v3766, %v3772
    %v3774 = vpack.c.bf16 %v3773, %v3773
    %3775 = vmatprep.subr.bf16.mxu0 0
    %3776 = vmatpush1.bf16.msra.mxu0 %v2359
    %3777 = vmatprep.subr.bf16.mxu0 0
    %3778 = vmatpush1.bf16.msra.mxu0 %v2360
    %3779 = vmatprep.subr.bf16.mxu0 0
    %3780 = vmatpush1.bf16.msra.mxu0 %v2361
    %3781 = vmatprep.subr.bf16.mxu0 0
    %3782 = vmatpush1.bf16.msra.mxu0 %v2362
    %3783 = vmatprep.subr.bf16.mxu0 0
    %3784 = vmatpush1.bf16.msra.mxu0 %v2363
    %3785 = vmatprep.subr.bf16.mxu0 0
    %3786 = vmatpush1.bf16.msra.mxu0 %v2364
    %3787 = vmatprep.subr.bf16.mxu0 0
    %3788 = vmatpush1.bf16.msra.mxu0 %v2365
    %3789 = vmatprep.subr.bf16.mxu0 0
    %3790 = vmatpush1.bf16.msra.mxu0 %v2366
    %3791 = vmatprep.subr.bf16.mxu0 0
    %3792 = vmatpush1.bf16.msra.mxu0 0
    %3793 = vmatprep.subr.bf16.mxu0 0
    %3794 = vmatpush1.bf16.msra.mxu0 0
    %3795 = vmatprep.subr.bf16.mxu0 0
    %3796 = vmatpush1.bf16.msra.mxu0 0
    %3797 = vmatprep.subr.bf16.mxu0 0
    %3798 = vmatpush1.bf16.msra.mxu0 0
    %3799 = vmatprep.subr.bf16.mxu0 0
    %3800 = vmatpush1.bf16.msra.mxu0 0
    %3801 = vmatprep.subr.bf16.mxu0 0
    %3802 = vmatpush1.bf16.msra.mxu0 0
    %3803 = vmatprep.subr.bf16.mxu0 0
    %3804 = vmatpush1.bf16.msra.mxu0 0
    %3805 = vmatprep.subr.bf16.mxu0 0
    %3806 = vmatpush1.bf16.msra.mxu0 0
    %3807 = vmatprep.mubr.bf16.mxu0 0
    %3808 = vmatmul.mubr.bf16.gmra.mrb[0].mxu0 %v3774
    %v3809 = vpop.f32.mrb[0].mxu0
    %v3810 = vadd.f32 %v2325, %v3809
    %v3811 = vpop.f32.mrb[0].mxu0
    %v3812 = vpop.f32.mrb[0].mxu0
    %v3813 = vpop.f32.mrb[0].mxu0
    %3814 = vdwg.mxu0
    %v3815 = vld [vmem:[%s2 + $0x28] sm:$0xff]
    %v3816 = vadd.f32 %v3810, %v3815
    %3817 = vmax.xlane.f32.xlu0 %v3816
    %v3818 = vpop.xlane.xlu0 %3817
    %vm3819 = vcmp.ge.f32.partialorder %v3816, %v3818
    %v3820 = vsel %vm3819, 1, 0
    %v3821 = vcvt.s32.f32 %v3820
    %v3822 = vsel %vm3819, %v100, 128
    %v3823 = vand.u32 %v3822, 65535
    %v3824 = vshra.s32 %v3822, 16
    %v3825 = vcvt.s32.f32 %v3823
    %v3826 = vcvt.s32.f32 %v3824
    %3827 = vmin.xlane.f32.xlu0 %v3826
    %v3828 = vpop.xlane.xlu0 %3827
    %vm3829 = vcmp.eq.f32.partialorder %v3826, %v3828
    %v3830 = vsel %vm3829, %v3825, inf
    %3831 = vmin.xlane.f32.xlu0 %v3830
    %v3832 = vpop.xlane.xlu0 %3831
    %v3833 = vcvt.f32.s32 %v3832
    %v3834 = vcvt.f32.s32 %v3828
    %v3835 = vshll.u32 %v3834, 16
    %v3836 = vadd.s32 %v3835, %v3833
    %vm3837 = vcmp.eq.s32.totalorder %v100, 5
    %v3838 = vsel %vm3837, 1, 0
    %vm3839 = vcmp.eq.s32.totalorder %v3838, 1
    %v3840 = vsel %vm3839, %v3836, %v3560
    %v3841 = vld [vmem:[%s1 + $0x30] sm:$0xff]
    %v3842 = vld [vmem:[%s0 + $0x30] sm:$0xff]
    %vm3843 = vcmp.gt.f32.partialorder %v3841, 0.5
    %v3844 = vsel %vm3843, 1, 0
    %3845 = vset.pattern.permute.xlu0 0
    %3846 = vperm.xlu0 %3845, %v3844
    %v3847 = vpop.permute.xlu0 %3846
    %vm3848 = vcmp.eq.s32.totalorder %v3847, 1
    %v3849 = vsel %vm3848, %v3821, %v3842
    %v3850 = vpack.c.bf16 %v3849, %v3849
    %3851 = vmatprep.subr.bf16.mxu0 %v1857
    %3852 = vmatpush1.bf16.msra.mxu0 %v1856
    %3853 = vmatprep.subr.bf16.mxu0 %v1861
    %3854 = vmatpush1.bf16.msra.mxu0 %v1860
    %3855 = vmatprep.subr.bf16.mxu0 %v1865
    %3856 = vmatpush1.bf16.msra.mxu0 %v1864
    %3857 = vmatprep.subr.bf16.mxu0 %v1869
    %3858 = vmatpush1.bf16.msra.mxu0 %v1868
    %3859 = vmatprep.subr.bf16.mxu0 %v1873
    %3860 = vmatpush1.bf16.msra.mxu0 %v1872
    %3861 = vmatprep.subr.bf16.mxu0 %v1877
    %3862 = vmatpush1.bf16.msra.mxu0 %v1876
    %3863 = vmatprep.subr.bf16.mxu0 %v1881
    %3864 = vmatpush1.bf16.msra.mxu0 %v1880
    %3865 = vmatprep.subr.bf16.mxu0 %v1885
    %3866 = vmatpush1.bf16.msra.mxu0 %v1884
    %3867 = vmatprep.subr.bf16.mxu0 0
    %3868 = vmatpush1.bf16.msra.mxu0 0
    %3869 = vmatprep.subr.bf16.mxu0 0
    %3870 = vmatpush1.bf16.msra.mxu0 0
    %3871 = vmatprep.subr.bf16.mxu0 0
    %3872 = vmatpush1.bf16.msra.mxu0 0
    %3873 = vmatprep.subr.bf16.mxu0 0
    %3874 = vmatpush1.bf16.msra.mxu0 0
    %3875 = vmatprep.subr.bf16.mxu0 0
    %3876 = vmatpush1.bf16.msra.mxu0 0
    %3877 = vmatprep.subr.bf16.mxu0 0
    %3878 = vmatpush1.bf16.msra.mxu0 0
    %3879 = vmatprep.subr.bf16.mxu0 0
    %3880 = vmatpush1.bf16.msra.mxu0 0
    %3881 = vmatprep.subr.bf16.mxu0 0
    %3882 = vmatpush1.bf16.msra.mxu0 0
    %3883 = vmatprep.mubr.bf16.mxu0 0
    %3884 = vmatmul.mubr.bf16.gmra.mrb[0].mxu0 %v3774
    %v3885 = vpop.f32.mrb[0].mxu0
    %v3886 = vadd.f32 0.0, %v3885
    %v3887 = vpop.f32.mrb[0].mxu0
    %v3888 = vadd.f32 0.0, %v3887
    %v3889 = vpop.f32.mrb[0].mxu0
    %v3890 = vpop.f32.mrb[0].mxu0
    %3891 = vdwg.mxu0
    %3892 = vmatprep.subr.bf16.mxu0 %v1859
    %3893 = vmatpush1.bf16.msra.mxu0 %v1858
    %3894 = vmatprep.subr.bf16.mxu0 %v1863
    %3895 = vmatpush1.bf16.msra.mxu0 %v1862
    %3896 = vmatprep.subr.bf16.mxu0 %v1867
    %3897 = vmatpush1.bf16.msra.mxu0 %v1866
    %3898 = vmatprep.subr.bf16.mxu0 %v1871
    %3899 = vmatpush1.bf16.msra.mxu0 %v1870
    %3900 = vmatprep.subr.bf16.mxu0 %v1875
    %3901 = vmatpush1.bf16.msra.mxu0 %v1874
    %3902 = vmatprep.subr.bf16.mxu0 %v1879
    %3903 = vmatpush1.bf16.msra.mxu0 %v1878
    %3904 = vmatprep.subr.bf16.mxu0 %v1883
    %3905 = vmatpush1.bf16.msra.mxu0 %v1882
    %3906 = vmatprep.subr.bf16.mxu0 %v1887
    %3907 = vmatpush1.bf16.msra.mxu0 %v1886
    %3908 = vmatprep.subr.bf16.mxu0 0
    %3909 = vmatpush1.bf16.msra.mxu0 0
    %3910 = vmatprep.subr.bf16.mxu0 0
    %3911 = vmatpush1.bf16.msra.mxu0 0
    %3912 = vmatprep.subr.bf16.mxu0 0
    %3913 = vmatpush1.bf16.msra.mxu0 0
    %3914 = vmatprep.subr.bf16.mxu0 0
    %3915 = vmatpush1.bf16.msra.mxu0 0
    %3916 = vmatprep.subr.bf16.mxu0 0
    %3917 = vmatpush1.bf16.msra.mxu0 0
    %3918 = vmatprep.subr.bf16.mxu0 0
    %3919 = vmatpush1.bf16.msra.mxu0 0
    %3920 = vmatprep.subr.bf16.mxu0 0
    %3921 = vmatpush1.bf16.msra.mxu0 0
    %3922 = vmatprep.subr.bf16.mxu0 0
    %3923 = vmatpush1.bf16.msra.mxu0 0
    %3924 = vmatprep.mubr.bf16.mxu0 0
    %3925 = vmatmul.mubr.bf16.gmra.mrb[0].mxu0 %v3774
    %v3926 = vpop.f32.mrb[0].mxu0
    %v3927 = vadd.f32 0.0, %v3926
    %v3928 = vpop.f32.mrb[0].mxu0
    %v3929 = vadd.f32 0.0, %v3928
    %v3930 = vpop.f32.mrb[0].mxu0
    %v3931 = vpop.f32.mrb[0].mxu0
    %3932 = vdwg.mxu0
    %3933 = vmatprep.subr.bf16.mxu0 %v2099
    %3934 = vmatpush1.bf16.msra.mxu0 %v2098
    %3935 = vmatprep.subr.bf16.mxu0 %v2103
    %3936 = vmatpush1.bf16.msra.mxu0 %v2102
    %3937 = vmatprep.subr.bf16.mxu0 %v2107
    %3938 = vmatpush1.bf16.msra.mxu0 %v2106
    %3939 = vmatprep.subr.bf16.mxu0 %v2111
    %3940 = vmatpush1.bf16.msra.mxu0 %v2110
    %3941 = vmatprep.subr.bf16.mxu0 %v2115
    %3942 = vmatpush1.bf16.msra.mxu0 %v2114
    %3943 = vmatprep.subr.bf16.mxu0 %v2119
    %3944 = vmatpush1.bf16.msra.mxu0 %v2118
    %3945 = vmatprep.subr.bf16.mxu0 %v2123
    %3946 = vmatpush1.bf16.msra.mxu0 %v2122
    %3947 = vmatprep.subr.bf16.mxu0 %v2127
    %3948 = vmatpush1.bf16.msra.mxu0 %v2126
    %3949 = vmatprep.subr.bf16.mxu0 0
    %3950 = vmatpush1.bf16.msra.mxu0 0
    %3951 = vmatprep.subr.bf16.mxu0 0
    %3952 = vmatpush1.bf16.msra.mxu0 0
    %3953 = vmatprep.subr.bf16.mxu0 0
    %3954 = vmatpush1.bf16.msra.mxu0 0
    %3955 = vmatprep.subr.bf16.mxu0 0
    %3956 = vmatpush1.bf16.msra.mxu0 0
    %3957 = vmatprep.subr.bf16.mxu0 0
    %3958 = vmatpush1.bf16.msra.mxu0 0
    %3959 = vmatprep.subr.bf16.mxu0 0
    %3960 = vmatpush1.bf16.msra.mxu0 0
    %3961 = vmatprep.subr.bf16.mxu0 0
    %3962 = vmatpush1.bf16.msra.mxu0 0
    %3963 = vmatprep.subr.bf16.mxu0 0
    %3964 = vmatpush1.bf16.msra.mxu0 0
    %3965 = vmatprep.mubr.bf16.mxu0 0
    %3966 = vmatmul.mubr.bf16.gmra.mrb[0].mxu0 %v3850
    %v3967 = vpop.f32.mrb[0].mxu0
    %v3968 = vadd.f32 %v3886, %v3967
    %v3969 = vpop.f32.mrb[0].mxu0
    %v3970 = vadd.f32 %v3888, %v3969
    %v3971 = vpop.f32.mrb[0].mxu0
    %v3972 = vpop.f32.mrb[0].mxu0
    %3973 = vdwg.mxu0
    %3974 = vmatprep.subr.bf16.mxu0 %v2101
    %3975 = vmatpush1.bf16.msra.mxu0 %v2100
    %3976 = vmatprep.subr.bf16.mxu0 %v2105
    %3977 = vmatpush1.bf16.msra.mxu0 %v2104
    %3978 = vmatprep.subr.bf16.mxu0 %v2109
    %3979 = vmatpush1.bf16.msra.mxu0 %v2108
    %3980 = vmatprep.subr.bf16.mxu0 %v2113
    %3981 = vmatpush1.bf16.msra.mxu0 %v2112
    %3982 = vmatprep.subr.bf16.mxu0 %v2117
    %3983 = vmatpush1.bf16.msra.mxu0 %v2116
    %3984 = vmatprep.subr.bf16.mxu0 %v2121
    %3985 = vmatpush1.bf16.msra.mxu0 %v2120
    %3986 = vmatprep.subr.bf16.mxu0 %v2125
    %3987 = vmatpush1.bf16.msra.mxu0 %v2124
    %3988 = vmatprep.subr.bf16.mxu0 %v2129
    %3989 = vmatpush1.bf16.msra.mxu0 %v2128
    %3990 = vmatprep.subr.bf16.mxu0 0
    %3991 = vmatpush1.bf16.msra.mxu0 0
    %3992 = vmatprep.subr.bf16.mxu0 0
    %3993 = vmatpush1.bf16.msra.mxu0 0
    %3994 = vmatprep.subr.bf16.mxu0 0
    %3995 = vmatpush1.bf16.msra.mxu0 0
    %3996 = vmatprep.subr.bf16.mxu0 0
    %3997 = vmatpush1.bf16.msra.mxu0 0
    %3998 = vmatprep.subr.bf16.mxu0 0
    %3999 = vmatpush1.bf16.msra.mxu0 0
    %4000 = vmatprep.subr.bf16.mxu0 0
    %4001 = vmatpush1.bf16.msra.mxu0 0
    %4002 = vmatprep.subr.bf16.mxu0 0
    %4003 = vmatpush1.bf16.msra.mxu0 0
    %4004 = vmatprep.subr.bf16.mxu0 0
    %4005 = vmatpush1.bf16.msra.mxu0 0
    %4006 = vmatprep.mubr.bf16.mxu0 0
    %4007 = vmatmul.mubr.bf16.gmra.mrb[0].mxu0 %v3850
    %v4008 = vpop.f32.mrb[0].mxu0
    %v4009 = vadd.f32 %v3927, %v4008
    %v4010 = vpop.f32.mrb[0].mxu0
    %v4011 = vadd.f32 %v3929, %v4010
    %v4012 = vpop.f32.mrb[0].mxu0
    %v4013 = vpop.f32.mrb[0].mxu0
    %4014 = vdwg.mxu0
    %v4015 = vadd.f32 %v3968, %v2248
    %v4016 = vadd.f32 %v3970, %v2252
    %v4017 = vadd.f32 %v4009, %v2256
    %v4018 = vadd.f32 %v4011, %v2260
    %v4019 = vmul.f32 %v4015, %v116
    %v4020 = vmul.f32 %v4016, %v117
    %v4021 = vmul.f32 %v4017, %v118
    %v4022 = vmul.f32 %v4018, %v119
    %v4023 = vxor.u32 %v4019, 2147483648
    %v4024 = vxor.u32 %v4020, 2147483648
    %v4025 = vxor.u32 %v4021, 2147483648
    %v4026 = vxor.u32 %v4022, 2147483648
    %v4027 = vmul.f32 %v4023, 1.442695
    %v4028 = vpow.pop %v4027
    %v4029 = vmul.f32 %v4024, 1.442695
    %v4030 = vpow.pop %v4029
    %v4031 = vmul.f32 %v4025, 1.442695
    %v4032 = vpow.pop %v4031
    %v4033 = vmul.f32 %v4026, 1.442695
    %v4034 = vpow.pop %v4033
    %v4035 = vadd.f32 %v4028, 1.0
    %v4036 = vadd.f32 %v4030, 1.0
    %v4037 = vadd.f32 %v4032, 1.0
    %v4038 = vadd.f32 %v4034, 1.0
    %v4039 = vrcp.pop %v4035
    %v4040 = vmul.f32 1.0, %v4039
    %v4041 = vrcp.pop %v4036
    %v4042 = vmul.f32 1.0, %v4041
    %v4043 = vrcp.pop %v4037
    %v4044 = vmul.f32 1.0, %v4043
    %v4045 = vrcp.pop %v4038
    %v4046 = vmul.f32 1.0, %v4045
    %v4047 = vmul.f32 %v4044, 2.0
    %v4048 = vsub.f32 %v4047, 1.0
    %v4049 = vmul.f32 %v4042, %v3771
    %v4050 = vmul.f32 %v4040, %v4048
    %v4051 = vadd.f32 %v4049, %v4050
    %v4052 = vtanh.pop %v4051
    %v4053 = vmul.f32 %v4046, %v4052
    %v4054 = vpack.c.bf16 %v4053, %v4053
    %4055 = vmatprep.subr.bf16.mxu0 0
    %4056 = vmatpush1.bf16.msra.mxu0 %v2359
    %4057 = vmatprep.subr.bf16.mxu0 0
    %4058 = vmatpush1.bf16.msra.mxu0 %v2360
    %4059 = vmatprep.subr.bf16.mxu0 0
    %4060 = vmatpush1.bf16.msra.mxu0 %v2361
    %4061 = vmatprep.subr.bf16.mxu0 0
    %4062 = vmatpush1.bf16.msra.mxu0 %v2362
    %4063 = vmatprep.subr.bf16.mxu0 0
    %4064 = vmatpush1.bf16.msra.mxu0 %v2363
    %4065 = vmatprep.subr.bf16.mxu0 0
    %4066 = vmatpush1.bf16.msra.mxu0 %v2364
    %4067 = vmatprep.subr.bf16.mxu0 0
    %4068 = vmatpush1.bf16.msra.mxu0 %v2365
    %4069 = vmatprep.subr.bf16.mxu0 0
    %4070 = vmatpush1.bf16.msra.mxu0 %v2366
    %4071 = vmatprep.subr.bf16.mxu0 0
    %4072 = vmatpush1.bf16.msra.mxu0 0
    %4073 = vmatprep.subr.bf16.mxu0 0
    %4074 = vmatpush1.bf16.msra.mxu0 0
    %4075 = vmatprep.subr.bf16.mxu0 0
    %4076 = vmatpush1.bf16.msra.mxu0 0
    %4077 = vmatprep.subr.bf16.mxu0 0
    %4078 = vmatpush1.bf16.msra.mxu0 0
    %4079 = vmatprep.subr.bf16.mxu0 0
    %4080 = vmatpush1.bf16.msra.mxu0 0
    %4081 = vmatprep.subr.bf16.mxu0 0
    %4082 = vmatpush1.bf16.msra.mxu0 0
    %4083 = vmatprep.subr.bf16.mxu0 0
    %4084 = vmatpush1.bf16.msra.mxu0 0
    %4085 = vmatprep.subr.bf16.mxu0 0
    %4086 = vmatpush1.bf16.msra.mxu0 0
    %4087 = vmatprep.mubr.bf16.mxu0 0
    %4088 = vmatmul.mubr.bf16.gmra.mrb[0].mxu0 %v4054
    %v4089 = vpop.f32.mrb[0].mxu0
    %v4090 = vadd.f32 %v2325, %v4089
    %v4091 = vpop.f32.mrb[0].mxu0
    %v4092 = vpop.f32.mrb[0].mxu0
    %v4093 = vpop.f32.mrb[0].mxu0
    %4094 = vdwg.mxu0
    %v4095 = vld [vmem:[%s2 + $0x30] sm:$0xff]
    %v4096 = vadd.f32 %v4090, %v4095
    %4097 = vmax.xlane.f32.xlu0 %v4096
    %v4098 = vpop.xlane.xlu0 %4097
    %vm4099 = vcmp.ge.f32.partialorder %v4096, %v4098
    %v4100 = vsel %vm4099, 1, 0
    %v4101 = vcvt.s32.f32 %v4100
    %v4102 = vsel %vm4099, %v100, 128
    %v4103 = vand.u32 %v4102, 65535
    %v4104 = vshra.s32 %v4102, 16
    %v4105 = vcvt.s32.f32 %v4103
    %v4106 = vcvt.s32.f32 %v4104
    %4107 = vmin.xlane.f32.xlu0 %v4106
    %v4108 = vpop.xlane.xlu0 %4107
    %vm4109 = vcmp.eq.f32.partialorder %v4106, %v4108
    %v4110 = vsel %vm4109, %v4105, inf
    %4111 = vmin.xlane.f32.xlu0 %v4110
    %v4112 = vpop.xlane.xlu0 %4111
    %v4113 = vcvt.f32.s32 %v4112
    %v4114 = vcvt.f32.s32 %v4108
    %v4115 = vshll.u32 %v4114, 16
    %v4116 = vadd.s32 %v4115, %v4113
    %vm4117 = vcmp.eq.s32.totalorder %v100, 6
    %v4118 = vsel %vm4117, 1, 0
    %vm4119 = vcmp.eq.s32.totalorder %v4118, 1
    %v4120 = vsel %vm4119, %v4116, %v3840
    %v4121 = vld [vmem:[%s1 + $0x38] sm:$0xff]
    %vm4122 = vcmp.gt.f32.partialorder %v4121, 0.5
    %v4123 = vsel %vm4122, 1, 0
    %4124 = vset.pattern.permute.xlu0 0
    %4125 = vperm.xlu0 %4124, %v4123
    %v4126 = vpop.permute.xlu0 %4125
    %vm4127 = vcmp.eq.s32.totalorder %v4126, 1
    %v4128 = vsel %vm4127, %v4101, %v130
    %v4129 = vpack.c.bf16 %v4128, %v4128
    %4130 = vmatprep.subr.bf16.mxu0 %v1857
    %4131 = vmatpush1.bf16.msra.mxu0 %v1856
    %4132 = vmatprep.subr.bf16.mxu0 %v1861
    %4133 = vmatpush1.bf16.msra.mxu0 %v1860
    %4134 = vmatprep.subr.bf16.mxu0 %v1865
    %4135 = vmatpush1.bf16.msra.mxu0 %v1864
    %4136 = vmatprep.subr.bf16.mxu0 %v1869
    %4137 = vmatpush1.bf16.msra.mxu0 %v1868
    %4138 = vmatprep.subr.bf16.mxu0 %v1873
    %4139 = vmatpush1.bf16.msra.mxu0 %v1872
    %4140 = vmatprep.subr.bf16.mxu0 %v1877
    %4141 = vmatpush1.bf16.msra.mxu0 %v1876
    %4142 = vmatprep.subr.bf16.mxu0 %v1881
    %4143 = vmatpush1.bf16.msra.mxu0 %v1880
    %4144 = vmatprep.subr.bf16.mxu0 %v1885
    %4145 = vmatpush1.bf16.msra.mxu0 %v1884
    %4146 = vmatprep.subr.bf16.mxu0 0
    %4147 = vmatpush1.bf16.msra.mxu0 0
    %4148 = vmatprep.subr.bf16.mxu0 0
    %4149 = vmatpush1.bf16.msra.mxu0 0
    %4150 = vmatprep.subr.bf16.mxu0 0
    %4151 = vmatpush1.bf16.msra.mxu0 0
    %4152 = vmatprep.subr.bf16.mxu0 0
    %4153 = vmatpush1.bf16.msra.mxu0 0
    %4154 = vmatprep.subr.bf16.mxu0 0
    %4155 = vmatpush1.bf16.msra.mxu0 0
    %4156 = vmatprep.subr.bf16.mxu0 0
    %4157 = vmatpush1.bf16.msra.mxu0 0
    %4158 = vmatprep.subr.bf16.mxu0 0
    %4159 = vmatpush1.bf16.msra.mxu0 0
    %4160 = vmatprep.subr.bf16.mxu0 0
    %4161 = vmatpush1.bf16.msra.mxu0 0
    %4162 = vmatprep.mubr.bf16.mxu0 0
    %4163 = vmatmul.mubr.bf16.gmra.mrb[0].mxu0 %v4054
    %v4164 = vpop.f32.mrb[0].mxu0
    %v4165 = vadd.f32 0.0, %v4164
    %v4166 = vpop.f32.mrb[0].mxu0
    %v4167 = vadd.f32 0.0, %v4166
    %v4168 = vpop.f32.mrb[0].mxu0
    %v4169 = vpop.f32.mrb[0].mxu0
    %4170 = vdwg.mxu0
    %4171 = vmatprep.subr.bf16.mxu0 %v1859
    %4172 = vmatpush1.bf16.msra.mxu0 %v1858
    %4173 = vmatprep.subr.bf16.mxu0 %v1863
    %4174 = vmatpush1.bf16.msra.mxu0 %v1862
    %4175 = vmatprep.subr.bf16.mxu0 %v1867
    %4176 = vmatpush1.bf16.msra.mxu0 %v1866
    %4177 = vmatprep.subr.bf16.mxu0 %v1871
    %4178 = vmatpush1.bf16.msra.mxu0 %v1870
    %4179 = vmatprep.subr.bf16.mxu0 %v1875
    %4180 = vmatpush1.bf16.msra.mxu0 %v1874
    %4181 = vmatprep.subr.bf16.mxu0 %v1879
    %4182 = vmatpush1.bf16.msra.mxu0 %v1878
    %4183 = vmatprep.subr.bf16.mxu0 %v1883
    %4184 = vmatpush1.bf16.msra.mxu0 %v1882
    %4185 = vmatprep.subr.bf16.mxu0 %v1887
    %4186 = vmatpush1.bf16.msra.mxu0 %v1886
    %4187 = vmatprep.subr.bf16.mxu0 0
    %4188 = vmatpush1.bf16.msra.mxu0 0
    %4189 = vmatprep.subr.bf16.mxu0 0
    %4190 = vmatpush1.bf16.msra.mxu0 0
    %4191 = vmatprep.subr.bf16.mxu0 0
    %4192 = vmatpush1.bf16.msra.mxu0 0
    %4193 = vmatprep.subr.bf16.mxu0 0
    %4194 = vmatpush1.bf16.msra.mxu0 0
    %4195 = vmatprep.subr.bf16.mxu0 0
    %4196 = vmatpush1.bf16.msra.mxu0 0
    %4197 = vmatprep.subr.bf16.mxu0 0
    %4198 = vmatpush1.bf16.msra.mxu0 0
    %4199 = vmatprep.subr.bf16.mxu0 0
    %4200 = vmatpush1.bf16.msra.mxu0 0
    %4201 = vmatprep.subr.bf16.mxu0 0
    %4202 = vmatpush1.bf16.msra.mxu0 0
    %4203 = vmatprep.mubr.bf16.mxu0 0
    %4204 = vmatmul.mubr.bf16.gmra.mrb[0].mxu0 %v4054
    %v4205 = vpop.f32.mrb[0].mxu0
    %v4206 = vadd.f32 0.0, %v4205
    %v4207 = vpop.f32.mrb[0].mxu0
    %v4208 = vadd.f32 0.0, %v4207
    %v4209 = vpop.f32.mrb[0].mxu0
    %v4210 = vpop.f32.mrb[0].mxu0
    %4211 = vdwg.mxu0
    %4212 = vmatprep.subr.bf16.mxu0 %v2099
    %4213 = vmatpush1.bf16.msra.mxu0 %v2098
    %4214 = vmatprep.subr.bf16.mxu0 %v2103
    %4215 = vmatpush1.bf16.msra.mxu0 %v2102
    %4216 = vmatprep.subr.bf16.mxu0 %v2107
    %4217 = vmatpush1.bf16.msra.mxu0 %v2106
    %4218 = vmatprep.subr.bf16.mxu0 %v2111
    %4219 = vmatpush1.bf16.msra.mxu0 %v2110
    %4220 = vmatprep.subr.bf16.mxu0 %v2115
    %4221 = vmatpush1.bf16.msra.mxu0 %v2114
    %4222 = vmatprep.subr.bf16.mxu0 %v2119
    %4223 = vmatpush1.bf16.msra.mxu0 %v2118
    %4224 = vmatprep.subr.bf16.mxu0 %v2123
    %4225 = vmatpush1.bf16.msra.mxu0 %v2122
    %4226 = vmatprep.subr.bf16.mxu0 %v2127
    %4227 = vmatpush1.bf16.msra.mxu0 %v2126
    %4228 = vmatprep.subr.bf16.mxu0 0
    %4229 = vmatpush1.bf16.msra.mxu0 0
    %4230 = vmatprep.subr.bf16.mxu0 0
    %4231 = vmatpush1.bf16.msra.mxu0 0
    %4232 = vmatprep.subr.bf16.mxu0 0
    %4233 = vmatpush1.bf16.msra.mxu0 0
    %4234 = vmatprep.subr.bf16.mxu0 0
    %4235 = vmatpush1.bf16.msra.mxu0 0
    %4236 = vmatprep.subr.bf16.mxu0 0
    %4237 = vmatpush1.bf16.msra.mxu0 0
    %4238 = vmatprep.subr.bf16.mxu0 0
    %4239 = vmatpush1.bf16.msra.mxu0 0
    %4240 = vmatprep.subr.bf16.mxu0 0
    %4241 = vmatpush1.bf16.msra.mxu0 0
    %4242 = vmatprep.subr.bf16.mxu0 0
    %4243 = vmatpush1.bf16.msra.mxu0 0
    %4244 = vmatprep.mubr.bf16.mxu0 0
    %4245 = vmatmul.mubr.bf16.gmra.mrb[0].mxu0 %v4129
    %v4246 = vpop.f32.mrb[0].mxu0
    %v4247 = vadd.f32 %v4165, %v4246
    %v4248 = vpop.f32.mrb[0].mxu0
    %v4249 = vadd.f32 %v4167, %v4248
    %v4250 = vpop.f32.mrb[0].mxu0
    %v4251 = vpop.f32.mrb[0].mxu0
    %4252 = vdwg.mxu0
    %4253 = vmatprep.subr.bf16.mxu0 %v2101
    %4254 = vmatpush1.bf16.msra.mxu0 %v2100
    %4255 = vmatprep.subr.bf16.mxu0 %v2105
    %4256 = vmatpush1.bf16.msra.mxu0 %v2104
    %4257 = vmatprep.subr.bf16.mxu0 %v2109
    %4258 = vmatpush1.bf16.msra.mxu0 %v2108
    %4259 = vmatprep.subr.bf16.mxu0 %v2113
    %4260 = vmatpush1.bf16.msra.mxu0 %v2112
    %4261 = vmatprep.subr.bf16.mxu0 %v2117
    %4262 = vmatpush1.bf16.msra.mxu0 %v2116
    %4263 = vmatprep.subr.bf16.mxu0 %v2121
    %4264 = vmatpush1.bf16.msra.mxu0 %v2120
    %4265 = vmatprep.subr.bf16.mxu0 %v2125
    %4266 = vmatpush1.bf16.msra.mxu0 %v2124
    %4267 = vmatprep.subr.bf16.mxu0 %v2129
    %4268 = vmatpush1.bf16.msra.mxu0 %v2128
    %4269 = vmatprep.subr.bf16.mxu0 0
    %4270 = vmatpush1.bf16.msra.mxu0 0
    %4271 = vmatprep.subr.bf16.mxu0 0
    %4272 = vmatpush1.bf16.msra.mxu0 0
    %4273 = vmatprep.subr.bf16.mxu0 0
    %4274 = vmatpush1.bf16.msra.mxu0 0
    %4275 = vmatprep.subr.bf16.mxu0 0
    %4276 = vmatpush1.bf16.msra.mxu0 0
    %4277 = vmatprep.subr.bf16.mxu0 0
    %4278 = vmatpush1.bf16.msra.mxu0 0
    %4279 = vmatprep.subr.bf16.mxu0 0
    %4280 = vmatpush1.bf16.msra.mxu0 0
    %4281 = vmatprep.subr.bf16.mxu0 0
    %4282 = vmatpush1.bf16.msra.mxu0 0
    %4283 = vmatprep.subr.bf16.mxu0 0
    %4284 = vmatpush1.bf16.msra.mxu0 0
    %4285 = vmatprep.mubr.bf16.mxu0 0
    %4286 = vmatmul.mubr.bf16.gmra.mrb[0].mxu0 %v4129
    %v4287 = vpop.f32.mrb[0].mxu0
    %v4288 = vadd.f32 %v4206, %v4287
    %v4289 = vpop.f32.mrb[0].mxu0
    %v4290 = vadd.f32 %v4208, %v4289
    %v4291 = vpop.f32.mrb[0].mxu0
    %v4292 = vpop.f32.mrb[0].mxu0
    %4293 = vdwg.mxu0
    %v4294 = vadd.f32 %v4247, %v2248
    %v4295 = vadd.f32 %v4249, %v2252
    %v4296 = vadd.f32 %v4288, %v2256
    %v4297 = vadd.f32 %v4290, %v2260
    %v4298 = vmul.f32 %v4294, %v116
    %v4299 = vmul.f32 %v4295, %v117
    %v4300 = vmul.f32 %v4296, %v118
    %v4301 = vmul.f32 %v4297, %v119
    %v4302 = vxor.u32 %v4298, 2147483648
    %v4303 = vxor.u32 %v4299, 2147483648
    %v4304 = vxor.u32 %v4300, 2147483648
    %v4305 = vxor.u32 %v4301, 2147483648
    %v4306 = vmul.f32 %v4302, 1.442695
    %v4307 = vpow.pop %v4306
    %v4308 = vmul.f32 %v4303, 1.442695
    %v4309 = vpow.pop %v4308
    %v4310 = vmul.f32 %v4304, 1.442695
    %v4311 = vpow.pop %v4310
    %v4312 = vmul.f32 %v4305, 1.442695
    %v4313 = vpow.pop %v4312
    %v4314 = vadd.f32 %v4307, 1.0
    %v4315 = vadd.f32 %v4309, 1.0
    %v4316 = vadd.f32 %v4311, 1.0
    %v4317 = vadd.f32 %v4313, 1.0
    %v4318 = vrcp.pop %v4314
    %v4319 = vmul.f32 1.0, %v4318
    %v4320 = vrcp.pop %v4315
    %v4321 = vmul.f32 1.0, %v4320
    %v4322 = vrcp.pop %v4316
    %v4323 = vmul.f32 1.0, %v4322
    %v4324 = vrcp.pop %v4317
    %v4325 = vmul.f32 1.0, %v4324
    %v4326 = vmul.f32 %v4323, 2.0
    %v4327 = vsub.f32 %v4326, 1.0
    %v4328 = vmul.f32 %v4321, %v4051
    %v4329 = vmul.f32 %v4319, %v4327
    %v4330 = vadd.f32 %v4328, %v4329
    %v4331 = vtanh.pop %v4330
    %v4332 = vmul.f32 %v4325, %v4331
    %v4333 = vpack.c.bf16 %v4332, %v4332
    %4334 = vmatprep.subr.bf16.mxu0 0
    %4335 = vmatpush1.bf16.msra.mxu0 %v2359
    %4336 = vmatprep.subr.bf16.mxu0 0
    %4337 = vmatpush1.bf16.msra.mxu0 %v2360
    %4338 = vmatprep.subr.bf16.mxu0 0
    %4339 = vmatpush1.bf16.msra.mxu0 %v2361
    %4340 = vmatprep.subr.bf16.mxu0 0
    %4341 = vmatpush1.bf16.msra.mxu0 %v2362
    %4342 = vmatprep.subr.bf16.mxu0 0
    %4343 = vmatpush1.bf16.msra.mxu0 %v2363
    %4344 = vmatprep.subr.bf16.mxu0 0
    %4345 = vmatpush1.bf16.msra.mxu0 %v2364
    %4346 = vmatprep.subr.bf16.mxu0 0
    %4347 = vmatpush1.bf16.msra.mxu0 %v2365
    %4348 = vmatprep.subr.bf16.mxu0 0
    %4349 = vmatpush1.bf16.msra.mxu0 %v2366
    %4350 = vmatprep.subr.bf16.mxu0 0
    %4351 = vmatpush1.bf16.msra.mxu0 0
    %4352 = vmatprep.subr.bf16.mxu0 0
    %4353 = vmatpush1.bf16.msra.mxu0 0
    %4354 = vmatprep.subr.bf16.mxu0 0
    %4355 = vmatpush1.bf16.msra.mxu0 0
    %4356 = vmatprep.subr.bf16.mxu0 0
    %4357 = vmatpush1.bf16.msra.mxu0 0
    %4358 = vmatprep.subr.bf16.mxu0 0
    %4359 = vmatpush1.bf16.msra.mxu0 0
    %4360 = vmatprep.subr.bf16.mxu0 0
    %4361 = vmatpush1.bf16.msra.mxu0 0
    %4362 = vmatprep.subr.bf16.mxu0 0
    %4363 = vmatpush1.bf16.msra.mxu0 0
    %4364 = vmatprep.subr.bf16.mxu0 0
    %4365 = vmatpush1.bf16.msra.mxu0 0
    %4366 = vmatprep.mubr.bf16.mxu0 0
    %4367 = vmatmul.mubr.bf16.gmra.mrb[0].mxu0 %v4333
    %v4368 = vpop.f32.mrb[0].mxu0
    %v4369 = vadd.f32 %v2325, %v4368
    %v4370 = vpop.f32.mrb[0].mxu0
    %v4371 = vpop.f32.mrb[0].mxu0
    %v4372 = vpop.f32.mrb[0].mxu0
    %4373 = vdwg.mxu0
    %v4374 = vld [vmem:[%s2 + $0x38] sm:$0xff]
    %v4375 = vadd.f32 %v4369, %v4374
    %4376 = vmax.xlane.f32.xlu0 %v4375
    %v4377 = vpop.xlane.xlu0 %4376
    %vm4378 = vcmp.ge.f32.partialorder %v4375, %v4377
    %v4379 = vsel %vm4378, %v100, 128
    %v4380 = vand.u32 %v4379, 65535
    %v4381 = vshra.s32 %v4379, 16
    %v4382 = vcvt.s32.f32 %v4380
    %v4383 = vcvt.s32.f32 %v4381
    %4384 = vmin.xlane.f32.xlu0 %v4383
    %v4385 = vpop.xlane.xlu0 %4384
    %vm4386 = vcmp.eq.f32.partialorder %v4383, %v4385
    %v4387 = vsel %vm4386, %v4382, inf
    %4388 = vmin.xlane.f32.xlu0 %v4387
    %v4389 = vpop.xlane.xlu0 %4388
    %v4390 = vcvt.f32.s32 %v4389
    %v4391 = vcvt.f32.s32 %v4385
    %v4392 = vshll.u32 %v4391, 16
    %v4393 = vadd.s32 %v4392, %v4390
    %vm4394 = vcmp.eq.s32.totalorder %v100, 7
    %v4395 = vsel %vm4394, 1, 0
    %vm4396 = vcmp.eq.s32.totalorder %v4395, 1
    %v4397 = vsel %vm4396, %v4393, %v4120
    %4398 = vst [vmem:[#allocation10] sm:$0xff] %v4397
    %4399 = vst [vmem:[#allocation11] sm:$0xff] %v4332
    %4400 = vst [vmem:[#allocation13] sm:$0xff] %v4330
    // Predicated region
    $region62: #{generator_device.1} parent=1 // pred_check
      _
    $region63: #{generator_device.1} parent=1 // pred_check_branch
      %4402 = sbr.rel (0) target = $region65
    $region64: #{generator_device.1} parent=1 // pred_region
      %s4404 = ssub.s32 128, 128
      %4405 = vsyncadd [#allocation4], %s4404
      %s4407 = sshll.u32 [#allocation10], 4
      %s4408 = int_to_ptr.vmem [resolvable:$true] %s4407
      %4410 = dma.vmem_to_hbm [thread:$0]  %s4408, 128, %s11, [#allocation4]
    $region65: #{generator_device.1} parent=1 // pred_fallthru
      _
    // Predicated region
    $region66: #{generator_device.1} parent=1 // pred_check
      _
    $region67: #{generator_device.1} parent=1 // pred_check_branch
      %4412 = sbr.rel (0) target = $region69
    $region68: #{generator_device.1} parent=1 // pred_region
      %s4414 = ssub.s32 128, 128
      %4415 = vsyncadd [#allocation12], %s4414
      %s4417 = sshll.u32 [#allocation11], 4
      %s4418 = int_to_ptr.vmem [resolvable:$true] %s4417
      %4420 = dma.vmem_to_hbm [thread:$0]  %s4418, 128, %s12, [#allocation12]
    $region69: #{generator_device.1} parent=1 // pred_fallthru
      _
    // Predicated region
    $region70: #{generator_device.1} parent=1 // pred_check
      _
    $region71: #{generator_device.1} parent=1 // pred_check_branch
      %4422 = sbr.rel (0) target = $region73
    $region72: #{generator_device.1} parent=1 // pred_region
      %s4424 = ssub.s32 128, 128
      %4425 = vsyncadd [#allocation12], %s4424
      %s4427 = sshll.u32 [#allocation13], 4
      %s4428 = int_to_ptr.vmem [resolvable:$true] %s4427
      %4430 = dma.vmem_to_hbm [thread:$0]  %s4428, 128, %s13, [#allocation12]
    $region73: #{generator_device.1} parent=1 // pred_fallthru
      _
    // Predicated region
    $region74: #{generator_device.1} parent=1 // pred_check
      _
    $region75: #{generator_device.1} parent=1 // pred_check_branch
      %4432 = sbr.rel (0) target = $region77
    $region76: #{generator_device.1} parent=1 // pred_region
      %4433 = dma.done [#allocation4], 128
    $region77: #{generator_device.1} parent=1 // pred_fallthru
      _
    // Predicated region
    $region78: #{generator_device.1} parent=1 // pred_check
      _
    $region79: #{generator_device.1} parent=1 // pred_check_branch
      %4435 = sbr.rel (0) target = $region81
    $region80: #{generator_device.1} parent=1 // pred_region
      %4436 = dma.done [#allocation12], 128
    $region81: #{generator_device.1} parent=1 // pred_fallthru
      _
    // Predicated region
    $region82: #{generator_device.1} parent=1 // pred_check
      _
    $region83: #{generator_device.1} parent=1 // pred_check_branch
      %4438 = sbr.rel (0) target = $region85
    $region84: #{generator_device.1} parent=1 // pred_region
      %4439 = dma.done [#allocation12], 128
    $region85: #{generator_device.1} parent=1 // pred_fallthru
      _
    %4440 = vsyncpa [#allocation3], 1
    %4441 = vsyncpa [#allocation6], 1
    %4442 = vsyncpa [#allocation9], 1
    %4443 = vsyncpa [#allocation4], 1
    %4444 = vsyncpa [#allocation12], 1

</llo_original>
